<compile_context>
chip_gen: v7x
topology: tpu7x:2x2x1
jax: 0.10.0
libtpu: 0.0.40
codegen_flags: <defaults>
</compile_context>

<pallas_src>
import functools

import jax
import jax.numpy as jnp
from jax.experimental import pallas as pl
from jax.experimental.pallas import tpu as pltpu


def colornn_kernel(x_ref, w1_ref, b1_ref, w2_ref, b2_ref, w3_ref, b3_ref, o_ref):
    # Feature-major tile: batch lives on the lane axis.
    x = x_ref[...]                                   # (2, TB)   compute dtype
    w1 = w1_ref[...]                                 # (128, 2)  compute dtype

    # fc1 + ReLU on the VPU (K=2 would waste an entire MXU pass).
    h1 = w1[:, 0:1] * x[0:1, :] + w1[:, 1:2] * x[1:2, :] + b1_ref[...]   # (128, TB)
    h1 = jnp.maximum(h1, 0)

    # fc2 on the MXU: (64,128) @ (128,TB), bf16 inputs, f32 accumulation.
    # (astype is a no-op when the compute dtype is already bf16 on v6e/v7x.)
    acc = jnp.dot(w2_ref[...], h1.astype(jnp.bfloat16),
                  preferred_element_type=jnp.float32)                    # (64, TB) f32
    h2 = jnp.maximum(acc.astype(x.dtype) + b2_ref[...], 0)               # (64, TB)

    # fc3 on the (mostly idle) MXU: (2,64) @ (64,TB), f32 accumulation.
    y = jnp.dot(w3_ref[...], h2.astype(jnp.bfloat16),
                preferred_element_type=jnp.float32)                      # (2, TB) f32
    o_ref[...] = y + b3_ref[...]


def _vpu_compute_dtype():
    """bf16 VPU math on chips with bf16-native VALUs (v6e/v7x); f32 otherwise (v5e)."""
    try:
        kind = jax.devices()[0].device_kind.lower()
    except Exception:
        return jnp.float32
    if ("v6" in kind) or ("v7" in kind) or ("7x" in kind):
        return jnp.bfloat16
    return jnp.float32


def _pick_tile(batch, tb_max):
    tb_max = max(128, (tb_max // 128) * 128)      # lane-dense tiles only
    rows = pl.cdiv(batch, 128) * 128              # padded batch
    tile = min(tb_max, rows)
    # Keep >= 2 blocks when there is enough work so v7x's two TensorCores both
    # get a share of the "parallel" batch axis.
    if tile == rows and rows >= 2048:
        tile = pl.cdiv(rows // 2, 128) * 128
    return tile


@functools.partial(jax.jit, static_argnames=("tb",))
def colornn_forward(x, params, *, tb=2048):
    """x: (B, 2) float32 -> (B, 2) float32.  Params in torch layout (see init_params)."""
    w1, b1, w2, b2, w3, b3 = params
    B = x.shape[0]
    cdt = _vpu_compute_dtype()

    tile = _pick_tile(B, tb)
    n_blocks = pl.cdiv(B, tile)
    Bp = n_blocks * tile

    # Lane-dense, feature-major input; zero-pad the ragged last tile.
    # (cast + transpose + pad fuse into one XLA op.)
    # TODO(synk): in a surrounding model, keep activations feature-major (2, B)
    # end-to-end so neither this transpose nor the final .T touches HBM.
    x_t = jnp.pad(x.astype(cdt).T, ((0, 0), (0, Bp - B)))

    # Kernel-layout / kernel-dtype parameters (cast once per call; a few KB).
    w1k = w1.astype(cdt)                          # (128, 2)
    b1k = b1.reshape(-1, 1).astype(cdt)           # (128, 1)
    w2k = w2.astype(jnp.bfloat16)                 # (64, 128) MXU lhs, pre-cast
    b2k = b2.reshape(-1, 1).astype(cdt)           # (64, 1)
    w3k = w3.astype(jnp.bfloat16)                 # (2, 64)   MXU lhs, pre-cast
    b3k = b3.reshape(-1, 1).astype(jnp.float32)   # (2, 1)

    const = lambda a: pl.BlockSpec(a.shape, lambda i: (0, 0))

    flops = 2 * Bp * (2 * 128 + 128 * 64 + 64 * 2)
    param_bytes = sum(int(p.size) * p.dtype.itemsize
                      for p in (w1k, b1k, w2k, b2k, w3k, b3k))
    bytes_accessed = int(x_t.size) * x_t.dtype.itemsize + 2 * Bp * 4 + param_bytes

    out_t = pl.pallas_call(
        colornn_kernel,
        out_shape=jax.ShapeDtypeStruct((2, Bp), jnp.float32),
        grid_spec=pltpu.PrefetchScalarGridSpec(
            num_scalar_prefetch=0,
            grid=(n_blocks,),
            in_specs=[
                pl.BlockSpec((2, tile), lambda i: (0, i)),   # x tile (batch on lanes)
                const(w1k), const(b1k),                      # weights stay VMEM-resident
                const(w2k), const(b2k),
                const(w3k), const(b3k),
            ],
            out_specs=pl.BlockSpec((2, tile), lambda i: (0, i)),
        ),
        compiler_params=pltpu.CompilerParams(
            dimension_semantics=("parallel",),   # v7x: split the batch over both TCs
            vmem_limit_bytes=32 * 1024 * 1024,   # safe common denominator (v5e/v6e/v7x)
        ),
        cost_estimate=pl.CostEstimate(
            flops=flops, transcendentals=0, bytes_accessed=bytes_accessed),
    )(x_t, w1k, b1k, w2k, b2k, w3k, b3k)

    return out_t[:, :B].T


def init_params(key):
    """Deterministic init matching the torch module's parameter shapes (torch layout).

        fc1.weight (128, 2)   fc1.bias (128,)
        fc2.weight (64, 128)  fc2.bias (64,)
        fc3.weight (2, 64)    fc3.bias (2,)
    """
    ks = jax.random.split(key, 6)

    def lin(kw, kb, fan_in, fan_out):
        bound = 1.0 / jnp.sqrt(jnp.float32(fan_in))
        w = jax.random.uniform(kw, (fan_out, fan_in), jnp.float32, -bound, bound)
        b = jax.random.uniform(kb, (fan_out,), jnp.float32, -bound, bound)
        return w, b

    w1, b1 = lin(ks[0], ks[1], 2, 128)
    w2, b2 = lin(ks[2], ks[3], 128, 64)
    w3, b3 = lin(ks[4], ks[5], 64, 2)
    return (w1, b1, w2, b2, w3, b3)


def colornn_reference(x, params):
    """Pure-JAX f32 reference of the original torch forward."""
    w1, b1, w2, b2, w3, b3 = params
    h1 = jnp.maximum(x @ w1.T + b1, 0.0)
    h2 = jnp.maximum(h1 @ w2.T + b2, 0.0)
    return h2 @ w3.T + b3


if __name__ == "__main__":
    key = jax.random.PRNGKey(0)
    kx, kp = jax.random.split(key)

    # Tiny data overall, but large enough to exercise a multi-block grid
    # (3 blocks at tb=2048) plus the ragged, zero-padded last tile.
    B = 4609
    x = jax.random.normal(kx, (B, 2), dtype=jnp.float32)
    params = init_params(kp)

    out = jax.block_until_ready(colornn_forward(x, params))
    ref = colornn_reference(x, params)

    assert out.shape == (B, 2)
    # fc2/fc3 use bf16 MXU inputs (f32 accumulation) and, on v6e/v7x, bf16 VPU
    # math for fc1/the epilogue -> compare to the f32 reference at bf16-level
    # tolerance.
    err = float(jnp.max(jnp.abs(out - ref)))
    assert jnp.allclose(out, ref, atol=5e-2, rtol=5e-2), err

    print("KERNEL_OK")
</pallas_src>

<mosaic_0001>
module attributes {stable_mosaic.version = 11 : i64} {
  func.func @colornn_kernel(%arg0: i32, %arg1: memref<2x2048xf32, #tpu.memory_space<vmem>>, %arg2: memref<128x2xf32, #tpu.memory_space<vmem>>, %arg3: memref<128x1xf32, #tpu.memory_space<vmem>>, %arg4: memref<64x128xbf16, #tpu.memory_space<vmem>>, %arg5: memref<64x1xf32, #tpu.memory_space<vmem>>, %arg6: memref<2x64xbf16, #tpu.memory_space<vmem>>, %arg7: memref<2x1xf32, #tpu.memory_space<vmem>>, %arg8: memref<2x2048xf32, #tpu.memory_space<vmem>>) attributes {dimension_semantics = [#tpu.dimension_semantics<parallel>], iteration_bounds = array<i64: 3>, scalar_prefetch = 0 : i64, scratch_operands = 0 : i64, tpu.core_type = #tpu.core_type<tc>, window_params = [{transform_indices = @transform_0, window_bounds = array<i64: 2, 2048>}, {pipeline_mode = #tpu.pipeline_mode<synchronous>, transform_indices = @transform_1, window_bounds = array<i64: 128, 2>}, {pipeline_mode = #tpu.pipeline_mode<synchronous>, transform_indices = @transform_2, window_bounds = array<i64: 128, 1>}, {pipeline_mode = #tpu.pipeline_mode<synchronous>, transform_indices = @transform_3, window_bounds = array<i64: 64, 128>}, {pipeline_mode = #tpu.pipeline_mode<synchronous>, transform_indices = @transform_4, window_bounds = array<i64: 64, 1>}, {pipeline_mode = #tpu.pipeline_mode<synchronous>, transform_indices = @transform_5, window_bounds = array<i64: 2, 64>}, {pipeline_mode = #tpu.pipeline_mode<synchronous>, transform_indices = @transform_6, window_bounds = array<i64: 2, 1>}, {transform_indices = @transform_7, window_bounds = array<i64: 2, 2048>}]} {
    %c0 = arith.constant 0 : index
    %c0_0 = arith.constant 0 : index
    %0 = vector.load %arg1[%c0, %c0_0] : memref<2x2048xf32, #tpu.memory_space<vmem>>, vector<2x2048xf32>
    %c0_1 = arith.constant 0 : index
    %c0_2 = arith.constant 0 : index
    %1 = vector.load %arg2[%c0_1, %c0_2] : memref<128x2xf32, #tpu.memory_space<vmem>>, vector<128x2xf32>
    %2 = vector.extract_strided_slice %1 {offsets = [0, 0], sizes = [128, 1], strides = [1, 1]} : vector<128x2xf32> to vector<128x1xf32>
    %3 = vector.extract_strided_slice %0 {offsets = [0, 0], sizes = [1, 2048], strides = [1, 1]} : vector<2x2048xf32> to vector<1x2048xf32>
    %4 = vector.broadcast %2 : vector<128x1xf32> to vector<128x2048xf32>
    %5 = vector.broadcast %3 : vector<1x2048xf32> to vector<128x2048xf32>
    %6 = arith.mulf %4, %5 : vector<128x2048xf32>
    %7 = vector.extract_strided_slice %1 {offsets = [0, 1], sizes = [128, 1], strides = [1, 1]} : vector<128x2xf32> to vector<128x1xf32>
    %8 = vector.extract_strided_slice %0 {offsets = [1, 0], sizes = [1, 2048], strides = [1, 1]} : vector<2x2048xf32> to vector<1x2048xf32>
    %9 = vector.broadcast %7 : vector<128x1xf32> to vector<128x2048xf32>
    %10 = vector.broadcast %8 : vector<1x2048xf32> to vector<128x2048xf32>
    %11 = arith.mulf %9, %10 : vector<128x2048xf32>
    %12 = arith.addf %6, %11 : vector<128x2048xf32>
    %c0_3 = arith.constant 0 : index
    %c0_4 = arith.constant 0 : index
    %13 = vector.load %arg3[%c0_3, %c0_4] : memref<128x1xf32, #tpu.memory_space<vmem>>, vector<128x1xf32>
    %14 = vector.broadcast %13 : vector<128x1xf32> to vector<128x2048xf32>
    %15 = arith.addf %12, %14 : vector<128x2048xf32>
    %cst = arith.constant 0.000000e+00 : f32
    %16 = vector.broadcast %cst : f32 to vector<128x2048xf32>
    %17 = arith.maximumf %15, %16 : vector<128x2048xf32>
    %c0_5 = arith.constant 0 : index
    %c0_6 = arith.constant 0 : index
    %18 = vector.load %arg4[%c0_5, %c0_6] : memref<64x128xbf16, #tpu.memory_space<vmem>>, vector<64x128xbf16>
    %19 = arith.truncf %17 : vector<128x2048xf32> to vector<128x2048xbf16>
    %cst_7 = arith.constant dense<0.000000e+00> : vector<64x2048xf32>
    %20 = tpu.matmul %18, %19, %cst_7 {dimension_numbers = #tpu.dot_dimension_numbers<[1], [0], [0], [1], [0, 0, 1, 1], [], []>} : vector<64x128xbf16>, vector<128x2048xbf16>, vector<64x2048xf32> -> vector<64x2048xf32>
    %c0_8 = arith.constant 0 : index
    %c0_9 = arith.constant 0 : index
    %21 = vector.load %arg5[%c0_8, %c0_9] : memref<64x1xf32, #tpu.memory_space<vmem>>, vector<64x1xf32>
    %22 = vector.broadcast %21 : vector<64x1xf32> to vector<64x2048xf32>
    %23 = arith.addf %20, %22 : vector<64x2048xf32>
    %cst_10 = arith.constant 0.000000e+00 : f32
    %24 = vector.broadcast %cst_10 : f32 to vector<64x2048xf32>
    %25 = arith.maximumf %23, %24 : vector<64x2048xf32>
    %c0_11 = arith.constant 0 : index
    %c0_12 = arith.constant 0 : index
    %26 = vector.load %arg6[%c0_11, %c0_12] : memref<2x64xbf16, #tpu.memory_space<vmem>>, vector<2x64xbf16>
    %27 = arith.truncf %25 : vector<64x2048xf32> to vector<64x2048xbf16>
    %cst_13 = arith.constant dense<0.000000e+00> : vector<2x2048xf32>
    %28 = tpu.matmul %26, %27, %cst_13 {dimension_numbers = #tpu.dot_dimension_numbers<[1], [0], [0], [1], [0, 0, 1, 1], [], []>} : vector<2x64xbf16>, vector<64x2048xbf16>, vector<2x2048xf32> -> vector<2x2048xf32>
    %c0_14 = arith.constant 0 : index
    %c0_15 = arith.constant 0 : index
    %29 = vector.load %arg7[%c0_14, %c0_15] : memref<2x1xf32, #tpu.memory_space<vmem>>, vector<2x1xf32>
    %30 = vector.broadcast %29 : vector<2x1xf32> to vector<2x2048xf32>
    %31 = arith.addf %28, %30 : vector<2x2048xf32>
    %c0_16 = arith.constant 0 : index
    %c0_17 = arith.constant 0 : index
    %32 = vector.load %arg8[%c0_16, %c0_17] : memref<2x2048xf32, #tpu.memory_space<vmem>>, vector<2x2048xf32>
    tpu.vector_store %arg8[%c0_16, %c0_17], %31 {strides = array<i32>} : memref<2x2048xf32, #tpu.memory_space<vmem>>, vector<2x2048xf32>,
    return
  }
  func.func @transform_0(%arg0: i32) -> (i32, i32) {
    %c0_i32 = arith.constant 0 : i32
    %c0_i32_0 = arith.constant 0 : i32
    return %c0_i32, %arg0 : i32, i32
  }
  func.func @transform_1(%arg0: i32) -> (i32, i32) {
    %c0_i32 = arith.constant 0 : i32
    %c0_i32_0 = arith.constant 0 : i32
    %c0_i32_1 = arith.constant 0 : i32
    return %c0_i32, %c0_i32_0 : i32, i32
  }
  func.func @transform_2(%arg0: i32) -> (i32, i32) {
    %c0_i32 = arith.constant 0 : i32
    %c0_i32_0 = arith.constant 0 : i32
    %c0_i32_1 = arith.constant 0 : i32
    return %c0_i32, %c0_i32_0 : i32, i32
  }
  func.func @transform_3(%arg0: i32) -> (i32, i32) {
    %c0_i32 = arith.constant 0 : i32
    %c0_i32_0 = arith.constant 0 : i32
    %c0_i32_1 = arith.constant 0 : i32
    return %c0_i32, %c0_i32_0 : i32, i32
  }
  func.func @transform_4(%arg0: i32) -> (i32, i32) {
    %c0_i32 = arith.constant 0 : i32
    %c0_i32_0 = arith.constant 0 : i32
    %c0_i32_1 = arith.constant 0 : i32
    return %c0_i32, %c0_i32_0 : i32, i32
  }
  func.func @transform_5(%arg0: i32) -> (i32, i32) {
    %c0_i32 = arith.constant 0 : i32
    %c0_i32_0 = arith.constant 0 : i32
    %c0_i32_1 = arith.constant 0 : i32
    return %c0_i32, %c0_i32_0 : i32, i32
  }
  func.func @transform_6(%arg0: i32) -> (i32, i32) {
    %c0_i32 = arith.constant 0 : i32
    %c0_i32_0 = arith.constant 0 : i32
    %c0_i32_1 = arith.constant 0 : i32
    return %c0_i32, %c0_i32_0 : i32, i32
  }
  func.func @transform_7(%arg0: i32) -> (i32, i32) {
    %c0_i32 = arith.constant 0 : i32
    %c0_i32_0 = arith.constant 0 : i32
    return %c0_i32, %arg0 : i32, i32
  }
}

</mosaic_0001>

<llo_original>
// kernel: colornn_forward.1
$region0: #{colornn_forward.1}
  #allocation0 [shape = 'u32[]', space=smem, size = 0x4, offset = 0x4, fixed_abs, tag = 'smem constant byte address 0x4 - core index']
  #allocation1 [shape = 'u32[144,128]{1,0:T(1,128)}', space=vmem, size = 0x12000, scoped, tag = 'internal scratch']
  %s0 = inlined_call_operand.vmem [shape: f32[2,6144], index: 0, kind: input, shape index: {}]
  %s1 = inlined_call_operand.vmem [shape: f32[128,2], index: 1, kind: input, shape index: {}]
  %s2 = inlined_call_operand.vmem [shape: f32[128,1], index: 2, kind: input, shape index: {}]
  %s3 = inlined_call_operand.vmem [shape: bf16[64,128], index: 3, kind: input, shape index: {}]
  %s4 = inlined_call_operand.vmem [shape: f32[64,1], index: 4, kind: input, shape index: {}]
  %s5 = inlined_call_operand.vmem [shape: bf16[2,64], index: 5, kind: input, shape index: {}]
  %s6 = inlined_call_operand.vmem [shape: f32[2,1], index: 6, kind: input, shape index: {}]
  %s7 = inlined_call_operand.vmem [shape: f32[2,6144], index: 7, kind: output, shape index: {}]
  %s8 = sld [smem:[#allocation0]]
  $region61: #{colornn_forward.1} parent=0
    _
  %s10 = ssub.s32 1, %s8
  %s11 = scalar_select 0, %s10, %s8
  loop: start=0, step=1, limit=5
  $region2: #{colornn_forward.1} parent=0 // loop_pre_header
    _
  $region3: #{colornn_forward.1} parent=0 // loop_header
    %s13 = sphi 0, %s17
    %p14 = scmp.ge.s32.totalorder %s13, 5
    %s23 = sphi 0, %s25
    %s26 = sphi 0, %s23
    %s27 = sphi 0, %s26
    %s43 = sphi 0, %s27
    %s47 = sphi 0, %s47
    %s49 = sphi 0, %s47
    %s50 = sphi 0, %s49
    %s64 = sphi 0, %s50
    %s68 = sphi 0, %s68
    %s70 = sphi 0, %s68
    %s71 = sphi 0, %s70
    %s85 = sphi 0, %s71
    %s89 = sphi 0, %s89
    %s91 = sphi 0, %s89
    %s92 = sphi 0, %s91
    %s106 = sphi 0, %s92
    %s110 = sphi 0, %s110
    %s112 = sphi 0, %s110
    %s113 = sphi 0, %s112
    %s127 = sphi 0, %s113
    %s131 = sphi 0, %s131
    %s133 = sphi 0, %s131
    %s134 = sphi 0, %s133
    %s148 = sphi 0, %s134
    %s152 = sphi 0, %s152
    %s154 = sphi 0, %s152
    %s155 = sphi 0, %s154
    %s169 = sphi 0, %s155
    %s175 = sphi 0, %s177
    %s178 = sphi 0, %s175
    %s179 = sphi 0, %s178
    %s195 = sphi 0, %s179
  $region4: #{colornn_forward.1} parent=0 // loop_header_branch
    %16 = sbr.rel (%p14) target = $region8
  $region5: #{colornn_forward.1} parent=0 // loop_body
    %s18 = ssub.s32 %s13, 1
    %s19 = ssub.s32 %s13, 2
    %s20 = sadd.s32 %s13, 1
    %s21 = ssub.s32 %s13, %s20
    %p22 = scmp.eq.s32.totalorder %s21, 0
    %s24 = sadd.s32 %s23, 1
    %s25 = scalar_select %p22, %s23, %s24
    %p28 = pneg %p22
    %p29 = scmp.eq.s32.totalorder %s13, 2
    %p30 = por %p28, %p29
    %p31 = scmp.ne.s32.totalorder %s23, %s26
    %p32 = scmp.eq.s32.totalorder %s13, 0
    %p33 = por %p31, %p32
    %p34 = scmp.ne.s32.totalorder %s23, %s26
    %p35 = scmp.eq.s32.totalorder %s18, 2
    %p36 = por %p34, %p35
    %p37 = scmp.ne.s32.totalorder %s26, %s27
    %p38 = scmp.eq.s32.totalorder %s18, 0
    %p39 = por %p37, %p38
    %p40 = scmp.ne.s32.totalorder %s26, %s27
    %p41 = scmp.eq.s32.totalorder %s19, 2
    %p42 = por %p40, %p41
    %p44 = scmp.ne.s32.totalorder %s27, %s43
    %p45 = scmp.eq.s32.totalorder %s19, 0
    %p46 = por %p44, %p45
    %s48 = sadd.s32 %s47, 1
    %p51 = scmp.eq.s32.totalorder %s13, 2
    %p52 = scmp.ne.s32.totalorder %s47, %s49
    %p53 = scmp.eq.s32.totalorder %s13, 0
    %p54 = por %p52, %p53
    %p55 = scmp.ne.s32.totalorder %s47, %s49
    %p56 = scmp.eq.s32.totalorder %s18, 2
    %p57 = por %p55, %p56
    %p58 = scmp.ne.s32.totalorder %s49, %s50
    %p59 = scmp.eq.s32.totalorder %s18, 0
    %p60 = por %p58, %p59
    %p61 = scmp.ne.s32.totalorder %s49, %s50
    %p62 = scmp.eq.s32.totalorder %s19, 2
    %p63 = por %p61, %p62
    %p65 = scmp.ne.s32.totalorder %s50, %s64
    %p66 = scmp.eq.s32.totalorder %s19, 0
    %p67 = por %p65, %p66
    %s69 = sadd.s32 %s68, 1
    %p72 = scmp.eq.s32.totalorder %s13, 2
    %p73 = scmp.ne.s32.totalorder %s68, %s70
    %p74 = scmp.eq.s32.totalorder %s13, 0
    %p75 = por %p73, %p74
    %p76 = scmp.ne.s32.totalorder %s68, %s70
    %p77 = scmp.eq.s32.totalorder %s18, 2
    %p78 = por %p76, %p77
    %p79 = scmp.ne.s32.totalorder %s70, %s71
    %p80 = scmp.eq.s32.totalorder %s18, 0
    %p81 = por %p79, %p80
    %p82 = scmp.ne.s32.totalorder %s70, %s71
    %p83 = scmp.eq.s32.totalorder %s19, 2
    %p84 = por %p82, %p83
    %p86 = scmp.ne.s32.totalorder %s71, %s85
    %p87 = scmp.eq.s32.totalorder %s19, 0
    %p88 = por %p86, %p87
    %s90 = sadd.s32 %s89, 1
    %p93 = scmp.eq.s32.totalorder %s13, 2
    %p94 = scmp.ne.s32.totalorder %s89, %s91
    %p95 = scmp.eq.s32.totalorder %s13, 0
    %p96 = por %p94, %p95
    %p97 = scmp.ne.s32.totalorder %s89, %s91
    %p98 = scmp.eq.s32.totalorder %s18, 2
    %p99 = por %p97, %p98
    %p100 = scmp.ne.s32.totalorder %s91, %s92
    %p101 = scmp.eq.s32.totalorder %s18, 0
    %p102 = por %p100, %p101
    %p103 = scmp.ne.s32.totalorder %s91, %s92
    %p104 = scmp.eq.s32.totalorder %s19, 2
    %p105 = por %p103, %p104
    %p107 = scmp.ne.s32.totalorder %s92, %s106
    %p108 = scmp.eq.s32.totalorder %s19, 0
    %p109 = por %p107, %p108
    %s111 = sadd.s32 %s110, 1
    %p114 = scmp.eq.s32.totalorder %s13, 2
    %p115 = scmp.ne.s32.totalorder %s110, %s112
    %p116 = scmp.eq.s32.totalorder %s13, 0
    %p117 = por %p115, %p116
    %p118 = scmp.ne.s32.totalorder %s110, %s112
    %p119 = scmp.eq.s32.totalorder %s18, 2
    %p120 = por %p118, %p119
    %p121 = scmp.ne.s32.totalorder %s112, %s113
    %p122 = scmp.eq.s32.totalorder %s18, 0
    %p123 = por %p121, %p122
    %p124 = scmp.ne.s32.totalorder %s112, %s113
    %p125 = scmp.eq.s32.totalorder %s19, 2
    %p126 = por %p124, %p125
    %p128 = scmp.ne.s32.totalorder %s113, %s127
    %p129 = scmp.eq.s32.totalorder %s19, 0
    %p130 = por %p128, %p129
    %s132 = sadd.s32 %s131, 1
    %p135 = scmp.eq.s32.totalorder %s13, 2
    %p136 = scmp.ne.s32.totalorder %s131, %s133
    %p137 = scmp.eq.s32.totalorder %s13, 0
    %p138 = por %p136, %p137
    %p139 = scmp.ne.s32.totalorder %s131, %s133
    %p140 = scmp.eq.s32.totalorder %s18, 2
    %p141 = por %p139, %p140
    %p142 = scmp.ne.s32.totalorder %s133, %s134
    %p143 = scmp.eq.s32.totalorder %s18, 0
    %p144 = por %p142, %p143
    %p145 = scmp.ne.s32.totalorder %s133, %s134
    %p146 = scmp.eq.s32.totalorder %s19, 2
    %p147 = por %p145, %p146
    %p149 = scmp.ne.s32.totalorder %s134, %s148
    %p150 = scmp.eq.s32.totalorder %s19, 0
    %p151 = por %p149, %p150
    %s153 = sadd.s32 %s152, 1
    %p156 = scmp.eq.s32.totalorder %s13, 2
    %p157 = scmp.ne.s32.totalorder %s152, %s154
    %p158 = scmp.eq.s32.totalorder %s13, 0
    %p159 = por %p157, %p158
    %p160 = scmp.ne.s32.totalorder %s152, %s154
    %p161 = scmp.eq.s32.totalorder %s18, 2
    %p162 = por %p160, %p161
    %p163 = scmp.ne.s32.totalorder %s154, %s155
    %p164 = scmp.eq.s32.totalorder %s18, 0
    %p165 = por %p163, %p164
    %p166 = scmp.ne.s32.totalorder %s154, %s155
    %p167 = scmp.eq.s32.totalorder %s19, 2
    %p168 = por %p166, %p167
    %p170 = scmp.ne.s32.totalorder %s155, %s169
    %p171 = scmp.eq.s32.totalorder %s19, 0
    %p172 = por %p170, %p171
    %s173 = ssub.s32 %s13, %s20
    %p174 = scmp.eq.s32.totalorder %s173, 0
    %s176 = sadd.s32 %s175, 1
    %s177 = scalar_select %p174, %s175, %s176
    %p180 = pneg %p174
    %p181 = scmp.eq.s32.totalorder %s13, 2
    %p182 = por %p180, %p181
    %p183 = scmp.ne.s32.totalorder %s175, %s178
    %p184 = scmp.eq.s32.totalorder %s13, 0
    %p185 = por %p183, %p184
    %p186 = scmp.ne.s32.totalorder %s175, %s178
    %p187 = scmp.eq.s32.totalorder %s18, 2
    %p188 = por %p186, %p187
    %p189 = scmp.ne.s32.totalorder %s178, %s179
    %p190 = scmp.eq.s32.totalorder %s18, 0
    %p191 = por %p189, %p190
    %p192 = scmp.ne.s32.totalorder %s178, %s179
    %p193 = scmp.eq.s32.totalorder %s19, 2
    %p194 = por %p192, %p193
    %p196 = scmp.ne.s32.totalorder %s179, %s195
    %p197 = scmp.eq.s32.totalorder %s19, 0
    %p198 = por %p196, %p197
    %p199 = scmp.le.s32.totalorder 1, %s13
    %p200 = scmp.lt.s32.totalorder %s13, 4
    %p201 = pnand %p199, %p200
    %p202 = pneg %p201
    // Predicated region
    $region9: #{colornn_forward.1} parent=5 // pred_check
      _
    $region10: #{colornn_forward.1} parent=5 // pred_check_branch
      %204 = sbr.rel (%p201) target = $region12
    $region11: #{colornn_forward.1} parent=5 // pred_region
      %s205 = ssub.s32 %s13, 1
      // Predicated region
      $region13: #{colornn_forward.1} parent=11 // pred_check
        %p206 = pneg %p60
      $region14: #{colornn_forward.1} parent=11 // pred_check_branch
        %208 = sbr.rel (%p206) target = $region16
      $region15: #{colornn_forward.1} parent=11 // pred_region
        _
      $region16: #{colornn_forward.1} parent=11 // pred_fallthru
        _
      // Predicated region
      $region17: #{colornn_forward.1} parent=11 // pred_check
        %p209 = pneg %p81
      $region18: #{colornn_forward.1} parent=11 // pred_check_branch
        %211 = sbr.rel (%p209) target = $region20
      $region19: #{colornn_forward.1} parent=11 // pred_region
        _
      $region20: #{colornn_forward.1} parent=11 // pred_fallthru
        _
      // Predicated region
      $region21: #{colornn_forward.1} parent=11 // pred_check
        %p212 = pneg %p102
      $region22: #{colornn_forward.1} parent=11 // pred_check_branch
        %214 = sbr.rel (%p212) target = $region24
      $region23: #{colornn_forward.1} parent=11 // pred_region
        _
      $region24: #{colornn_forward.1} parent=11 // pred_fallthru
        _
      // Predicated region
      $region25: #{colornn_forward.1} parent=11 // pred_check
        %p215 = pneg %p123
      $region26: #{colornn_forward.1} parent=11 // pred_check_branch
        %217 = sbr.rel (%p215) target = $region28
      $region27: #{colornn_forward.1} parent=11 // pred_region
        _
      $region28: #{colornn_forward.1} parent=11 // pred_fallthru
        _
      // Predicated region
      $region29: #{colornn_forward.1} parent=11 // pred_check
        %p218 = pneg %p144
      $region30: #{colornn_forward.1} parent=11 // pred_check_branch
        %220 = sbr.rel (%p218) target = $region32
      $region31: #{colornn_forward.1} parent=11 // pred_region
        _
      $region32: #{colornn_forward.1} parent=11 // pred_fallthru
        _
      // Predicated region
      $region33: #{colornn_forward.1} parent=11 // pred_check
        %p221 = pneg %p165
      $region34: #{colornn_forward.1} parent=11 // pred_check_branch
        %223 = sbr.rel (%p221) target = $region36
      $region35: #{colornn_forward.1} parent=11 // pred_region
        _
      $region36: #{colornn_forward.1} parent=11 // pred_fallthru
        _
    $region12: #{colornn_forward.1} parent=5 // pred_fallthru
      _
    %p224 = scmp.lt.s32.totalorder %s13, 3
    // Predicated region
    $region37: #{colornn_forward.1} parent=5 // pred_check
      %p225 = pneg %p224
    $region38: #{colornn_forward.1} parent=5 // pred_check_branch
      %227 = sbr.rel (%p225) target = $region40
    $region39: #{colornn_forward.1} parent=5 // pred_region
      // Predicated region
      $region41: #{colornn_forward.1} parent=39 // pred_check
        %p228 = pneg %p33
      $region42: #{colornn_forward.1} parent=39 // pred_check_branch
        %230 = sbr.rel (%p228) target = $region44
      $region43: #{colornn_forward.1} parent=39 // pred_region
        %s231 = smul.u32 16, %s13
        %p232 = scmp.lt.s32.totalorder %s231, 47
        %s233 = scalar_select %p232, %s231, 47
        %s234 = smul.addr %s233, 2
        %s235 = scalar_lea.vmem %s0, %s234
        %s236 = smul.u32 16, %s13
      $region44: #{colornn_forward.1} parent=39 // pred_fallthru
        _
    $region40: #{colornn_forward.1} parent=5 // pred_fallthru
      _
    %p237 = scmp.le.s32.totalorder 1, %s13
    %p238 = scmp.lt.s32.totalorder %s13, 4
    %p239 = pnand %p237, %p238
    %p240 = pneg %p239
    // Predicated region
    $region45: #{colornn_forward.1} parent=5 // pred_check
      _
    $region46: #{colornn_forward.1} parent=5 // pred_check_branch
      %242 = sbr.rel (%p239) target = $region48
    $region47: #{colornn_forward.1} parent=5 // pred_region
      %s243 = ssub.s32 %s13, 1
      %s244 = smul.u32 16, %s18
      %p245 = scmp.lt.s32.totalorder %s244, 47
      %s246 = scalar_select %p245, %s244, 47
      %s247 = smul.addr %s246, 2
      %s248 = scalar_lea.vmem %s0, %s247
      %p249 = pneg %p39
      %p250 = pneg %p36
      %p251 = pneg %p60
      %p252 = pneg %p57
      %p253 = pneg %p81
      %p254 = pneg %p78
      %p255 = pneg %p102
      %p256 = pneg %p99
      %p257 = pneg %p123
      %p258 = pneg %p120
      %p259 = pneg %p144
      %p260 = pneg %p141
      %p261 = pneg %p165
      %p262 = pneg %p162
      %p263 = pneg %p191
      %p264 = pneg %p188
      %s265 = smul.u32 16, %s18
      %p266 = scmp.lt.s32.totalorder %s265, 47
      %s267 = scalar_select %p266, %s265, 47
      %s268 = smul.addr %s267, 2
      %s269 = scalar_lea.vmem %s7, %s268
      %s270 = smul.u32 16, %s18
      %p271 = scmp.lt.s32.totalorder %s270, 47
      %s272 = scalar_select %p271, %s270, 47
      %s273 = smul.addr %s272, 2
      %s274 = scalar_lea.vmem %s0, %s273
      %s275 = smul.u32 16, %s18
      %s276 = smul.u32 16, %s18
      %p277 = scmp.lt.s32.totalorder %s276, 47
      %s278 = scalar_select %p277, %s276, 47
      %s279 = smul.addr %s278, 2
      %s280 = scalar_lea.vmem %s7, %s279
      %s281 = smul.u32 16, %s18
      %v283 = vld [vmem:[%s274] sm:$0xff]
      %v284 = vld [vmem:[%s274 + $0x8] sm:$0xff]
      %v285 = vld [vmem:[%s274 + $0x10] sm:$0xff]
      %v286 = vld [vmem:[%s274 + $0x18] sm:$0xff]
      %v287 = vld [vmem:[%s1] sm:$0xff]
      %v288 = vld [vmem:[%s1 + $0x8] sm:$0xff]
      %v289 = vld [vmem:[%s1 + $0x10] sm:$0xff]
      %v290 = vld [vmem:[%s1 + $0x18] sm:$0xff]
      %v291 = vld [vmem:[%s1 + $0x20] sm:$0xff]
      %v292 = vld [vmem:[%s1 + $0x28] sm:$0xff]
      %v293 = vld [vmem:[%s1 + $0x30] sm:$0xff]
      %v294 = vld [vmem:[%s1 + $0x38] sm:$0xff]
      %v295 = vld [vmem:[%s1 + $0x40] sm:$0xff]
      %v296 = vld [vmem:[%s1 + $0x48] sm:$0xff]
      %v297 = vld [vmem:[%s1 + $0x50] sm:$0xff]
      %v298 = vld [vmem:[%s1 + $0x58] sm:$0xff]
      %v299 = vld [vmem:[%s1 + $0x60] sm:$0xff]
      %v300 = vld [vmem:[%s1 + $0x68] sm:$0xff]
      %v301 = vld [vmem:[%s1 + $0x70] sm:$0xff]
      %v302 = vld [vmem:[%s1 + $0x78] sm:$0xff]
      %304 = vset.pattern.permute.xlu0 0
      %305 = vperm.xlu0 %304, %v287
      %v306 = vpop.permute.xlu0 %305
      %309 = vset.pattern.permute.xlu0 0
      %310 = vperm.xlu0 %309, %v288
      %v311 = vpop.permute.xlu0 %310
      %314 = vset.pattern.permute.xlu0 0
      %315 = vperm.xlu0 %314, %v289
      %v316 = vpop.permute.xlu0 %315
      %319 = vset.pattern.permute.xlu0 0
      %320 = vperm.xlu0 %319, %v290
      %v321 = vpop.permute.xlu0 %320
      %324 = vset.pattern.permute.xlu0 0
      %325 = vperm.xlu0 %324, %v291
      %v326 = vpop.permute.xlu0 %325
      %329 = vset.pattern.permute.xlu0 0
      %330 = vperm.xlu0 %329, %v292
      %v331 = vpop.permute.xlu0 %330
      %334 = vset.pattern.permute.xlu0 0
      %335 = vperm.xlu0 %334, %v293
      %v336 = vpop.permute.xlu0 %335
      %339 = vset.pattern.permute.xlu0 0
      %340 = vperm.xlu0 %339, %v294
      %v341 = vpop.permute.xlu0 %340
      %344 = vset.pattern.permute.xlu0 0
      %345 = vperm.xlu0 %344, %v295
      %v346 = vpop.permute.xlu0 %345
      %349 = vset.pattern.permute.xlu0 0
      %350 = vperm.xlu0 %349, %v296
      %v351 = vpop.permute.xlu0 %350
      %354 = vset.pattern.permute.xlu0 0
      %355 = vperm.xlu0 %354, %v297
      %v356 = vpop.permute.xlu0 %355
      %359 = vset.pattern.permute.xlu0 0
      %360 = vperm.xlu0 %359, %v298
      %v361 = vpop.permute.xlu0 %360
      %364 = vset.pattern.permute.xlu0 0
      %365 = vperm.xlu0 %364, %v299
      %v366 = vpop.permute.xlu0 %365
      %369 = vset.pattern.permute.xlu0 0
      %370 = vperm.xlu0 %369, %v300
      %v371 = vpop.permute.xlu0 %370
      %374 = vset.pattern.permute.xlu0 0
      %375 = vperm.xlu0 %374, %v301
      %v376 = vpop.permute.xlu0 %375
      %379 = vset.pattern.permute.xlu0 0
      %380 = vperm.xlu0 %379, %v302
      %v381 = vpop.permute.xlu0 %380
      %v387 = vlaneseq
      %v388 = vshrl.u32 %v387, 7
      %v389 = vsub.s32 0, %v388
      %v390 = vrot.slane %v283, %v389
      %v391 = vlaneseq
      %v392 = vshrl.u32 %v391, 7
      %v393 = vsub.s32 2, %v392
      %v394 = vrot.slane %v283, %v393
      %v395 = vlaneseq
      %v396 = vshrl.u32 %v395, 7
      %v397 = vsub.s32 4, %v396
      %v398 = vrot.slane %v283, %v397
      %v399 = vlaneseq
      %v400 = vshrl.u32 %v399, 7
      %v401 = vsub.s32 6, %v400
      %v402 = vrot.slane %v283, %v401
      %v403 = vlaneseq
      %v404 = vshrl.u32 %v403, 7
      %v405 = vsub.s32 0, %v404
      %v406 = vrot.slane %v284, %v405
      %v407 = vlaneseq
      %v408 = vshrl.u32 %v407, 7
      %v409 = vsub.s32 2, %v408
      %v410 = vrot.slane %v284, %v409
      %v411 = vlaneseq
      %v412 = vshrl.u32 %v411, 7
      %v413 = vsub.s32 4, %v412
      %v414 = vrot.slane %v284, %v413
      %v415 = vlaneseq
      %v416 = vshrl.u32 %v415, 7
      %v417 = vsub.s32 6, %v416
      %v418 = vrot.slane %v284, %v417
      %v419 = vlaneseq
      %v420 = vshrl.u32 %v419, 7
      %v421 = vsub.s32 0, %v420
      %v422 = vrot.slane %v285, %v421
      %v423 = vlaneseq
      %v424 = vshrl.u32 %v423, 7
      %v425 = vsub.s32 2, %v424
      %v426 = vrot.slane %v285, %v425
      %v427 = vlaneseq
      %v428 = vshrl.u32 %v427, 7
      %v429 = vsub.s32 4, %v428
      %v430 = vrot.slane %v285, %v429
      %v431 = vlaneseq
      %v432 = vshrl.u32 %v431, 7
      %v433 = vsub.s32 6, %v432
      %v434 = vrot.slane %v285, %v433
      %v435 = vlaneseq
      %v436 = vshrl.u32 %v435, 7
      %v437 = vsub.s32 0, %v436
      %v438 = vrot.slane %v286, %v437
      %v439 = vlaneseq
      %v440 = vshrl.u32 %v439, 7
      %v441 = vsub.s32 2, %v440
      %v442 = vrot.slane %v286, %v441
      %v443 = vlaneseq
      %v444 = vshrl.u32 %v443, 7
      %v445 = vsub.s32 4, %v444
      %v446 = vrot.slane %v286, %v445
      %v447 = vlaneseq
      %v448 = vshrl.u32 %v447, 7
      %v449 = vsub.s32 6, %v448
      %v450 = vrot.slane %v286, %v449
      %v467 = vlaneseq
      %v468 = vshrl.u32 %v467, 7
      %v469 = vsub.s32 0, %v468
      %v470 = vrot.slane %v390, %v469
      %v471 = vlaneseq
      %v472 = vshrl.u32 %v471, 7
      %v473 = vsub.s32 0, %v472
      %v474 = vrot.slane %v394, %v473
      %v475 = vlaneseq
      %v476 = vshrl.u32 %v475, 7
      %v477 = vsub.s32 0, %v476
      %v478 = vrot.slane %v398, %v477
      %v479 = vlaneseq
      %v480 = vshrl.u32 %v479, 7
      %v481 = vsub.s32 0, %v480
      %v482 = vrot.slane %v402, %v481
      %v483 = vlaneseq
      %v484 = vshrl.u32 %v483, 7
      %v485 = vsub.s32 0, %v484
      %v486 = vrot.slane %v406, %v485
      %v487 = vlaneseq
      %v488 = vshrl.u32 %v487, 7
      %v489 = vsub.s32 0, %v488
      %v490 = vrot.slane %v410, %v489
      %v491 = vlaneseq
      %v492 = vshrl.u32 %v491, 7
      %v493 = vsub.s32 0, %v492
      %v494 = vrot.slane %v414, %v493
      %v495 = vlaneseq
      %v496 = vshrl.u32 %v495, 7
      %v497 = vsub.s32 0, %v496
      %v498 = vrot.slane %v418, %v497
      %v499 = vlaneseq
      %v500 = vshrl.u32 %v499, 7
      %v501 = vsub.s32 0, %v500
      %v502 = vrot.slane %v422, %v501
      %v503 = vlaneseq
      %v504 = vshrl.u32 %v503, 7
      %v505 = vsub.s32 0, %v504
      %v506 = vrot.slane %v426, %v505
      %v507 = vlaneseq
      %v508 = vshrl.u32 %v507, 7
      %v509 = vsub.s32 0, %v508
      %v510 = vrot.slane %v430, %v509
      %v511 = vlaneseq
      %v512 = vshrl.u32 %v511, 7
      %v513 = vsub.s32 0, %v512
      %v514 = vrot.slane %v434, %v513
      %v515 = vlaneseq
      %v516 = vshrl.u32 %v515, 7
      %v517 = vsub.s32 0, %v516
      %v518 = vrot.slane %v438, %v517
      %v519 = vlaneseq
      %v520 = vshrl.u32 %v519, 7
      %v521 = vsub.s32 0, %v520
      %v522 = vrot.slane %v442, %v521
      %v523 = vlaneseq
      %v524 = vshrl.u32 %v523, 7
      %v525 = vsub.s32 0, %v524
      %v526 = vrot.slane %v446, %v525
      %v527 = vlaneseq
      %v528 = vshrl.u32 %v527, 7
      %v529 = vsub.s32 0, %v528
      %v530 = vrot.slane %v450, %v529
      %v531 = vmul.f32 %v306, %v470
      %v532 = vmul.f32 %v306, %v474
      %v533 = vmul.f32 %v306, %v478
      %v534 = vmul.f32 %v306, %v482
      %v535 = vmul.f32 %v306, %v486
      %v536 = vmul.f32 %v306, %v490
      %v537 = vmul.f32 %v306, %v494
      %v538 = vmul.f32 %v306, %v498
      %v539 = vmul.f32 %v306, %v502
      %v540 = vmul.f32 %v306, %v506
      %v541 = vmul.f32 %v306, %v510
      %v542 = vmul.f32 %v306, %v514
      %v543 = vmul.f32 %v306, %v518
      %v544 = vmul.f32 %v306, %v522
      %v545 = vmul.f32 %v306, %v526
      %v546 = vmul.f32 %v306, %v530
      %v547 = vmul.f32 %v311, %v470
      %v548 = vmul.f32 %v311, %v474
      %v549 = vmul.f32 %v311, %v478
      %v550 = vmul.f32 %v311, %v482
      %v551 = vmul.f32 %v311, %v486
      %v552 = vmul.f32 %v311, %v490
      %v553 = vmul.f32 %v311, %v494
      %v554 = vmul.f32 %v311, %v498
      %v555 = vmul.f32 %v311, %v502
      %v556 = vmul.f32 %v311, %v506
      %v557 = vmul.f32 %v311, %v510
      %v558 = vmul.f32 %v311, %v514
      %v559 = vmul.f32 %v311, %v518
      %v560 = vmul.f32 %v311, %v522
      %v561 = vmul.f32 %v311, %v526
      %v562 = vmul.f32 %v311, %v530
      %v563 = vmul.f32 %v316, %v470
      %v564 = vmul.f32 %v316, %v474
      %v565 = vmul.f32 %v316, %v478
      %v566 = vmul.f32 %v316, %v482
      %v567 = vmul.f32 %v316, %v486
      %v568 = vmul.f32 %v316, %v490
      %v569 = vmul.f32 %v316, %v494
      %v570 = vmul.f32 %v316, %v498
      %v571 = vmul.f32 %v316, %v502
      %v572 = vmul.f32 %v316, %v506
      %v573 = vmul.f32 %v316, %v510
      %v574 = vmul.f32 %v316, %v514
      %v575 = vmul.f32 %v316, %v518
      %v576 = vmul.f32 %v316, %v522
      %v577 = vmul.f32 %v316, %v526
      %v578 = vmul.f32 %v316, %v530
      %v579 = vmul.f32 %v321, %v470
      %v580 = vmul.f32 %v321, %v474
      %v581 = vmul.f32 %v321, %v478
      %v582 = vmul.f32 %v321, %v482
      %v583 = vmul.f32 %v321, %v486
      %v584 = vmul.f32 %v321, %v490
      %v585 = vmul.f32 %v321, %v494
      %v586 = vmul.f32 %v321, %v498
      %v587 = vmul.f32 %v321, %v502
      %v588 = vmul.f32 %v321, %v506
      %v589 = vmul.f32 %v321, %v510
      %v590 = vmul.f32 %v321, %v514
      %v591 = vmul.f32 %v321, %v518
      %v592 = vmul.f32 %v321, %v522
      %v593 = vmul.f32 %v321, %v526
      %v594 = vmul.f32 %v321, %v530
      %v595 = vmul.f32 %v326, %v470
      %v596 = vmul.f32 %v326, %v474
      %v597 = vmul.f32 %v326, %v478
      %v598 = vmul.f32 %v326, %v482
      %v599 = vmul.f32 %v326, %v486
      %v600 = vmul.f32 %v326, %v490
      %v601 = vmul.f32 %v326, %v494
      %v602 = vmul.f32 %v326, %v498
      %v603 = vmul.f32 %v326, %v502
      %v604 = vmul.f32 %v326, %v506
      %v605 = vmul.f32 %v326, %v510
      %v606 = vmul.f32 %v326, %v514
      %v607 = vmul.f32 %v326, %v518
      %v608 = vmul.f32 %v326, %v522
      %v609 = vmul.f32 %v326, %v526
      %v610 = vmul.f32 %v326, %v530
      %v611 = vmul.f32 %v331, %v470
      %v612 = vmul.f32 %v331, %v474
      %v613 = vmul.f32 %v331, %v478
      %v614 = vmul.f32 %v331, %v482
      %v615 = vmul.f32 %v331, %v486
      %v616 = vmul.f32 %v331, %v490
      %v617 = vmul.f32 %v331, %v494
      %v618 = vmul.f32 %v331, %v498
      %v619 = vmul.f32 %v331, %v502
      %v620 = vmul.f32 %v331, %v506
      %v621 = vmul.f32 %v331, %v510
      %v622 = vmul.f32 %v331, %v514
      %v623 = vmul.f32 %v331, %v518
      %v624 = vmul.f32 %v331, %v522
      %v625 = vmul.f32 %v331, %v526
      %v626 = vmul.f32 %v331, %v530
      %v627 = vmul.f32 %v336, %v470
      %v628 = vmul.f32 %v336, %v474
      %v629 = vmul.f32 %v336, %v478
      %v630 = vmul.f32 %v336, %v482
      %v631 = vmul.f32 %v336, %v486
      %v632 = vmul.f32 %v336, %v490
      %v633 = vmul.f32 %v336, %v494
      %v634 = vmul.f32 %v336, %v498
      %v635 = vmul.f32 %v336, %v502
      %v636 = vmul.f32 %v336, %v506
      %v637 = vmul.f32 %v336, %v510
      %v638 = vmul.f32 %v336, %v514
      %v639 = vmul.f32 %v336, %v518
      %v640 = vmul.f32 %v336, %v522
      %v641 = vmul.f32 %v336, %v526
      %v642 = vmul.f32 %v336, %v530
      %v643 = vmul.f32 %v341, %v470
      %v644 = vmul.f32 %v341, %v474
      %v645 = vmul.f32 %v341, %v478
      %v646 = vmul.f32 %v341, %v482
      %v647 = vmul.f32 %v341, %v486
      %v648 = vmul.f32 %v341, %v490
      %v649 = vmul.f32 %v341, %v494
      %v650 = vmul.f32 %v341, %v498
      %v651 = vmul.f32 %v341, %v502
      %v652 = vmul.f32 %v341, %v506
      %v653 = vmul.f32 %v341, %v510
      %v654 = vmul.f32 %v341, %v514
      %v655 = vmul.f32 %v341, %v518
      %v656 = vmul.f32 %v341, %v522
      %v657 = vmul.f32 %v341, %v526
      %v658 = vmul.f32 %v341, %v530
      %v659 = vmul.f32 %v346, %v470
      %v660 = vmul.f32 %v346, %v474
      %v661 = vmul.f32 %v346, %v478
      %v662 = vmul.f32 %v346, %v482
      %v663 = vmul.f32 %v346, %v486
      %v664 = vmul.f32 %v346, %v490
      %v665 = vmul.f32 %v346, %v494
      %v666 = vmul.f32 %v346, %v498
      %v667 = vmul.f32 %v346, %v502
      %v668 = vmul.f32 %v346, %v506
      %v669 = vmul.f32 %v346, %v510
      %v670 = vmul.f32 %v346, %v514
      %v671 = vmul.f32 %v346, %v518
      %v672 = vmul.f32 %v346, %v522
      %v673 = vmul.f32 %v346, %v526
      %v674 = vmul.f32 %v346, %v530
      %v675 = vmul.f32 %v351, %v470
      %v676 = vmul.f32 %v351, %v474
      %v677 = vmul.f32 %v351, %v478
      %v678 = vmul.f32 %v351, %v482
      %v679 = vmul.f32 %v351, %v486
      %v680 = vmul.f32 %v351, %v490
      %v681 = vmul.f32 %v351, %v494
      %v682 = vmul.f32 %v351, %v498
      %v683 = vmul.f32 %v351, %v502
      %v684 = vmul.f32 %v351, %v506
      %v685 = vmul.f32 %v351, %v510
      %v686 = vmul.f32 %v351, %v514
      %v687 = vmul.f32 %v351, %v518
      %v688 = vmul.f32 %v351, %v522
      %v689 = vmul.f32 %v351, %v526
      %v690 = vmul.f32 %v351, %v530
      %v691 = vmul.f32 %v356, %v470
      %v692 = vmul.f32 %v356, %v474
      %v693 = vmul.f32 %v356, %v478
      %v694 = vmul.f32 %v356, %v482
      %v695 = vmul.f32 %v356, %v486
      %v696 = vmul.f32 %v356, %v490
      %v697 = vmul.f32 %v356, %v494
      %v698 = vmul.f32 %v356, %v498
      %v699 = vmul.f32 %v356, %v502
      %v700 = vmul.f32 %v356, %v506
      %v701 = vmul.f32 %v356, %v510
      %v702 = vmul.f32 %v356, %v514
      %v703 = vmul.f32 %v356, %v518
      %v704 = vmul.f32 %v356, %v522
      %v705 = vmul.f32 %v356, %v526
      %v706 = vmul.f32 %v356, %v530
      %v707 = vmul.f32 %v361, %v470
      %v708 = vmul.f32 %v361, %v474
      %v709 = vmul.f32 %v361, %v478
      %v710 = vmul.f32 %v361, %v482
      %v711 = vmul.f32 %v361, %v486
      %v712 = vmul.f32 %v361, %v490
      %v713 = vmul.f32 %v361, %v494
      %v714 = vmul.f32 %v361, %v498
      %v715 = vmul.f32 %v361, %v502
      %v716 = vmul.f32 %v361, %v506
      %v717 = vmul.f32 %v361, %v510
      %v718 = vmul.f32 %v361, %v514
      %v719 = vmul.f32 %v361, %v518
      %v720 = vmul.f32 %v361, %v522
      %v721 = vmul.f32 %v361, %v526
      %v722 = vmul.f32 %v361, %v530
      %v723 = vmul.f32 %v366, %v470
      %v724 = vmul.f32 %v366, %v474
      %v725 = vmul.f32 %v366, %v478
      %v726 = vmul.f32 %v366, %v482
      %v727 = vmul.f32 %v366, %v486
      %v728 = vmul.f32 %v366, %v490
      %v729 = vmul.f32 %v366, %v494
      %v730 = vmul.f32 %v366, %v498
      %v731 = vmul.f32 %v366, %v502
      %v732 = vmul.f32 %v366, %v506
      %v733 = vmul.f32 %v366, %v510
      %v734 = vmul.f32 %v366, %v514
      %v735 = vmul.f32 %v366, %v518
      %v736 = vmul.f32 %v366, %v522
      %v737 = vmul.f32 %v366, %v526
      %v738 = vmul.f32 %v366, %v530
      %v739 = vmul.f32 %v371, %v470
      %v740 = vmul.f32 %v371, %v474
      %v741 = vmul.f32 %v371, %v478
      %v742 = vmul.f32 %v371, %v482
      %v743 = vmul.f32 %v371, %v486
      %v744 = vmul.f32 %v371, %v490
      %v745 = vmul.f32 %v371, %v494
      %v746 = vmul.f32 %v371, %v498
      %v747 = vmul.f32 %v371, %v502
      %v748 = vmul.f32 %v371, %v506
      %v749 = vmul.f32 %v371, %v510
      %v750 = vmul.f32 %v371, %v514
      %v751 = vmul.f32 %v371, %v518
      %v752 = vmul.f32 %v371, %v522
      %v753 = vmul.f32 %v371, %v526
      %v754 = vmul.f32 %v371, %v530
      %v755 = vmul.f32 %v376, %v470
      %v756 = vmul.f32 %v376, %v474
      %v757 = vmul.f32 %v376, %v478
      %v758 = vmul.f32 %v376, %v482
      %v759 = vmul.f32 %v376, %v486
      %v760 = vmul.f32 %v376, %v490
      %v761 = vmul.f32 %v376, %v494
      %v762 = vmul.f32 %v376, %v498
      %v763 = vmul.f32 %v376, %v502
      %v764 = vmul.f32 %v376, %v506
      %v765 = vmul.f32 %v376, %v510
      %v766 = vmul.f32 %v376, %v514
      %v767 = vmul.f32 %v376, %v518
      %v768 = vmul.f32 %v376, %v522
      %v769 = vmul.f32 %v376, %v526
      %v770 = vmul.f32 %v376, %v530
      %v771 = vmul.f32 %v381, %v470
      %v772 = vmul.f32 %v381, %v474
      %v773 = vmul.f32 %v381, %v478
      %v774 = vmul.f32 %v381, %v482
      %v775 = vmul.f32 %v381, %v486
      %v776 = vmul.f32 %v381, %v490
      %v777 = vmul.f32 %v381, %v494
      %v778 = vmul.f32 %v381, %v498
      %v779 = vmul.f32 %v381, %v502
      %v780 = vmul.f32 %v381, %v506
      %v781 = vmul.f32 %v381, %v510
      %v782 = vmul.f32 %v381, %v514
      %v783 = vmul.f32 %v381, %v518
      %v784 = vmul.f32 %v381, %v522
      %v785 = vmul.f32 %v381, %v526
      %v786 = vmul.f32 %v381, %v530
      %787 = vset.pattern.permute.xlu0 1
      %788 = vperm.xlu0 %787, %v287
      %v789 = vpop.permute.xlu0 %788
      %791 = vset.pattern.permute.xlu0 1
      %792 = vperm.xlu0 %791, %v288
      %v793 = vpop.permute.xlu0 %792
      %795 = vset.pattern.permute.xlu0 1
      %796 = vperm.xlu0 %795, %v289
      %v797 = vpop.permute.xlu0 %796
      %799 = vset.pattern.permute.xlu0 1
      %800 = vperm.xlu0 %799, %v290
      %v801 = vpop.permute.xlu0 %800
      %803 = vset.pattern.permute.xlu0 1
      %804 = vperm.xlu0 %803, %v291
      %v805 = vpop.permute.xlu0 %804
      %807 = vset.pattern.permute.xlu0 1
      %808 = vperm.xlu0 %807, %v292
      %v809 = vpop.permute.xlu0 %808
      %811 = vset.pattern.permute.xlu0 1
      %812 = vperm.xlu0 %811, %v293
      %v813 = vpop.permute.xlu0 %812
      %815 = vset.pattern.permute.xlu0 1
      %816 = vperm.xlu0 %815, %v294
      %v817 = vpop.permute.xlu0 %816
      %819 = vset.pattern.permute.xlu0 1
      %820 = vperm.xlu0 %819, %v295
      %v821 = vpop.permute.xlu0 %820
      %823 = vset.pattern.permute.xlu0 1
      %824 = vperm.xlu0 %823, %v296
      %v825 = vpop.permute.xlu0 %824
      %827 = vset.pattern.permute.xlu0 1
      %828 = vperm.xlu0 %827, %v297
      %v829 = vpop.permute.xlu0 %828
      %831 = vset.pattern.permute.xlu0 1
      %832 = vperm.xlu0 %831, %v298
      %v833 = vpop.permute.xlu0 %832
      %835 = vset.pattern.permute.xlu0 1
      %836 = vperm.xlu0 %835, %v299
      %v837 = vpop.permute.xlu0 %836
      %839 = vset.pattern.permute.xlu0 1
      %840 = vperm.xlu0 %839, %v300
      %v841 = vpop.permute.xlu0 %840
      %843 = vset.pattern.permute.xlu0 1
      %844 = vperm.xlu0 %843, %v301
      %v845 = vpop.permute.xlu0 %844
      %847 = vset.pattern.permute.xlu0 1
      %848 = vperm.xlu0 %847, %v302
      %v849 = vpop.permute.xlu0 %848
      %v851 = vlaneseq
      %v852 = vshrl.u32 %v851, 7
      %v853 = vsub.s32 1, %v852
      %v854 = vrot.slane %v283, %v853
      %v855 = vlaneseq
      %v856 = vshrl.u32 %v855, 7
      %v857 = vsub.s32 3, %v856
      %v858 = vrot.slane %v283, %v857
      %v859 = vlaneseq
      %v860 = vshrl.u32 %v859, 7
      %v861 = vsub.s32 5, %v860
      %v862 = vrot.slane %v283, %v861
      %v863 = vlaneseq
      %v864 = vshrl.u32 %v863, 7
      %v865 = vsub.s32 7, %v864
      %v866 = vrot.slane %v283, %v865
      %v867 = vlaneseq
      %v868 = vshrl.u32 %v867, 7
      %v869 = vsub.s32 1, %v868
      %v870 = vrot.slane %v284, %v869
      %v871 = vlaneseq
      %v872 = vshrl.u32 %v871, 7
      %v873 = vsub.s32 3, %v872
      %v874 = vrot.slane %v284, %v873
      %v875 = vlaneseq
      %v876 = vshrl.u32 %v875, 7
      %v877 = vsub.s32 5, %v876
      %v878 = vrot.slane %v284, %v877
      %v879 = vlaneseq
      %v880 = vshrl.u32 %v879, 7
      %v881 = vsub.s32 7, %v880
      %v882 = vrot.slane %v284, %v881
      %v883 = vlaneseq
      %v884 = vshrl.u32 %v883, 7
      %v885 = vsub.s32 1, %v884
      %v886 = vrot.slane %v285, %v885
      %v887 = vlaneseq
      %v888 = vshrl.u32 %v887, 7
      %v889 = vsub.s32 3, %v888
      %v890 = vrot.slane %v285, %v889
      %v891 = vlaneseq
      %v892 = vshrl.u32 %v891, 7
      %v893 = vsub.s32 5, %v892
      %v894 = vrot.slane %v285, %v893
      %v895 = vlaneseq
      %v896 = vshrl.u32 %v895, 7
      %v897 = vsub.s32 7, %v896
      %v898 = vrot.slane %v285, %v897
      %v899 = vlaneseq
      %v900 = vshrl.u32 %v899, 7
      %v901 = vsub.s32 1, %v900
      %v902 = vrot.slane %v286, %v901
      %v903 = vlaneseq
      %v904 = vshrl.u32 %v903, 7
      %v905 = vsub.s32 3, %v904
      %v906 = vrot.slane %v286, %v905
      %v907 = vlaneseq
      %v908 = vshrl.u32 %v907, 7
      %v909 = vsub.s32 5, %v908
      %v910 = vrot.slane %v286, %v909
      %v911 = vlaneseq
      %v912 = vshrl.u32 %v911, 7
      %v913 = vsub.s32 7, %v912
      %v914 = vrot.slane %v286, %v913
      %v931 = vlaneseq
      %v932 = vshrl.u32 %v931, 7
      %v933 = vsub.s32 1, %v932
      %v934 = vrot.slane %v854, %v933
      %v935 = vlaneseq
      %v936 = vshrl.u32 %v935, 7
      %v937 = vsub.s32 1, %v936
      %v938 = vrot.slane %v858, %v937
      %v939 = vlaneseq
      %v940 = vshrl.u32 %v939, 7
      %v941 = vsub.s32 1, %v940
      %v942 = vrot.slane %v862, %v941
      %v943 = vlaneseq
      %v944 = vshrl.u32 %v943, 7
      %v945 = vsub.s32 1, %v944
      %v946 = vrot.slane %v866, %v945
      %v947 = vlaneseq
      %v948 = vshrl.u32 %v947, 7
      %v949 = vsub.s32 1, %v948
      %v950 = vrot.slane %v870, %v949
      %v951 = vlaneseq
      %v952 = vshrl.u32 %v951, 7
      %v953 = vsub.s32 1, %v952
      %v954 = vrot.slane %v874, %v953
      %v955 = vlaneseq
      %v956 = vshrl.u32 %v955, 7
      %v957 = vsub.s32 1, %v956
      %v958 = vrot.slane %v878, %v957
      %v959 = vlaneseq
      %v960 = vshrl.u32 %v959, 7
      %v961 = vsub.s32 1, %v960
      %v962 = vrot.slane %v882, %v961
      %v963 = vlaneseq
      %v964 = vshrl.u32 %v963, 7
      %v965 = vsub.s32 1, %v964
      %v966 = vrot.slane %v886, %v965
      %v967 = vlaneseq
      %v968 = vshrl.u32 %v967, 7
      %v969 = vsub.s32 1, %v968
      %v970 = vrot.slane %v890, %v969
      %v971 = vlaneseq
      %v972 = vshrl.u32 %v971, 7
      %v973 = vsub.s32 1, %v972
      %v974 = vrot.slane %v894, %v973
      %v975 = vlaneseq
      %v976 = vshrl.u32 %v975, 7
      %v977 = vsub.s32 1, %v976
      %v978 = vrot.slane %v898, %v977
      %v979 = vlaneseq
      %v980 = vshrl.u32 %v979, 7
      %v981 = vsub.s32 1, %v980
      %v982 = vrot.slane %v902, %v981
      %v983 = vlaneseq
      %v984 = vshrl.u32 %v983, 7
      %v985 = vsub.s32 1, %v984
      %v986 = vrot.slane %v906, %v985
      %v987 = vlaneseq
      %v988 = vshrl.u32 %v987, 7
      %v989 = vsub.s32 1, %v988
      %v990 = vrot.slane %v910, %v989
      %v991 = vlaneseq
      %v992 = vshrl.u32 %v991, 7
      %v993 = vsub.s32 1, %v992
      %v994 = vrot.slane %v914, %v993
      %v995 = vmul.f32 %v789, %v934
      %v996 = vmul.f32 %v789, %v938
      %v997 = vmul.f32 %v789, %v942
      %v998 = vmul.f32 %v789, %v946
      %v999 = vmul.f32 %v789, %v950
      %v1000 = vmul.f32 %v789, %v954
      %v1001 = vmul.f32 %v789, %v958
      %v1002 = vmul.f32 %v789, %v962
      %v1003 = vmul.f32 %v789, %v966
      %v1004 = vmul.f32 %v789, %v970
      %v1005 = vmul.f32 %v789, %v974
      %v1006 = vmul.f32 %v789, %v978
      %v1007 = vmul.f32 %v789, %v982
      %v1008 = vmul.f32 %v789, %v986
      %v1009 = vmul.f32 %v789, %v990
      %v1010 = vmul.f32 %v789, %v994
      %v1011 = vmul.f32 %v793, %v934
      %v1012 = vmul.f32 %v793, %v938
      %v1013 = vmul.f32 %v793, %v942
      %v1014 = vmul.f32 %v793, %v946
      %v1015 = vmul.f32 %v793, %v950
      %v1016 = vmul.f32 %v793, %v954
      %v1017 = vmul.f32 %v793, %v958
      %v1018 = vmul.f32 %v793, %v962
      %v1019 = vmul.f32 %v793, %v966
      %v1020 = vmul.f32 %v793, %v970
      %v1021 = vmul.f32 %v793, %v974
      %v1022 = vmul.f32 %v793, %v978
      %v1023 = vmul.f32 %v793, %v982
      %v1024 = vmul.f32 %v793, %v986
      %v1025 = vmul.f32 %v793, %v990
      %v1026 = vmul.f32 %v793, %v994
      %v1027 = vmul.f32 %v797, %v934
      %v1028 = vmul.f32 %v797, %v938
      %v1029 = vmul.f32 %v797, %v942
      %v1030 = vmul.f32 %v797, %v946
      %v1031 = vmul.f32 %v797, %v950
      %v1032 = vmul.f32 %v797, %v954
      %v1033 = vmul.f32 %v797, %v958
      %v1034 = vmul.f32 %v797, %v962
      %v1035 = vmul.f32 %v797, %v966
      %v1036 = vmul.f32 %v797, %v970
      %v1037 = vmul.f32 %v797, %v974
      %v1038 = vmul.f32 %v797, %v978
      %v1039 = vmul.f32 %v797, %v982
      %v1040 = vmul.f32 %v797, %v986
      %v1041 = vmul.f32 %v797, %v990
      %v1042 = vmul.f32 %v797, %v994
      %v1043 = vmul.f32 %v801, %v934
      %v1044 = vmul.f32 %v801, %v938
      %v1045 = vmul.f32 %v801, %v942
      %v1046 = vmul.f32 %v801, %v946
      %v1047 = vmul.f32 %v801, %v950
      %v1048 = vmul.f32 %v801, %v954
      %v1049 = vmul.f32 %v801, %v958
      %v1050 = vmul.f32 %v801, %v962
      %v1051 = vmul.f32 %v801, %v966
      %v1052 = vmul.f32 %v801, %v970
      %v1053 = vmul.f32 %v801, %v974
      %v1054 = vmul.f32 %v801, %v978
      %v1055 = vmul.f32 %v801, %v982
      %v1056 = vmul.f32 %v801, %v986
      %v1057 = vmul.f32 %v801, %v990
      %v1058 = vmul.f32 %v801, %v994
      %v1059 = vmul.f32 %v805, %v934
      %v1060 = vmul.f32 %v805, %v938
      %v1061 = vmul.f32 %v805, %v942
      %v1062 = vmul.f32 %v805, %v946
      %v1063 = vmul.f32 %v805, %v950
      %v1064 = vmul.f32 %v805, %v954
      %v1065 = vmul.f32 %v805, %v958
      %v1066 = vmul.f32 %v805, %v962
      %v1067 = vmul.f32 %v805, %v966
      %v1068 = vmul.f32 %v805, %v970
      %v1069 = vmul.f32 %v805, %v974
      %v1070 = vmul.f32 %v805, %v978
      %v1071 = vmul.f32 %v805, %v982
      %v1072 = vmul.f32 %v805, %v986
      %v1073 = vmul.f32 %v805, %v990
      %v1074 = vmul.f32 %v805, %v994
      %v1075 = vmul.f32 %v809, %v934
      %v1076 = vmul.f32 %v809, %v938
      %v1077 = vmul.f32 %v809, %v942
      %v1078 = vmul.f32 %v809, %v946
      %v1079 = vmul.f32 %v809, %v950
      %v1080 = vmul.f32 %v809, %v954
      %v1081 = vmul.f32 %v809, %v958
      %v1082 = vmul.f32 %v809, %v962
      %v1083 = vmul.f32 %v809, %v966
      %v1084 = vmul.f32 %v809, %v970
      %v1085 = vmul.f32 %v809, %v974
      %v1086 = vmul.f32 %v809, %v978
      %v1087 = vmul.f32 %v809, %v982
      %v1088 = vmul.f32 %v809, %v986
      %v1089 = vmul.f32 %v809, %v990
      %v1090 = vmul.f32 %v809, %v994
      %v1091 = vmul.f32 %v813, %v934
      %v1092 = vmul.f32 %v813, %v938
      %v1093 = vmul.f32 %v813, %v942
      %v1094 = vmul.f32 %v813, %v946
      %v1095 = vmul.f32 %v813, %v950
      %v1096 = vmul.f32 %v813, %v954
      %v1097 = vmul.f32 %v813, %v958
      %v1098 = vmul.f32 %v813, %v962
      %v1099 = vmul.f32 %v813, %v966
      %v1100 = vmul.f32 %v813, %v970
      %v1101 = vmul.f32 %v813, %v974
      %v1102 = vmul.f32 %v813, %v978
      %v1103 = vmul.f32 %v813, %v982
      %v1104 = vmul.f32 %v813, %v986
      %v1105 = vmul.f32 %v813, %v990
      %v1106 = vmul.f32 %v813, %v994
      %v1107 = vmul.f32 %v817, %v934
      %v1108 = vmul.f32 %v817, %v938
      %v1109 = vmul.f32 %v817, %v942
      %v1110 = vmul.f32 %v817, %v946
      %v1111 = vmul.f32 %v817, %v950
      %v1112 = vmul.f32 %v817, %v954
      %v1113 = vmul.f32 %v817, %v958
      %v1114 = vmul.f32 %v817, %v962
      %v1115 = vmul.f32 %v817, %v966
      %v1116 = vmul.f32 %v817, %v970
      %v1117 = vmul.f32 %v817, %v974
      %v1118 = vmul.f32 %v817, %v978
      %v1119 = vmul.f32 %v817, %v982
      %v1120 = vmul.f32 %v817, %v986
      %v1121 = vmul.f32 %v817, %v990
      %v1122 = vmul.f32 %v817, %v994
      %v1123 = vmul.f32 %v821, %v934
      %v1124 = vmul.f32 %v821, %v938
      %v1125 = vmul.f32 %v821, %v942
      %v1126 = vmul.f32 %v821, %v946
      %v1127 = vmul.f32 %v821, %v950
      %v1128 = vmul.f32 %v821, %v954
      %v1129 = vmul.f32 %v821, %v958
      %v1130 = vmul.f32 %v821, %v962
      %v1131 = vmul.f32 %v821, %v966
      %v1132 = vmul.f32 %v821, %v970
      %v1133 = vmul.f32 %v821, %v974
      %v1134 = vmul.f32 %v821, %v978
      %v1135 = vmul.f32 %v821, %v982
      %v1136 = vmul.f32 %v821, %v986
      %v1137 = vmul.f32 %v821, %v990
      %v1138 = vmul.f32 %v821, %v994
      %v1139 = vmul.f32 %v825, %v934
      %v1140 = vmul.f32 %v825, %v938
      %v1141 = vmul.f32 %v825, %v942
      %v1142 = vmul.f32 %v825, %v946
      %v1143 = vmul.f32 %v825, %v950
      %v1144 = vmul.f32 %v825, %v954
      %v1145 = vmul.f32 %v825, %v958
      %v1146 = vmul.f32 %v825, %v962
      %v1147 = vmul.f32 %v825, %v966
      %v1148 = vmul.f32 %v825, %v970
      %v1149 = vmul.f32 %v825, %v974
      %v1150 = vmul.f32 %v825, %v978
      %v1151 = vmul.f32 %v825, %v982
      %v1152 = vmul.f32 %v825, %v986
      %v1153 = vmul.f32 %v825, %v990
      %v1154 = vmul.f32 %v825, %v994
      %v1155 = vmul.f32 %v829, %v934
      %v1156 = vmul.f32 %v829, %v938
      %v1157 = vmul.f32 %v829, %v942
      %v1158 = vmul.f32 %v829, %v946
      %v1159 = vmul.f32 %v829, %v950
      %v1160 = vmul.f32 %v829, %v954
      %v1161 = vmul.f32 %v829, %v958
      %v1162 = vmul.f32 %v829, %v962
      %v1163 = vmul.f32 %v829, %v966
      %v1164 = vmul.f32 %v829, %v970
      %v1165 = vmul.f32 %v829, %v974
      %v1166 = vmul.f32 %v829, %v978
      %v1167 = vmul.f32 %v829, %v982
      %v1168 = vmul.f32 %v829, %v986
      %v1169 = vmul.f32 %v829, %v990
      %v1170 = vmul.f32 %v829, %v994
      %v1171 = vmul.f32 %v833, %v934
      %v1172 = vmul.f32 %v833, %v938
      %v1173 = vmul.f32 %v833, %v942
      %v1174 = vmul.f32 %v833, %v946
      %v1175 = vmul.f32 %v833, %v950
      %v1176 = vmul.f32 %v833, %v954
      %v1177 = vmul.f32 %v833, %v958
      %v1178 = vmul.f32 %v833, %v962
      %v1179 = vmul.f32 %v833, %v966
      %v1180 = vmul.f32 %v833, %v970
      %v1181 = vmul.f32 %v833, %v974
      %v1182 = vmul.f32 %v833, %v978
      %v1183 = vmul.f32 %v833, %v982
      %v1184 = vmul.f32 %v833, %v986
      %v1185 = vmul.f32 %v833, %v990
      %v1186 = vmul.f32 %v833, %v994
      %v1187 = vmul.f32 %v837, %v934
      %v1188 = vmul.f32 %v837, %v938
      %v1189 = vmul.f32 %v837, %v942
      %v1190 = vmul.f32 %v837, %v946
      %v1191 = vmul.f32 %v837, %v950
      %v1192 = vmul.f32 %v837, %v954
      %v1193 = vmul.f32 %v837, %v958
      %v1194 = vmul.f32 %v837, %v962
      %v1195 = vmul.f32 %v837, %v966
      %v1196 = vmul.f32 %v837, %v970
      %v1197 = vmul.f32 %v837, %v974
      %v1198 = vmul.f32 %v837, %v978
      %v1199 = vmul.f32 %v837, %v982
      %v1200 = vmul.f32 %v837, %v986
      %v1201 = vmul.f32 %v837, %v990
      %v1202 = vmul.f32 %v837, %v994
      %v1203 = vmul.f32 %v841, %v934
      %v1204 = vmul.f32 %v841, %v938
      %v1205 = vmul.f32 %v841, %v942
      %v1206 = vmul.f32 %v841, %v946
      %v1207 = vmul.f32 %v841, %v950
      %v1208 = vmul.f32 %v841, %v954
      %v1209 = vmul.f32 %v841, %v958
      %v1210 = vmul.f32 %v841, %v962
      %v1211 = vmul.f32 %v841, %v966
      %v1212 = vmul.f32 %v841, %v970
      %v1213 = vmul.f32 %v841, %v974
      %v1214 = vmul.f32 %v841, %v978
      %v1215 = vmul.f32 %v841, %v982
      %v1216 = vmul.f32 %v841, %v986
      %v1217 = vmul.f32 %v841, %v990
      %v1218 = vmul.f32 %v841, %v994
      %v1219 = vmul.f32 %v845, %v934
      %v1220 = vmul.f32 %v845, %v938
      %v1221 = vmul.f32 %v845, %v942
      %v1222 = vmul.f32 %v845, %v946
      %v1223 = vmul.f32 %v845, %v950
      %v1224 = vmul.f32 %v845, %v954
      %v1225 = vmul.f32 %v845, %v958
      %v1226 = vmul.f32 %v845, %v962
      %v1227 = vmul.f32 %v845, %v966
      %v1228 = vmul.f32 %v845, %v970
      %v1229 = vmul.f32 %v845, %v974
      %v1230 = vmul.f32 %v845, %v978
      %v1231 = vmul.f32 %v845, %v982
      %v1232 = vmul.f32 %v845, %v986
      %v1233 = vmul.f32 %v845, %v990
      %v1234 = vmul.f32 %v845, %v994
      %v1235 = vmul.f32 %v849, %v934
      %v1236 = vmul.f32 %v849, %v938
      %v1237 = vmul.f32 %v849, %v942
      %v1238 = vmul.f32 %v849, %v946
      %v1239 = vmul.f32 %v849, %v950
      %v1240 = vmul.f32 %v849, %v954
      %v1241 = vmul.f32 %v849, %v958
      %v1242 = vmul.f32 %v849, %v962
      %v1243 = vmul.f32 %v849, %v966
      %v1244 = vmul.f32 %v849, %v970
      %v1245 = vmul.f32 %v849, %v974
      %v1246 = vmul.f32 %v849, %v978
      %v1247 = vmul.f32 %v849, %v982
      %v1248 = vmul.f32 %v849, %v986
      %v1249 = vmul.f32 %v849, %v990
      %v1250 = vmul.f32 %v849, %v994
      %v1251 = vadd.f32 %v531, %v995
      %v1252 = vadd.f32 %v532, %v996
      %v1253 = vadd.f32 %v533, %v997
      %v1254 = vadd.f32 %v534, %v998
      %v1255 = vadd.f32 %v535, %v999
      %v1256 = vadd.f32 %v536, %v1000
      %v1257 = vadd.f32 %v537, %v1001
      %v1258 = vadd.f32 %v538, %v1002
      %v1259 = vadd.f32 %v539, %v1003
      %v1260 = vadd.f32 %v540, %v1004
      %v1261 = vadd.f32 %v541, %v1005
      %v1262 = vadd.f32 %v542, %v1006
      %v1263 = vadd.f32 %v543, %v1007
      %v1264 = vadd.f32 %v544, %v1008
      %v1265 = vadd.f32 %v545, %v1009
      %v1266 = vadd.f32 %v546, %v1010
      %v1267 = vadd.f32 %v547, %v1011
      %v1268 = vadd.f32 %v548, %v1012
      %v1269 = vadd.f32 %v549, %v1013
      %v1270 = vadd.f32 %v550, %v1014
      %v1271 = vadd.f32 %v551, %v1015
      %v1272 = vadd.f32 %v552, %v1016
      %v1273 = vadd.f32 %v553, %v1017
      %v1274 = vadd.f32 %v554, %v1018
      %v1275 = vadd.f32 %v555, %v1019
      %v1276 = vadd.f32 %v556, %v1020
      %v1277 = vadd.f32 %v557, %v1021
      %v1278 = vadd.f32 %v558, %v1022
      %v1279 = vadd.f32 %v559, %v1023
      %v1280 = vadd.f32 %v560, %v1024
      %v1281 = vadd.f32 %v561, %v1025
      %v1282 = vadd.f32 %v562, %v1026
      %v1283 = vadd.f32 %v563, %v1027
      %v1284 = vadd.f32 %v564, %v1028
      %v1285 = vadd.f32 %v565, %v1029
      %v1286 = vadd.f32 %v566, %v1030
      %v1287 = vadd.f32 %v567, %v1031
      %v1288 = vadd.f32 %v568, %v1032
      %v1289 = vadd.f32 %v569, %v1033
      %v1290 = vadd.f32 %v570, %v1034
      %v1291 = vadd.f32 %v571, %v1035
      %v1292 = vadd.f32 %v572, %v1036
      %v1293 = vadd.f32 %v573, %v1037
      %v1294 = vadd.f32 %v574, %v1038
      %v1295 = vadd.f32 %v575, %v1039
      %v1296 = vadd.f32 %v576, %v1040
      %v1297 = vadd.f32 %v577, %v1041
      %v1298 = vadd.f32 %v578, %v1042
      %v1299 = vadd.f32 %v579, %v1043
      %v1300 = vadd.f32 %v580, %v1044
      %v1301 = vadd.f32 %v581, %v1045
      %v1302 = vadd.f32 %v582, %v1046
      %v1303 = vadd.f32 %v583, %v1047
      %v1304 = vadd.f32 %v584, %v1048
      %v1305 = vadd.f32 %v585, %v1049
      %v1306 = vadd.f32 %v586, %v1050
      %v1307 = vadd.f32 %v587, %v1051
      %v1308 = vadd.f32 %v588, %v1052
      %v1309 = vadd.f32 %v589, %v1053
      %v1310 = vadd.f32 %v590, %v1054
      %v1311 = vadd.f32 %v591, %v1055
      %v1312 = vadd.f32 %v592, %v1056
      %v1313 = vadd.f32 %v593, %v1057
      %v1314 = vadd.f32 %v594, %v1058
      %v1315 = vadd.f32 %v595, %v1059
      %v1316 = vadd.f32 %v596, %v1060
      %v1317 = vadd.f32 %v597, %v1061
      %v1318 = vadd.f32 %v598, %v1062
      %v1319 = vadd.f32 %v599, %v1063
      %v1320 = vadd.f32 %v600, %v1064
      %v1321 = vadd.f32 %v601, %v1065
      %v1322 = vadd.f32 %v602, %v1066
      %v1323 = vadd.f32 %v603, %v1067
      %v1324 = vadd.f32 %v604, %v1068
      %v1325 = vadd.f32 %v605, %v1069
      %v1326 = vadd.f32 %v606, %v1070
      %v1327 = vadd.f32 %v607, %v1071
      %v1328 = vadd.f32 %v608, %v1072
      %v1329 = vadd.f32 %v609, %v1073
      %v1330 = vadd.f32 %v610, %v1074
      %v1331 = vadd.f32 %v611, %v1075
      %v1332 = vadd.f32 %v612, %v1076
      %v1333 = vadd.f32 %v613, %v1077
      %v1334 = vadd.f32 %v614, %v1078
      %v1335 = vadd.f32 %v615, %v1079
      %v1336 = vadd.f32 %v616, %v1080
      %v1337 = vadd.f32 %v617, %v1081
      %v1338 = vadd.f32 %v618, %v1082
      %v1339 = vadd.f32 %v619, %v1083
      %v1340 = vadd.f32 %v620, %v1084
      %v1341 = vadd.f32 %v621, %v1085
      %v1342 = vadd.f32 %v622, %v1086
      %v1343 = vadd.f32 %v623, %v1087
      %v1344 = vadd.f32 %v624, %v1088
      %v1345 = vadd.f32 %v625, %v1089
      %v1346 = vadd.f32 %v626, %v1090
      %v1347 = vadd.f32 %v627, %v1091
      %v1348 = vadd.f32 %v628, %v1092
      %v1349 = vadd.f32 %v629, %v1093
      %v1350 = vadd.f32 %v630, %v1094
      %v1351 = vadd.f32 %v631, %v1095
      %v1352 = vadd.f32 %v632, %v1096
      %v1353 = vadd.f32 %v633, %v1097
      %v1354 = vadd.f32 %v634, %v1098
      %v1355 = vadd.f32 %v635, %v1099
      %v1356 = vadd.f32 %v636, %v1100
      %v1357 = vadd.f32 %v637, %v1101
      %v1358 = vadd.f32 %v638, %v1102
      %v1359 = vadd.f32 %v639, %v1103
      %v1360 = vadd.f32 %v640, %v1104
      %v1361 = vadd.f32 %v641, %v1105
      %v1362 = vadd.f32 %v642, %v1106
      %v1363 = vadd.f32 %v643, %v1107
      %v1364 = vadd.f32 %v644, %v1108
      %v1365 = vadd.f32 %v645, %v1109
      %v1366 = vadd.f32 %v646, %v1110
      %v1367 = vadd.f32 %v647, %v1111
      %v1368 = vadd.f32 %v648, %v1112
      %v1369 = vadd.f32 %v649, %v1113
      %v1370 = vadd.f32 %v650, %v1114
      %v1371 = vadd.f32 %v651, %v1115
      %v1372 = vadd.f32 %v652, %v1116
      %v1373 = vadd.f32 %v653, %v1117
      %v1374 = vadd.f32 %v654, %v1118
      %v1375 = vadd.f32 %v655, %v1119
      %v1376 = vadd.f32 %v656, %v1120
      %v1377 = vadd.f32 %v657, %v1121
      %v1378 = vadd.f32 %v658, %v1122
      %v1379 = vadd.f32 %v659, %v1123
      %v1380 = vadd.f32 %v660, %v1124
      %v1381 = vadd.f32 %v661, %v1125
      %v1382 = vadd.f32 %v662, %v1126
      %v1383 = vadd.f32 %v663, %v1127
      %v1384 = vadd.f32 %v664, %v1128
      %v1385 = vadd.f32 %v665, %v1129
      %v1386 = vadd.f32 %v666, %v1130
      %v1387 = vadd.f32 %v667, %v1131
      %v1388 = vadd.f32 %v668, %v1132
      %v1389 = vadd.f32 %v669, %v1133
      %v1390 = vadd.f32 %v670, %v1134
      %v1391 = vadd.f32 %v671, %v1135
      %v1392 = vadd.f32 %v672, %v1136
      %v1393 = vadd.f32 %v673, %v1137
      %v1394 = vadd.f32 %v674, %v1138
      %v1395 = vadd.f32 %v675, %v1139
      %v1396 = vadd.f32 %v676, %v1140
      %v1397 = vadd.f32 %v677, %v1141
      %v1398 = vadd.f32 %v678, %v1142
      %v1399 = vadd.f32 %v679, %v1143
      %v1400 = vadd.f32 %v680, %v1144
      %v1401 = vadd.f32 %v681, %v1145
      %v1402 = vadd.f32 %v682, %v1146
      %v1403 = vadd.f32 %v683, %v1147
      %v1404 = vadd.f32 %v684, %v1148
      %v1405 = vadd.f32 %v685, %v1149
      %v1406 = vadd.f32 %v686, %v1150
      %v1407 = vadd.f32 %v687, %v1151
      %v1408 = vadd.f32 %v688, %v1152
      %v1409 = vadd.f32 %v689, %v1153
      %v1410 = vadd.f32 %v690, %v1154
      %v1411 = vadd.f32 %v691, %v1155
      %v1412 = vadd.f32 %v692, %v1156
      %v1413 = vadd.f32 %v693, %v1157
      %v1414 = vadd.f32 %v694, %v1158
      %v1415 = vadd.f32 %v695, %v1159
      %v1416 = vadd.f32 %v696, %v1160
      %v1417 = vadd.f32 %v697, %v1161
      %v1418 = vadd.f32 %v698, %v1162
      %v1419 = vadd.f32 %v699, %v1163
      %v1420 = vadd.f32 %v700, %v1164
      %v1421 = vadd.f32 %v701, %v1165
      %v1422 = vadd.f32 %v702, %v1166
      %v1423 = vadd.f32 %v703, %v1167
      %v1424 = vadd.f32 %v704, %v1168
      %v1425 = vadd.f32 %v705, %v1169
      %v1426 = vadd.f32 %v706, %v1170
      %v1427 = vadd.f32 %v707, %v1171
      %v1428 = vadd.f32 %v708, %v1172
      %v1429 = vadd.f32 %v709, %v1173
      %v1430 = vadd.f32 %v710, %v1174
      %v1431 = vadd.f32 %v711, %v1175
      %v1432 = vadd.f32 %v712, %v1176
      %v1433 = vadd.f32 %v713, %v1177
      %v1434 = vadd.f32 %v714, %v1178
      %v1435 = vadd.f32 %v715, %v1179
      %v1436 = vadd.f32 %v716, %v1180
      %v1437 = vadd.f32 %v717, %v1181
      %v1438 = vadd.f32 %v718, %v1182
      %v1439 = vadd.f32 %v719, %v1183
      %v1440 = vadd.f32 %v720, %v1184
      %v1441 = vadd.f32 %v721, %v1185
      %v1442 = vadd.f32 %v722, %v1186
      %v1443 = vadd.f32 %v723, %v1187
      %v1444 = vadd.f32 %v724, %v1188
      %v1445 = vadd.f32 %v725, %v1189
      %v1446 = vadd.f32 %v726, %v1190
      %v1447 = vadd.f32 %v727, %v1191
      %v1448 = vadd.f32 %v728, %v1192
      %v1449 = vadd.f32 %v729, %v1193
      %v1450 = vadd.f32 %v730, %v1194
      %v1451 = vadd.f32 %v731, %v1195
      %v1452 = vadd.f32 %v732, %v1196
      %v1453 = vadd.f32 %v733, %v1197
      %v1454 = vadd.f32 %v734, %v1198
      %v1455 = vadd.f32 %v735, %v1199
      %v1456 = vadd.f32 %v736, %v1200
      %v1457 = vadd.f32 %v737, %v1201
      %v1458 = vadd.f32 %v738, %v1202
      %v1459 = vadd.f32 %v739, %v1203
      %v1460 = vadd.f32 %v740, %v1204
      %v1461 = vadd.f32 %v741, %v1205
      %v1462 = vadd.f32 %v742, %v1206
      %v1463 = vadd.f32 %v743, %v1207
      %v1464 = vadd.f32 %v744, %v1208
      %v1465 = vadd.f32 %v745, %v1209
      %v1466 = vadd.f32 %v746, %v1210
      %v1467 = vadd.f32 %v747, %v1211
      %v1468 = vadd.f32 %v748, %v1212
      %v1469 = vadd.f32 %v749, %v1213
      %v1470 = vadd.f32 %v750, %v1214
      %v1471 = vadd.f32 %v751, %v1215
      %v1472 = vadd.f32 %v752, %v1216
      %v1473 = vadd.f32 %v753, %v1217
      %v1474 = vadd.f32 %v754, %v1218
      %v1475 = vadd.f32 %v755, %v1219
      %v1476 = vadd.f32 %v756, %v1220
      %v1477 = vadd.f32 %v757, %v1221
      %v1478 = vadd.f32 %v758, %v1222
      %v1479 = vadd.f32 %v759, %v1223
      %v1480 = vadd.f32 %v760, %v1224
      %v1481 = vadd.f32 %v761, %v1225
      %v1482 = vadd.f32 %v762, %v1226
      %v1483 = vadd.f32 %v763, %v1227
      %v1484 = vadd.f32 %v764, %v1228
      %v1485 = vadd.f32 %v765, %v1229
      %v1486 = vadd.f32 %v766, %v1230
      %v1487 = vadd.f32 %v767, %v1231
      %v1488 = vadd.f32 %v768, %v1232
      %v1489 = vadd.f32 %v769, %v1233
      %v1490 = vadd.f32 %v770, %v1234
      %v1491 = vadd.f32 %v771, %v1235
      %v1492 = vadd.f32 %v772, %v1236
      %v1493 = vadd.f32 %v773, %v1237
      %v1494 = vadd.f32 %v774, %v1238
      %v1495 = vadd.f32 %v775, %v1239
      %v1496 = vadd.f32 %v776, %v1240
      %v1497 = vadd.f32 %v777, %v1241
      %v1498 = vadd.f32 %v778, %v1242
      %v1499 = vadd.f32 %v779, %v1243
      %v1500 = vadd.f32 %v780, %v1244
      %v1501 = vadd.f32 %v781, %v1245
      %v1502 = vadd.f32 %v782, %v1246
      %v1503 = vadd.f32 %v783, %v1247
      %v1504 = vadd.f32 %v784, %v1248
      %v1505 = vadd.f32 %v785, %v1249
      %v1506 = vadd.f32 %v786, %v1250
      %v1507 = vld [vmem:[%s2] sm:$0xff]
      %v1508 = vld [vmem:[%s2 + $0x8] sm:$0xff]
      %v1509 = vld [vmem:[%s2 + $0x10] sm:$0xff]
      %v1510 = vld [vmem:[%s2 + $0x18] sm:$0xff]
      %v1511 = vld [vmem:[%s2 + $0x20] sm:$0xff]
      %v1512 = vld [vmem:[%s2 + $0x28] sm:$0xff]
      %v1513 = vld [vmem:[%s2 + $0x30] sm:$0xff]
      %v1514 = vld [vmem:[%s2 + $0x38] sm:$0xff]
      %v1515 = vld [vmem:[%s2 + $0x40] sm:$0xff]
      %v1516 = vld [vmem:[%s2 + $0x48] sm:$0xff]
      %v1517 = vld [vmem:[%s2 + $0x50] sm:$0xff]
      %v1518 = vld [vmem:[%s2 + $0x58] sm:$0xff]
      %v1519 = vld [vmem:[%s2 + $0x60] sm:$0xff]
      %v1520 = vld [vmem:[%s2 + $0x68] sm:$0xff]
      %v1521 = vld [vmem:[%s2 + $0x70] sm:$0xff]
      %v1522 = vld [vmem:[%s2 + $0x78] sm:$0xff]
      %1524 = vset.pattern.permute.xlu0 0
      %1525 = vperm.xlu0 %1524, %v1507
      %v1526 = vpop.permute.xlu0 %1525
      %1529 = vset.pattern.permute.xlu0 0
      %1530 = vperm.xlu0 %1529, %v1508
      %v1531 = vpop.permute.xlu0 %1530
      %1534 = vset.pattern.permute.xlu0 0
      %1535 = vperm.xlu0 %1534, %v1509
      %v1536 = vpop.permute.xlu0 %1535
      %1539 = vset.pattern.permute.xlu0 0
      %1540 = vperm.xlu0 %1539, %v1510
      %v1541 = vpop.permute.xlu0 %1540
      %1544 = vset.pattern.permute.xlu0 0
      %1545 = vperm.xlu0 %1544, %v1511
      %v1546 = vpop.permute.xlu0 %1545
      %1549 = vset.pattern.permute.xlu0 0
      %1550 = vperm.xlu0 %1549, %v1512
      %v1551 = vpop.permute.xlu0 %1550
      %1554 = vset.pattern.permute.xlu0 0
      %1555 = vperm.xlu0 %1554, %v1513
      %v1556 = vpop.permute.xlu0 %1555
      %1559 = vset.pattern.permute.xlu0 0
      %1560 = vperm.xlu0 %1559, %v1514
      %v1561 = vpop.permute.xlu0 %1560
      %1564 = vset.pattern.permute.xlu0 0
      %1565 = vperm.xlu0 %1564, %v1515
      %v1566 = vpop.permute.xlu0 %1565
      %1569 = vset.pattern.permute.xlu0 0
      %1570 = vperm.xlu0 %1569, %v1516
      %v1571 = vpop.permute.xlu0 %1570
      %1574 = vset.pattern.permute.xlu0 0
      %1575 = vperm.xlu0 %1574, %v1517
      %v1576 = vpop.permute.xlu0 %1575
      %1579 = vset.pattern.permute.xlu0 0
      %1580 = vperm.xlu0 %1579, %v1518
      %v1581 = vpop.permute.xlu0 %1580
      %1584 = vset.pattern.permute.xlu0 0
      %1585 = vperm.xlu0 %1584, %v1519
      %v1586 = vpop.permute.xlu0 %1585
      %1589 = vset.pattern.permute.xlu0 0
      %1590 = vperm.xlu0 %1589, %v1520
      %v1591 = vpop.permute.xlu0 %1590
      %1594 = vset.pattern.permute.xlu0 0
      %1595 = vperm.xlu0 %1594, %v1521
      %v1596 = vpop.permute.xlu0 %1595
      %1599 = vset.pattern.permute.xlu0 0
      %1600 = vperm.xlu0 %1599, %v1522
      %v1601 = vpop.permute.xlu0 %1600
      %v1603 = vadd.f32 %v1251, %v1526
      %v1604 = vadd.f32 %v1252, %v1526
      %v1605 = vadd.f32 %v1253, %v1526
      %v1606 = vadd.f32 %v1254, %v1526
      %v1607 = vadd.f32 %v1255, %v1526
      %v1608 = vadd.f32 %v1256, %v1526
      %v1609 = vadd.f32 %v1257, %v1526
      %v1610 = vadd.f32 %v1258, %v1526
      %v1611 = vadd.f32 %v1259, %v1526
      %v1612 = vadd.f32 %v1260, %v1526
      %v1613 = vadd.f32 %v1261, %v1526
      %v1614 = vadd.f32 %v1262, %v1526
      %v1615 = vadd.f32 %v1263, %v1526
      %v1616 = vadd.f32 %v1264, %v1526
      %v1617 = vadd.f32 %v1265, %v1526
      %v1618 = vadd.f32 %v1266, %v1526
      %v1619 = vadd.f32 %v1267, %v1531
      %v1620 = vadd.f32 %v1268, %v1531
      %v1621 = vadd.f32 %v1269, %v1531
      %v1622 = vadd.f32 %v1270, %v1531
      %v1623 = vadd.f32 %v1271, %v1531
      %v1624 = vadd.f32 %v1272, %v1531
      %v1625 = vadd.f32 %v1273, %v1531
      %v1626 = vadd.f32 %v1274, %v1531
      %v1627 = vadd.f32 %v1275, %v1531
      %v1628 = vadd.f32 %v1276, %v1531
      %v1629 = vadd.f32 %v1277, %v1531
      %v1630 = vadd.f32 %v1278, %v1531
      %v1631 = vadd.f32 %v1279, %v1531
      %v1632 = vadd.f32 %v1280, %v1531
      %v1633 = vadd.f32 %v1281, %v1531
      %v1634 = vadd.f32 %v1282, %v1531
      %v1635 = vadd.f32 %v1283, %v1536
      %v1636 = vadd.f32 %v1284, %v1536
      %v1637 = vadd.f32 %v1285, %v1536
      %v1638 = vadd.f32 %v1286, %v1536
      %v1639 = vadd.f32 %v1287, %v1536
      %v1640 = vadd.f32 %v1288, %v1536
      %v1641 = vadd.f32 %v1289, %v1536
      %v1642 = vadd.f32 %v1290, %v1536
      %v1643 = vadd.f32 %v1291, %v1536
      %v1644 = vadd.f32 %v1292, %v1536
      %v1645 = vadd.f32 %v1293, %v1536
      %v1646 = vadd.f32 %v1294, %v1536
      %v1647 = vadd.f32 %v1295, %v1536
      %v1648 = vadd.f32 %v1296, %v1536
      %v1649 = vadd.f32 %v1297, %v1536
      %v1650 = vadd.f32 %v1298, %v1536
      %v1651 = vadd.f32 %v1299, %v1541
      %v1652 = vadd.f32 %v1300, %v1541
      %v1653 = vadd.f32 %v1301, %v1541
      %v1654 = vadd.f32 %v1302, %v1541
      %v1655 = vadd.f32 %v1303, %v1541
      %v1656 = vadd.f32 %v1304, %v1541
      %v1657 = vadd.f32 %v1305, %v1541
      %v1658 = vadd.f32 %v1306, %v1541
      %v1659 = vadd.f32 %v1307, %v1541
      %v1660 = vadd.f32 %v1308, %v1541
      %v1661 = vadd.f32 %v1309, %v1541
      %v1662 = vadd.f32 %v1310, %v1541
      %v1663 = vadd.f32 %v1311, %v1541
      %v1664 = vadd.f32 %v1312, %v1541
      %v1665 = vadd.f32 %v1313, %v1541
      %v1666 = vadd.f32 %v1314, %v1541
      %v1667 = vadd.f32 %v1315, %v1546
      %v1668 = vadd.f32 %v1316, %v1546
      %v1669 = vadd.f32 %v1317, %v1546
      %v1670 = vadd.f32 %v1318, %v1546
      %v1671 = vadd.f32 %v1319, %v1546
      %v1672 = vadd.f32 %v1320, %v1546
      %v1673 = vadd.f32 %v1321, %v1546
      %v1674 = vadd.f32 %v1322, %v1546
      %v1675 = vadd.f32 %v1323, %v1546
      %v1676 = vadd.f32 %v1324, %v1546
      %v1677 = vadd.f32 %v1325, %v1546
      %v1678 = vadd.f32 %v1326, %v1546
      %v1679 = vadd.f32 %v1327, %v1546
      %v1680 = vadd.f32 %v1328, %v1546
      %v1681 = vadd.f32 %v1329, %v1546
      %v1682 = vadd.f32 %v1330, %v1546
      %v1683 = vadd.f32 %v1331, %v1551
      %v1684 = vadd.f32 %v1332, %v1551
      %v1685 = vadd.f32 %v1333, %v1551
      %v1686 = vadd.f32 %v1334, %v1551
      %v1687 = vadd.f32 %v1335, %v1551
      %v1688 = vadd.f32 %v1336, %v1551
      %v1689 = vadd.f32 %v1337, %v1551
      %v1690 = vadd.f32 %v1338, %v1551
      %v1691 = vadd.f32 %v1339, %v1551
      %v1692 = vadd.f32 %v1340, %v1551
      %v1693 = vadd.f32 %v1341, %v1551
      %v1694 = vadd.f32 %v1342, %v1551
      %v1695 = vadd.f32 %v1343, %v1551
      %v1696 = vadd.f32 %v1344, %v1551
      %v1697 = vadd.f32 %v1345, %v1551
      %v1698 = vadd.f32 %v1346, %v1551
      %v1699 = vadd.f32 %v1347, %v1556
      %v1700 = vadd.f32 %v1348, %v1556
      %v1701 = vadd.f32 %v1349, %v1556
      %v1702 = vadd.f32 %v1350, %v1556
      %v1703 = vadd.f32 %v1351, %v1556
      %v1704 = vadd.f32 %v1352, %v1556
      %v1705 = vadd.f32 %v1353, %v1556
      %v1706 = vadd.f32 %v1354, %v1556
      %v1707 = vadd.f32 %v1355, %v1556
      %v1708 = vadd.f32 %v1356, %v1556
      %v1709 = vadd.f32 %v1357, %v1556
      %v1710 = vadd.f32 %v1358, %v1556
      %v1711 = vadd.f32 %v1359, %v1556
      %v1712 = vadd.f32 %v1360, %v1556
      %v1713 = vadd.f32 %v1361, %v1556
      %v1714 = vadd.f32 %v1362, %v1556
      %v1715 = vadd.f32 %v1363, %v1561
      %v1716 = vadd.f32 %v1364, %v1561
      %v1717 = vadd.f32 %v1365, %v1561
      %v1718 = vadd.f32 %v1366, %v1561
      %v1719 = vadd.f32 %v1367, %v1561
      %v1720 = vadd.f32 %v1368, %v1561
      %v1721 = vadd.f32 %v1369, %v1561
      %v1722 = vadd.f32 %v1370, %v1561
      %v1723 = vadd.f32 %v1371, %v1561
      %v1724 = vadd.f32 %v1372, %v1561
      %v1725 = vadd.f32 %v1373, %v1561
      %v1726 = vadd.f32 %v1374, %v1561
      %v1727 = vadd.f32 %v1375, %v1561
      %v1728 = vadd.f32 %v1376, %v1561
      %v1729 = vadd.f32 %v1377, %v1561
      %v1730 = vadd.f32 %v1378, %v1561
      %v1731 = vadd.f32 %v1379, %v1566
      %v1732 = vadd.f32 %v1380, %v1566
      %v1733 = vadd.f32 %v1381, %v1566
      %v1734 = vadd.f32 %v1382, %v1566
      %v1735 = vadd.f32 %v1383, %v1566
      %v1736 = vadd.f32 %v1384, %v1566
      %v1737 = vadd.f32 %v1385, %v1566
      %v1738 = vadd.f32 %v1386, %v1566
      %v1739 = vadd.f32 %v1387, %v1566
      %v1740 = vadd.f32 %v1388, %v1566
      %v1741 = vadd.f32 %v1389, %v1566
      %v1742 = vadd.f32 %v1390, %v1566
      %v1743 = vadd.f32 %v1391, %v1566
      %v1744 = vadd.f32 %v1392, %v1566
      %v1745 = vadd.f32 %v1393, %v1566
      %v1746 = vadd.f32 %v1394, %v1566
      %v1747 = vadd.f32 %v1395, %v1571
      %v1748 = vadd.f32 %v1396, %v1571
      %v1749 = vadd.f32 %v1397, %v1571
      %v1750 = vadd.f32 %v1398, %v1571
      %v1751 = vadd.f32 %v1399, %v1571
      %v1752 = vadd.f32 %v1400, %v1571
      %v1753 = vadd.f32 %v1401, %v1571
      %v1754 = vadd.f32 %v1402, %v1571
      %v1755 = vadd.f32 %v1403, %v1571
      %v1756 = vadd.f32 %v1404, %v1571
      %v1757 = vadd.f32 %v1405, %v1571
      %v1758 = vadd.f32 %v1406, %v1571
      %v1759 = vadd.f32 %v1407, %v1571
      %v1760 = vadd.f32 %v1408, %v1571
      %v1761 = vadd.f32 %v1409, %v1571
      %v1762 = vadd.f32 %v1410, %v1571
      %v1763 = vadd.f32 %v1411, %v1576
      %v1764 = vadd.f32 %v1412, %v1576
      %v1765 = vadd.f32 %v1413, %v1576
      %v1766 = vadd.f32 %v1414, %v1576
      %v1767 = vadd.f32 %v1415, %v1576
      %v1768 = vadd.f32 %v1416, %v1576
      %v1769 = vadd.f32 %v1417, %v1576
      %v1770 = vadd.f32 %v1418, %v1576
      %v1771 = vadd.f32 %v1419, %v1576
      %v1772 = vadd.f32 %v1420, %v1576
      %v1773 = vadd.f32 %v1421, %v1576
      %v1774 = vadd.f32 %v1422, %v1576
      %v1775 = vadd.f32 %v1423, %v1576
      %v1776 = vadd.f32 %v1424, %v1576
      %v1777 = vadd.f32 %v1425, %v1576
      %v1778 = vadd.f32 %v1426, %v1576
      %v1779 = vadd.f32 %v1427, %v1581
      %v1780 = vadd.f32 %v1428, %v1581
      %v1781 = vadd.f32 %v1429, %v1581
      %v1782 = vadd.f32 %v1430, %v1581
      %v1783 = vadd.f32 %v1431, %v1581
      %v1784 = vadd.f32 %v1432, %v1581
      %v1785 = vadd.f32 %v1433, %v1581
      %v1786 = vadd.f32 %v1434, %v1581
      %v1787 = vadd.f32 %v1435, %v1581
      %v1788 = vadd.f32 %v1436, %v1581
      %v1789 = vadd.f32 %v1437, %v1581
      %v1790 = vadd.f32 %v1438, %v1581
      %v1791 = vadd.f32 %v1439, %v1581
      %v1792 = vadd.f32 %v1440, %v1581
      %v1793 = vadd.f32 %v1441, %v1581
      %v1794 = vadd.f32 %v1442, %v1581
      %v1795 = vadd.f32 %v1443, %v1586
      %v1796 = vadd.f32 %v1444, %v1586
      %v1797 = vadd.f32 %v1445, %v1586
      %v1798 = vadd.f32 %v1446, %v1586
      %v1799 = vadd.f32 %v1447, %v1586
      %v1800 = vadd.f32 %v1448, %v1586
      %v1801 = vadd.f32 %v1449, %v1586
      %v1802 = vadd.f32 %v1450, %v1586
      %v1803 = vadd.f32 %v1451, %v1586
      %v1804 = vadd.f32 %v1452, %v1586
      %v1805 = vadd.f32 %v1453, %v1586
      %v1806 = vadd.f32 %v1454, %v1586
      %v1807 = vadd.f32 %v1455, %v1586
      %v1808 = vadd.f32 %v1456, %v1586
      %v1809 = vadd.f32 %v1457, %v1586
      %v1810 = vadd.f32 %v1458, %v1586
      %v1811 = vadd.f32 %v1459, %v1591
      %v1812 = vadd.f32 %v1460, %v1591
      %v1813 = vadd.f32 %v1461, %v1591
      %v1814 = vadd.f32 %v1462, %v1591
      %v1815 = vadd.f32 %v1463, %v1591
      %v1816 = vadd.f32 %v1464, %v1591
      %v1817 = vadd.f32 %v1465, %v1591
      %v1818 = vadd.f32 %v1466, %v1591
      %v1819 = vadd.f32 %v1467, %v1591
      %v1820 = vadd.f32 %v1468, %v1591
      %v1821 = vadd.f32 %v1469, %v1591
      %v1822 = vadd.f32 %v1470, %v1591
      %v1823 = vadd.f32 %v1471, %v1591
      %v1824 = vadd.f32 %v1472, %v1591
      %v1825 = vadd.f32 %v1473, %v1591
      %v1826 = vadd.f32 %v1474, %v1591
      %v1827 = vadd.f32 %v1475, %v1596
      %v1828 = vadd.f32 %v1476, %v1596
      %v1829 = vadd.f32 %v1477, %v1596
      %v1830 = vadd.f32 %v1478, %v1596
      %v1831 = vadd.f32 %v1479, %v1596
      %v1832 = vadd.f32 %v1480, %v1596
      %v1833 = vadd.f32 %v1481, %v1596
      %v1834 = vadd.f32 %v1482, %v1596
      %v1835 = vadd.f32 %v1483, %v1596
      %v1836 = vadd.f32 %v1484, %v1596
      %v1837 = vadd.f32 %v1485, %v1596
      %v1838 = vadd.f32 %v1486, %v1596
      %v1839 = vadd.f32 %v1487, %v1596
      %v1840 = vadd.f32 %v1488, %v1596
      %v1841 = vadd.f32 %v1489, %v1596
      %v1842 = vadd.f32 %v1490, %v1596
      %v1843 = vadd.f32 %v1491, %v1601
      %v1844 = vadd.f32 %v1492, %v1601
      %v1845 = vadd.f32 %v1493, %v1601
      %v1846 = vadd.f32 %v1494, %v1601
      %v1847 = vadd.f32 %v1495, %v1601
      %v1848 = vadd.f32 %v1496, %v1601
      %v1849 = vadd.f32 %v1497, %v1601
      %v1850 = vadd.f32 %v1498, %v1601
      %v1851 = vadd.f32 %v1499, %v1601
      %v1852 = vadd.f32 %v1500, %v1601
      %v1853 = vadd.f32 %v1501, %v1601
      %v1854 = vadd.f32 %v1502, %v1601
      %v1855 = vadd.f32 %v1503, %v1601
      %v1856 = vadd.f32 %v1504, %v1601
      %v1857 = vadd.f32 %v1505, %v1601
      %v1858 = vadd.f32 %v1506, %v1601
      %v1859 = vmax.f32 %v1603, 0.0
      %v1860 = vmax.f32 %v1604, 0.0
      %v1861 = vmax.f32 %v1605, 0.0
      %v1862 = vmax.f32 %v1606, 0.0
      %v1863 = vmax.f32 %v1607, 0.0
      %v1864 = vmax.f32 %v1608, 0.0
      %v1865 = vmax.f32 %v1609, 0.0
      %v1866 = vmax.f32 %v1610, 0.0
      %v1867 = vmax.f32 %v1611, 0.0
      %v1868 = vmax.f32 %v1612, 0.0
      %v1869 = vmax.f32 %v1613, 0.0
      %v1870 = vmax.f32 %v1614, 0.0
      %v1871 = vmax.f32 %v1615, 0.0
      %v1872 = vmax.f32 %v1616, 0.0
      %v1873 = vmax.f32 %v1617, 0.0
      %v1874 = vmax.f32 %v1618, 0.0
      %v1875 = vmax.f32 %v1619, 0.0
      %v1876 = vmax.f32 %v1620, 0.0
      %v1877 = vmax.f32 %v1621, 0.0
      %v1878 = vmax.f32 %v1622, 0.0
      %v1879 = vmax.f32 %v1623, 0.0
      %v1880 = vmax.f32 %v1624, 0.0
      %v1881 = vmax.f32 %v1625, 0.0
      %v1882 = vmax.f32 %v1626, 0.0
      %v1883 = vmax.f32 %v1627, 0.0
      %v1884 = vmax.f32 %v1628, 0.0
      %v1885 = vmax.f32 %v1629, 0.0
      %v1886 = vmax.f32 %v1630, 0.0
      %v1887 = vmax.f32 %v1631, 0.0
      %v1888 = vmax.f32 %v1632, 0.0
      %v1889 = vmax.f32 %v1633, 0.0
      %v1890 = vmax.f32 %v1634, 0.0
      %v1891 = vmax.f32 %v1635, 0.0
      %v1892 = vmax.f32 %v1636, 0.0
      %v1893 = vmax.f32 %v1637, 0.0
      %v1894 = vmax.f32 %v1638, 0.0
      %v1895 = vmax.f32 %v1639, 0.0
      %v1896 = vmax.f32 %v1640, 0.0
      %v1897 = vmax.f32 %v1641, 0.0
      %v1898 = vmax.f32 %v1642, 0.0
      %v1899 = vmax.f32 %v1643, 0.0
      %v1900 = vmax.f32 %v1644, 0.0
      %v1901 = vmax.f32 %v1645, 0.0
      %v1902 = vmax.f32 %v1646, 0.0
      %v1903 = vmax.f32 %v1647, 0.0
      %v1904 = vmax.f32 %v1648, 0.0
      %v1905 = vmax.f32 %v1649, 0.0
      %v1906 = vmax.f32 %v1650, 0.0
      %v1907 = vmax.f32 %v1651, 0.0
      %v1908 = vmax.f32 %v1652, 0.0
      %v1909 = vmax.f32 %v1653, 0.0
      %v1910 = vmax.f32 %v1654, 0.0
      %v1911 = vmax.f32 %v1655, 0.0
      %v1912 = vmax.f32 %v1656, 0.0
      %v1913 = vmax.f32 %v1657, 0.0
      %v1914 = vmax.f32 %v1658, 0.0
      %v1915 = vmax.f32 %v1659, 0.0
      %v1916 = vmax.f32 %v1660, 0.0
      %v1917 = vmax.f32 %v1661, 0.0
      %v1918 = vmax.f32 %v1662, 0.0
      %v1919 = vmax.f32 %v1663, 0.0
      %v1920 = vmax.f32 %v1664, 0.0
      %v1921 = vmax.f32 %v1665, 0.0
      %v1922 = vmax.f32 %v1666, 0.0
      %v1923 = vmax.f32 %v1667, 0.0
      %v1924 = vmax.f32 %v1668, 0.0
      %v1925 = vmax.f32 %v1669, 0.0
      %v1926 = vmax.f32 %v1670, 0.0
      %v1927 = vmax.f32 %v1671, 0.0
      %v1928 = vmax.f32 %v1672, 0.0
      %v1929 = vmax.f32 %v1673, 0.0
      %v1930 = vmax.f32 %v1674, 0.0
      %v1931 = vmax.f32 %v1675, 0.0
      %v1932 = vmax.f32 %v1676, 0.0
      %v1933 = vmax.f32 %v1677, 0.0
      %v1934 = vmax.f32 %v1678, 0.0
      %v1935 = vmax.f32 %v1679, 0.0
      %v1936 = vmax.f32 %v1680, 0.0
      %v1937 = vmax.f32 %v1681, 0.0
      %v1938 = vmax.f32 %v1682, 0.0
      %v1939 = vmax.f32 %v1683, 0.0
      %v1940 = vmax.f32 %v1684, 0.0
      %v1941 = vmax.f32 %v1685, 0.0
      %v1942 = vmax.f32 %v1686, 0.0
      %v1943 = vmax.f32 %v1687, 0.0
      %v1944 = vmax.f32 %v1688, 0.0
      %v1945 = vmax.f32 %v1689, 0.0
      %v1946 = vmax.f32 %v1690, 0.0
      %v1947 = vmax.f32 %v1691, 0.0
      %v1948 = vmax.f32 %v1692, 0.0
      %v1949 = vmax.f32 %v1693, 0.0
      %v1950 = vmax.f32 %v1694, 0.0
      %v1951 = vmax.f32 %v1695, 0.0
      %v1952 = vmax.f32 %v1696, 0.0
      %v1953 = vmax.f32 %v1697, 0.0
      %v1954 = vmax.f32 %v1698, 0.0
      %v1955 = vmax.f32 %v1699, 0.0
      %v1956 = vmax.f32 %v1700, 0.0
      %v1957 = vmax.f32 %v1701, 0.0
      %v1958 = vmax.f32 %v1702, 0.0
      %v1959 = vmax.f32 %v1703, 0.0
      %v1960 = vmax.f32 %v1704, 0.0
      %v1961 = vmax.f32 %v1705, 0.0
      %v1962 = vmax.f32 %v1706, 0.0
      %v1963 = vmax.f32 %v1707, 0.0
      %v1964 = vmax.f32 %v1708, 0.0
      %v1965 = vmax.f32 %v1709, 0.0
      %v1966 = vmax.f32 %v1710, 0.0
      %v1967 = vmax.f32 %v1711, 0.0
      %v1968 = vmax.f32 %v1712, 0.0
      %v1969 = vmax.f32 %v1713, 0.0
      %v1970 = vmax.f32 %v1714, 0.0
      %v1971 = vmax.f32 %v1715, 0.0
      %v1972 = vmax.f32 %v1716, 0.0
      %v1973 = vmax.f32 %v1717, 0.0
      %v1974 = vmax.f32 %v1718, 0.0
      %v1975 = vmax.f32 %v1719, 0.0
      %v1976 = vmax.f32 %v1720, 0.0
      %v1977 = vmax.f32 %v1721, 0.0
      %v1978 = vmax.f32 %v1722, 0.0
      %v1979 = vmax.f32 %v1723, 0.0
      %v1980 = vmax.f32 %v1724, 0.0
      %v1981 = vmax.f32 %v1725, 0.0
      %v1982 = vmax.f32 %v1726, 0.0
      %v1983 = vmax.f32 %v1727, 0.0
      %v1984 = vmax.f32 %v1728, 0.0
      %v1985 = vmax.f32 %v1729, 0.0
      %v1986 = vmax.f32 %v1730, 0.0
      %v1987 = vmax.f32 %v1731, 0.0
      %v1988 = vmax.f32 %v1732, 0.0
      %v1989 = vmax.f32 %v1733, 0.0
      %v1990 = vmax.f32 %v1734, 0.0
      %v1991 = vmax.f32 %v1735, 0.0
      %v1992 = vmax.f32 %v1736, 0.0
      %v1993 = vmax.f32 %v1737, 0.0
      %v1994 = vmax.f32 %v1738, 0.0
      %v1995 = vmax.f32 %v1739, 0.0
      %v1996 = vmax.f32 %v1740, 0.0
      %v1997 = vmax.f32 %v1741, 0.0
      %v1998 = vmax.f32 %v1742, 0.0
      %v1999 = vmax.f32 %v1743, 0.0
      %v2000 = vmax.f32 %v1744, 0.0
      %v2001 = vmax.f32 %v1745, 0.0
      %v2002 = vmax.f32 %v1746, 0.0
      %v2003 = vmax.f32 %v1747, 0.0
      %v2004 = vmax.f32 %v1748, 0.0
      %v2005 = vmax.f32 %v1749, 0.0
      %v2006 = vmax.f32 %v1750, 0.0
      %v2007 = vmax.f32 %v1751, 0.0
      %v2008 = vmax.f32 %v1752, 0.0
      %v2009 = vmax.f32 %v1753, 0.0
      %v2010 = vmax.f32 %v1754, 0.0
      %v2011 = vmax.f32 %v1755, 0.0
      %v2012 = vmax.f32 %v1756, 0.0
      %v2013 = vmax.f32 %v1757, 0.0
      %v2014 = vmax.f32 %v1758, 0.0
      %v2015 = vmax.f32 %v1759, 0.0
      %v2016 = vmax.f32 %v1760, 0.0
      %v2017 = vmax.f32 %v1761, 0.0
      %v2018 = vmax.f32 %v1762, 0.0
      %v2019 = vmax.f32 %v1763, 0.0
      %v2020 = vmax.f32 %v1764, 0.0
      %v2021 = vmax.f32 %v1765, 0.0
      %v2022 = vmax.f32 %v1766, 0.0
      %v2023 = vmax.f32 %v1767, 0.0
      %v2024 = vmax.f32 %v1768, 0.0
      %v2025 = vmax.f32 %v1769, 0.0
      %v2026 = vmax.f32 %v1770, 0.0
      %v2027 = vmax.f32 %v1771, 0.0
      %v2028 = vmax.f32 %v1772, 0.0
      %v2029 = vmax.f32 %v1773, 0.0
      %v2030 = vmax.f32 %v1774, 0.0
      %v2031 = vmax.f32 %v1775, 0.0
      %v2032 = vmax.f32 %v1776, 0.0
      %v2033 = vmax.f32 %v1777, 0.0
      %v2034 = vmax.f32 %v1778, 0.0
      %v2035 = vmax.f32 %v1779, 0.0
      %v2036 = vmax.f32 %v1780, 0.0
      %v2037 = vmax.f32 %v1781, 0.0
      %v2038 = vmax.f32 %v1782, 0.0
      %v2039 = vmax.f32 %v1783, 0.0
      %v2040 = vmax.f32 %v1784, 0.0
      %v2041 = vmax.f32 %v1785, 0.0
      %v2042 = vmax.f32 %v1786, 0.0
      %v2043 = vmax.f32 %v1787, 0.0
      %v2044 = vmax.f32 %v1788, 0.0
      %v2045 = vmax.f32 %v1789, 0.0
      %v2046 = vmax.f32 %v1790, 0.0
      %v2047 = vmax.f32 %v1791, 0.0
      %v2048 = vmax.f32 %v1792, 0.0
      %v2049 = vmax.f32 %v1793, 0.0
      %v2050 = vmax.f32 %v1794, 0.0
      %v2051 = vmax.f32 %v1795, 0.0
      %v2052 = vmax.f32 %v1796, 0.0
      %v2053 = vmax.f32 %v1797, 0.0
      %v2054 = vmax.f32 %v1798, 0.0
      %v2055 = vmax.f32 %v1799, 0.0
      %v2056 = vmax.f32 %v1800, 0.0
      %v2057 = vmax.f32 %v1801, 0.0
      %v2058 = vmax.f32 %v1802, 0.0
      %v2059 = vmax.f32 %v1803, 0.0
      %v2060 = vmax.f32 %v1804, 0.0
      %v2061 = vmax.f32 %v1805, 0.0
      %v2062 = vmax.f32 %v1806, 0.0
      %v2063 = vmax.f32 %v1807, 0.0
      %v2064 = vmax.f32 %v1808, 0.0
      %v2065 = vmax.f32 %v1809, 0.0
      %v2066 = vmax.f32 %v1810, 0.0
      %v2067 = vmax.f32 %v1811, 0.0
      %v2068 = vmax.f32 %v1812, 0.0
      %v2069 = vmax.f32 %v1813, 0.0
      %v2070 = vmax.f32 %v1814, 0.0
      %v2071 = vmax.f32 %v1815, 0.0
      %v2072 = vmax.f32 %v1816, 0.0
      %v2073 = vmax.f32 %v1817, 0.0
      %v2074 = vmax.f32 %v1818, 0.0
      %v2075 = vmax.f32 %v1819, 0.0
      %v2076 = vmax.f32 %v1820, 0.0
      %v2077 = vmax.f32 %v1821, 0.0
      %v2078 = vmax.f32 %v1822, 0.0
      %v2079 = vmax.f32 %v1823, 0.0
      %v2080 = vmax.f32 %v1824, 0.0
      %v2081 = vmax.f32 %v1825, 0.0
      %v2082 = vmax.f32 %v1826, 0.0
      %v2083 = vmax.f32 %v1827, 0.0
      %v2084 = vmax.f32 %v1828, 0.0
      %v2085 = vmax.f32 %v1829, 0.0
      %v2086 = vmax.f32 %v1830, 0.0
      %v2087 = vmax.f32 %v1831, 0.0
      %v2088 = vmax.f32 %v1832, 0.0
      %v2089 = vmax.f32 %v1833, 0.0
      %v2090 = vmax.f32 %v1834, 0.0
      %v2091 = vmax.f32 %v1835, 0.0
      %v2092 = vmax.f32 %v1836, 0.0
      %v2093 = vmax.f32 %v1837, 0.0
      %v2094 = vmax.f32 %v1838, 0.0
      %v2095 = vmax.f32 %v1839, 0.0
      %v2096 = vmax.f32 %v1840, 0.0
      %v2097 = vmax.f32 %v1841, 0.0
      %v2098 = vmax.f32 %v1842, 0.0
      %v2099 = vmax.f32 %v1843, 0.0
      %v2100 = vmax.f32 %v1844, 0.0
      %v2101 = vmax.f32 %v1845, 0.0
      %v2102 = vmax.f32 %v1846, 0.0
      %v2103 = vmax.f32 %v1847, 0.0
      %v2104 = vmax.f32 %v1848, 0.0
      %v2105 = vmax.f32 %v1849, 0.0
      %v2106 = vmax.f32 %v1850, 0.0
      %v2107 = vmax.f32 %v1851, 0.0
      %v2108 = vmax.f32 %v1852, 0.0
      %v2109 = vmax.f32 %v1853, 0.0
      %v2110 = vmax.f32 %v1854, 0.0
      %v2111 = vmax.f32 %v1855, 0.0
      %v2112 = vmax.f32 %v1856, 0.0
      %v2113 = vmax.f32 %v1857, 0.0
      %v2114 = vmax.f32 %v1858, 0.0
      %v2115 = vld [vmem:[%s3] sm:$0xf]
      %v2116 = vld [vmem:[%s3 + $0x4] sm:$0xf]
      %v2117 = vld [vmem:[%s3 + $0x8] sm:$0xf]
      %v2118 = vld [vmem:[%s3 + $0xc] sm:$0xf]
      %v2119 = vld [vmem:[%s3 + $0x10] sm:$0xf]
      %v2120 = vld [vmem:[%s3 + $0x14] sm:$0xf]
      %v2121 = vld [vmem:[%s3 + $0x18] sm:$0xf]
      %v2122 = vld [vmem:[%s3 + $0x1c] sm:$0xf]
      %v2123 = vpack.c.bf16 %v1875, %v1859
      %v2124 = vpack.c.bf16 %v1876, %v1860
      %v2125 = vpack.c.bf16 %v1877, %v1861
      %v2126 = vpack.c.bf16 %v1878, %v1862
      %v2127 = vpack.c.bf16 %v1879, %v1863
      %v2128 = vpack.c.bf16 %v1880, %v1864
      %v2129 = vpack.c.bf16 %v1881, %v1865
      %v2130 = vpack.c.bf16 %v1882, %v1866
      %v2131 = vpack.c.bf16 %v1883, %v1867
      %v2132 = vpack.c.bf16 %v1884, %v1868
      %v2133 = vpack.c.bf16 %v1885, %v1869
      %v2134 = vpack.c.bf16 %v1886, %v1870
      %v2135 = vpack.c.bf16 %v1887, %v1871
      %v2136 = vpack.c.bf16 %v1888, %v1872
      %v2137 = vpack.c.bf16 %v1889, %v1873
      %v2138 = vpack.c.bf16 %v1890, %v1874
      %v2139 = vpack.c.bf16 %v1907, %v1891
      %v2140 = vpack.c.bf16 %v1908, %v1892
      %v2141 = vpack.c.bf16 %v1909, %v1893
      %v2142 = vpack.c.bf16 %v1910, %v1894
      %v2143 = vpack.c.bf16 %v1911, %v1895
      %v2144 = vpack.c.bf16 %v1912, %v1896
      %v2145 = vpack.c.bf16 %v1913, %v1897
      %v2146 = vpack.c.bf16 %v1914, %v1898
      %v2147 = vpack.c.bf16 %v1915, %v1899
      %v2148 = vpack.c.bf16 %v1916, %v1900
      %v2149 = vpack.c.bf16 %v1917, %v1901
      %v2150 = vpack.c.bf16 %v1918, %v1902
      %v2151 = vpack.c.bf16 %v1919, %v1903
      %v2152 = vpack.c.bf16 %v1920, %v1904
      %v2153 = vpack.c.bf16 %v1921, %v1905
      %v2154 = vpack.c.bf16 %v1922, %v1906
      %v2155 = vpack.c.bf16 %v1939, %v1923
      %v2156 = vpack.c.bf16 %v1940, %v1924
      %v2157 = vpack.c.bf16 %v1941, %v1925
      %v2158 = vpack.c.bf16 %v1942, %v1926
      %v2159 = vpack.c.bf16 %v1943, %v1927
      %v2160 = vpack.c.bf16 %v1944, %v1928
      %v2161 = vpack.c.bf16 %v1945, %v1929
      %v2162 = vpack.c.bf16 %v1946, %v1930
      %v2163 = vpack.c.bf16 %v1947, %v1931
      %v2164 = vpack.c.bf16 %v1948, %v1932
      %v2165 = vpack.c.bf16 %v1949, %v1933
      %v2166 = vpack.c.bf16 %v1950, %v1934
      %v2167 = vpack.c.bf16 %v1951, %v1935
      %v2168 = vpack.c.bf16 %v1952, %v1936
      %v2169 = vpack.c.bf16 %v1953, %v1937
      %v2170 = vpack.c.bf16 %v1954, %v1938
      %v2171 = vpack.c.bf16 %v1971, %v1955
      %v2172 = vpack.c.bf16 %v1972, %v1956
      %v2173 = vpack.c.bf16 %v1973, %v1957
      %v2174 = vpack.c.bf16 %v1974, %v1958
      %v2175 = vpack.c.bf16 %v1975, %v1959
      %v2176 = vpack.c.bf16 %v1976, %v1960
      %v2177 = vpack.c.bf16 %v1977, %v1961
      %v2178 = vpack.c.bf16 %v1978, %v1962
      %v2179 = vpack.c.bf16 %v1979, %v1963
      %v2180 = vpack.c.bf16 %v1980, %v1964
      %v2181 = vpack.c.bf16 %v1981, %v1965
      %v2182 = vpack.c.bf16 %v1982, %v1966
      %v2183 = vpack.c.bf16 %v1983, %v1967
      %v2184 = vpack.c.bf16 %v1984, %v1968
      %v2185 = vpack.c.bf16 %v1985, %v1969
      %v2186 = vpack.c.bf16 %v1986, %v1970
      %v2187 = vpack.c.bf16 %v2003, %v1987
      %v2188 = vpack.c.bf16 %v2004, %v1988
      %v2189 = vpack.c.bf16 %v2005, %v1989
      %v2190 = vpack.c.bf16 %v2006, %v1990
      %v2191 = vpack.c.bf16 %v2007, %v1991
      %v2192 = vpack.c.bf16 %v2008, %v1992
      %v2193 = vpack.c.bf16 %v2009, %v1993
      %v2194 = vpack.c.bf16 %v2010, %v1994
      %v2195 = vpack.c.bf16 %v2011, %v1995
      %v2196 = vpack.c.bf16 %v2012, %v1996
      %v2197 = vpack.c.bf16 %v2013, %v1997
      %v2198 = vpack.c.bf16 %v2014, %v1998
      %v2199 = vpack.c.bf16 %v2015, %v1999
      %v2200 = vpack.c.bf16 %v2016, %v2000
      %v2201 = vpack.c.bf16 %v2017, %v2001
      %v2202 = vpack.c.bf16 %v2018, %v2002
      %v2203 = vpack.c.bf16 %v2035, %v2019
      %v2204 = vpack.c.bf16 %v2036, %v2020
      %v2205 = vpack.c.bf16 %v2037, %v2021
      %v2206 = vpack.c.bf16 %v2038, %v2022
      %v2207 = vpack.c.bf16 %v2039, %v2023
      %v2208 = vpack.c.bf16 %v2040, %v2024
      %v2209 = vpack.c.bf16 %v2041, %v2025
      %v2210 = vpack.c.bf16 %v2042, %v2026
      %v2211 = vpack.c.bf16 %v2043, %v2027
      %v2212 = vpack.c.bf16 %v2044, %v2028
      %v2213 = vpack.c.bf16 %v2045, %v2029
      %v2214 = vpack.c.bf16 %v2046, %v2030
      %v2215 = vpack.c.bf16 %v2047, %v2031
      %v2216 = vpack.c.bf16 %v2048, %v2032
      %v2217 = vpack.c.bf16 %v2049, %v2033
      %v2218 = vpack.c.bf16 %v2050, %v2034
      %v2219 = vpack.c.bf16 %v2067, %v2051
      %v2220 = vpack.c.bf16 %v2068, %v2052
      %v2221 = vpack.c.bf16 %v2069, %v2053
      %v2222 = vpack.c.bf16 %v2070, %v2054
      %v2223 = vpack.c.bf16 %v2071, %v2055
      %v2224 = vpack.c.bf16 %v2072, %v2056
      %v2225 = vpack.c.bf16 %v2073, %v2057
      %v2226 = vpack.c.bf16 %v2074, %v2058
      %v2227 = vpack.c.bf16 %v2075, %v2059
      %v2228 = vpack.c.bf16 %v2076, %v2060
      %v2229 = vpack.c.bf16 %v2077, %v2061
      %v2230 = vpack.c.bf16 %v2078, %v2062
      %v2231 = vpack.c.bf16 %v2079, %v2063
      %v2232 = vpack.c.bf16 %v2080, %v2064
      %v2233 = vpack.c.bf16 %v2081, %v2065
      %v2234 = vpack.c.bf16 %v2082, %v2066
      %v2235 = vpack.c.bf16 %v2099, %v2083
      %v2236 = vpack.c.bf16 %v2100, %v2084
      %v2237 = vpack.c.bf16 %v2101, %v2085
      %v2238 = vpack.c.bf16 %v2102, %v2086
      %v2239 = vpack.c.bf16 %v2103, %v2087
      %v2240 = vpack.c.bf16 %v2104, %v2088
      %v2241 = vpack.c.bf16 %v2105, %v2089
      %v2242 = vpack.c.bf16 %v2106, %v2090
      %v2243 = vpack.c.bf16 %v2107, %v2091
      %v2244 = vpack.c.bf16 %v2108, %v2092
      %v2245 = vpack.c.bf16 %v2109, %v2093
      %v2246 = vpack.c.bf16 %v2110, %v2094
      %v2247 = vpack.c.bf16 %v2111, %v2095
      %v2248 = vpack.c.bf16 %v2112, %v2096
      %v2249 = vpack.c.bf16 %v2113, %v2097
      %v2250 = vpack.c.bf16 %v2114, %v2098
      %v2251 = vld [vmem:[%s4] sm:$0xff]
      %v2252 = vld [vmem:[%s4 + $0x8] sm:$0xff]
      %v2253 = vld [vmem:[%s4 + $0x10] sm:$0xff]
      %v2254 = vld [vmem:[%s4 + $0x18] sm:$0xff]
      %v2255 = vld [vmem:[%s4 + $0x20] sm:$0xff]
      %v2256 = vld [vmem:[%s4 + $0x28] sm:$0xff]
      %v2257 = vld [vmem:[%s4 + $0x30] sm:$0xff]
      %v2258 = vld [vmem:[%s4 + $0x38] sm:$0xff]
      %2260 = vset.pattern.permute.xlu0 0
      %2261 = vperm.xlu0 %2260, %v2251
      %v2262 = vpop.permute.xlu0 %2261
      %2265 = vset.pattern.permute.xlu0 0
      %2266 = vperm.xlu0 %2265, %v2252
      %v2267 = vpop.permute.xlu0 %2266
      %2270 = vset.pattern.permute.xlu0 0
      %2271 = vperm.xlu0 %2270, %v2253
      %v2272 = vpop.permute.xlu0 %2271
      %2275 = vset.pattern.permute.xlu0 0
      %2276 = vperm.xlu0 %2275, %v2254
      %v2277 = vpop.permute.xlu0 %2276
      %2280 = vset.pattern.permute.xlu0 0
      %2281 = vperm.xlu0 %2280, %v2255
      %v2282 = vpop.permute.xlu0 %2281
      %2285 = vset.pattern.permute.xlu0 0
      %2286 = vperm.xlu0 %2285, %v2256
      %v2287 = vpop.permute.xlu0 %2286
      %2290 = vset.pattern.permute.xlu0 0
      %2291 = vperm.xlu0 %2290, %v2257
      %v2292 = vpop.permute.xlu0 %2291
      %2295 = vset.pattern.permute.xlu0 0
      %2296 = vperm.xlu0 %2295, %v2258
      %v2297 = vpop.permute.xlu0 %2296
      %v2307 = vunpack.c.l.b16 %v2115
      %v2308 = vunpack.c.l.b16 %v2116
      %v2309 = vunpack.c.l.b16 %v2117
      %v2310 = vunpack.c.l.b16 %v2118
      %v2311 = vunpack.c.l.b16 %v2119
      %v2312 = vunpack.c.l.b16 %v2120
      %v2313 = vunpack.c.l.b16 %v2121
      %v2314 = vunpack.c.l.b16 %v2122
      %v2315 = vpack.c.b16 %v2308, %v2307
      %v2316 = vpack.c.b16 %v2310, %v2309
      %v2317 = vpack.c.b16 %v2312, %v2311
      %v2318 = vpack.c.b16 %v2314, %v2313
      %2323 = vmatprep.subr.bf16.mxu0 %v2124
      %2324 = vmatpush1.bf16.msra.mxu0 %v2123
      %2325 = vmatprep.subr.bf16.mxu0 %v2140
      %2326 = vmatpush1.bf16.msra.mxu0 %v2139
      %2327 = vmatprep.subr.bf16.mxu0 %v2156
      %2328 = vmatpush1.bf16.msra.mxu0 %v2155
      %2329 = vmatprep.subr.bf16.mxu0 %v2172
      %2330 = vmatpush1.bf16.msra.mxu0 %v2171
      %2331 = vmatprep.subr.bf16.mxu0 %v2188
      %2332 = vmatpush1.bf16.msra.mxu0 %v2187
      %2333 = vmatprep.subr.bf16.mxu0 %v2204
      %2334 = vmatpush1.bf16.msra.mxu0 %v2203
      %2335 = vmatprep.subr.bf16.mxu0 %v2220
      %2336 = vmatpush1.bf16.msra.mxu0 %v2219
      %2337 = vmatprep.subr.bf16.mxu0 %v2236
      %2338 = vmatpush1.bf16.msra.mxu0 %v2235
      %2339 = vmatprep.subr.bf16.mxu0 0
      %2340 = vmatpush1.bf16.msra.mxu0 0
      %2341 = vmatprep.subr.bf16.mxu0 0
      %2342 = vmatpush1.bf16.msra.mxu0 0
      %2343 = vmatprep.subr.bf16.mxu0 0
      %2344 = vmatpush1.bf16.msra.mxu0 0
      %2345 = vmatprep.subr.bf16.mxu0 0
      %2346 = vmatpush1.bf16.msra.mxu0 0
      %2347 = vmatprep.subr.bf16.mxu0 0
      %2348 = vmatpush1.bf16.msra.mxu0 0
      %2349 = vmatprep.subr.bf16.mxu0 0
      %2350 = vmatpush1.bf16.msra.mxu0 0
      %2351 = vmatprep.subr.bf16.mxu0 0
      %2352 = vmatpush1.bf16.msra.mxu0 0
      %2353 = vmatprep.subr.bf16.mxu0 0
      %2354 = vmatpush1.bf16.msra.mxu0 0
      %2355 = vmatprep.mubr.bf16.mxu0 0
      %2356 = vmatmul.mubr.bf16.gmra.mrb[0].mxu0 %v2315
      %v2357 = vpop.f32.mrb[0].mxu0
      %v2358 = vadd.f32 %v2262, %v2357
      %v2359 = vpop.f32.mrb[0].mxu0
      %v2360 = vadd.f32 %v2262, %v2359
      %v2361 = vpop.f32.mrb[0].mxu0
      %v2362 = vadd.f32 %v2267, %v2361
      %v2363 = vpop.f32.mrb[0].mxu0
      %v2364 = vadd.f32 %v2267, %v2363
      %2365 = vmatprep.mubr.bf16.mxu0 0
      %2366 = vmatmul.mubr.bf16.gmra.mrb[0].mxu0 %v2316
      %v2367 = vpop.f32.mrb[0].mxu0
      %v2368 = vadd.f32 %v2272, %v2367
      %v2369 = vpop.f32.mrb[0].mxu0
      %v2370 = vadd.f32 %v2272, %v2369
      %v2371 = vpop.f32.mrb[0].mxu0
      %v2372 = vadd.f32 %v2277, %v2371
      %v2373 = vpop.f32.mrb[0].mxu0
      %v2374 = vadd.f32 %v2277, %v2373
      %2375 = vmatprep.mubr.bf16.mxu0 0
      %2376 = vmatmul.mubr.bf16.gmra.mrb[0].mxu0 %v2317
      %v2377 = vpop.f32.mrb[0].mxu0
      %v2378 = vadd.f32 %v2282, %v2377
      %v2379 = vpop.f32.mrb[0].mxu0
      %v2380 = vadd.f32 %v2282, %v2379
      %v2381 = vpop.f32.mrb[0].mxu0
      %v2382 = vadd.f32 %v2287, %v2381
      %v2383 = vpop.f32.mrb[0].mxu0
      %v2384 = vadd.f32 %v2287, %v2383
      %2385 = vmatprep.mubr.bf16.mxu0 0
      %2386 = vmatmul.mubr.bf16.gmra.mrb[0].mxu0 %v2318
      %v2387 = vpop.f32.mrb[0].mxu0
      %v2388 = vadd.f32 %v2292, %v2387
      %v2389 = vpop.f32.mrb[0].mxu0
      %v2390 = vadd.f32 %v2292, %v2389
      %v2391 = vpop.f32.mrb[0].mxu0
      %v2392 = vadd.f32 %v2297, %v2391
      %v2393 = vpop.f32.mrb[0].mxu0
      %v2394 = vadd.f32 %v2297, %v2393
      %2395 = vdwg.mxu0
      %2396 = vmatprep.subr.bf16.mxu0 %v2126
      %2397 = vmatpush1.bf16.msra.mxu0 %v2125
      %2398 = vmatprep.subr.bf16.mxu0 %v2142
      %2399 = vmatpush1.bf16.msra.mxu0 %v2141
      %2400 = vmatprep.subr.bf16.mxu0 %v2158
      %2401 = vmatpush1.bf16.msra.mxu0 %v2157
      %2402 = vmatprep.subr.bf16.mxu0 %v2174
      %2403 = vmatpush1.bf16.msra.mxu0 %v2173
      %2404 = vmatprep.subr.bf16.mxu0 %v2190
      %2405 = vmatpush1.bf16.msra.mxu0 %v2189
      %2406 = vmatprep.subr.bf16.mxu0 %v2206
      %2407 = vmatpush1.bf16.msra.mxu0 %v2205
      %2408 = vmatprep.subr.bf16.mxu0 %v2222
      %2409 = vmatpush1.bf16.msra.mxu0 %v2221
      %2410 = vmatprep.subr.bf16.mxu0 %v2238
      %2411 = vmatpush1.bf16.msra.mxu0 %v2237
      %2412 = vmatprep.subr.bf16.mxu0 0
      %2413 = vmatpush1.bf16.msra.mxu0 0
      %2414 = vmatprep.subr.bf16.mxu0 0
      %2415 = vmatpush1.bf16.msra.mxu0 0
      %2416 = vmatprep.subr.bf16.mxu0 0
      %2417 = vmatpush1.bf16.msra.mxu0 0
      %2418 = vmatprep.subr.bf16.mxu0 0
      %2419 = vmatpush1.bf16.msra.mxu0 0
      %2420 = vmatprep.subr.bf16.mxu0 0
      %2421 = vmatpush1.bf16.msra.mxu0 0
      %2422 = vmatprep.subr.bf16.mxu0 0
      %2423 = vmatpush1.bf16.msra.mxu0 0
      %2424 = vmatprep.subr.bf16.mxu0 0
      %2425 = vmatpush1.bf16.msra.mxu0 0
      %2426 = vmatprep.subr.bf16.mxu0 0
      %2427 = vmatpush1.bf16.msra.mxu0 0
      %2428 = vmatprep.mubr.bf16.mxu0 0
      %2429 = vmatmul.mubr.bf16.gmra.mrb[0].mxu0 %v2315
      %v2430 = vpop.f32.mrb[0].mxu0
      %v2431 = vadd.f32 %v2262, %v2430
      %v2432 = vpop.f32.mrb[0].mxu0
      %v2433 = vadd.f32 %v2262, %v2432
      %v2434 = vpop.f32.mrb[0].mxu0
      %v2435 = vadd.f32 %v2267, %v2434
      %v2436 = vpop.f32.mrb[0].mxu0
      %v2437 = vadd.f32 %v2267, %v2436
      %2438 = vmatprep.mubr.bf16.mxu0 0
      %2439 = vmatmul.mubr.bf16.gmra.mrb[0].mxu0 %v2316
      %v2440 = vpop.f32.mrb[0].mxu0
      %v2441 = vadd.f32 %v2272, %v2440
      %v2442 = vpop.f32.mrb[0].mxu0
      %v2443 = vadd.f32 %v2272, %v2442
      %v2444 = vpop.f32.mrb[0].mxu0
      %v2445 = vadd.f32 %v2277, %v2444
      %v2446 = vpop.f32.mrb[0].mxu0
      %v2447 = vadd.f32 %v2277, %v2446
      %2448 = vmatprep.mubr.bf16.mxu0 0
      %2449 = vmatmul.mubr.bf16.gmra.mrb[0].mxu0 %v2317
      %v2450 = vpop.f32.mrb[0].mxu0
      %v2451 = vadd.f32 %v2282, %v2450
      %v2452 = vpop.f32.mrb[0].mxu0
      %v2453 = vadd.f32 %v2282, %v2452
      %v2454 = vpop.f32.mrb[0].mxu0
      %v2455 = vadd.f32 %v2287, %v2454
      %v2456 = vpop.f32.mrb[0].mxu0
      %v2457 = vadd.f32 %v2287, %v2456
      %2458 = vmatprep.mubr.bf16.mxu0 0
      %2459 = vmatmul.mubr.bf16.gmra.mrb[0].mxu0 %v2318
      %v2460 = vpop.f32.mrb[0].mxu0
      %v2461 = vadd.f32 %v2292, %v2460
      %v2462 = vpop.f32.mrb[0].mxu0
      %v2463 = vadd.f32 %v2292, %v2462
      %v2464 = vpop.f32.mrb[0].mxu0
      %v2465 = vadd.f32 %v2297, %v2464
      %v2466 = vpop.f32.mrb[0].mxu0
      %v2467 = vadd.f32 %v2297, %v2466
      %2468 = vdwg.mxu0
      %2469 = vmatprep.subr.bf16.mxu0 %v2128
      %2470 = vmatpush1.bf16.msra.mxu0 %v2127
      %2471 = vmatprep.subr.bf16.mxu0 %v2144
      %2472 = vmatpush1.bf16.msra.mxu0 %v2143
      %2473 = vmatprep.subr.bf16.mxu0 %v2160
      %2474 = vmatpush1.bf16.msra.mxu0 %v2159
      %2475 = vmatprep.subr.bf16.mxu0 %v2176
      %2476 = vmatpush1.bf16.msra.mxu0 %v2175
      %2477 = vmatprep.subr.bf16.mxu0 %v2192
      %2478 = vmatpush1.bf16.msra.mxu0 %v2191
      %2479 = vmatprep.subr.bf16.mxu0 %v2208
      %2480 = vmatpush1.bf16.msra.mxu0 %v2207
      %2481 = vmatprep.subr.bf16.mxu0 %v2224
      %2482 = vmatpush1.bf16.msra.mxu0 %v2223
      %2483 = vmatprep.subr.bf16.mxu0 %v2240
      %2484 = vmatpush1.bf16.msra.mxu0 %v2239
      %2485 = vmatprep.subr.bf16.mxu0 0
      %2486 = vmatpush1.bf16.msra.mxu0 0
      %2487 = vmatprep.subr.bf16.mxu0 0
      %2488 = vmatpush1.bf16.msra.mxu0 0
      %2489 = vmatprep.subr.bf16.mxu0 0
      %2490 = vmatpush1.bf16.msra.mxu0 0
      %2491 = vmatprep.subr.bf16.mxu0 0
      %2492 = vmatpush1.bf16.msra.mxu0 0
      %2493 = vmatprep.subr.bf16.mxu0 0
      %2494 = vmatpush1.bf16.msra.mxu0 0
      %2495 = vmatprep.subr.bf16.mxu0 0
      %2496 = vmatpush1.bf16.msra.mxu0 0
      %2497 = vmatprep.subr.bf16.mxu0 0
      %2498 = vmatpush1.bf16.msra.mxu0 0
      %2499 = vmatprep.subr.bf16.mxu0 0
      %2500 = vmatpush1.bf16.msra.mxu0 0
      %2501 = vmatprep.mubr.bf16.mxu0 0
      %2502 = vmatmul.mubr.bf16.gmra.mrb[0].mxu0 %v2315
      %v2503 = vpop.f32.mrb[0].mxu0
      %v2504 = vadd.f32 %v2262, %v2503
      %v2505 = vpop.f32.mrb[0].mxu0
      %v2506 = vadd.f32 %v2262, %v2505
      %v2507 = vpop.f32.mrb[0].mxu0
      %v2508 = vadd.f32 %v2267, %v2507
      %v2509 = vpop.f32.mrb[0].mxu0
      %v2510 = vadd.f32 %v2267, %v2509
      %2511 = vmatprep.mubr.bf16.mxu0 0
      %2512 = vmatmul.mubr.bf16.gmra.mrb[0].mxu0 %v2316
      %v2513 = vpop.f32.mrb[0].mxu0
      %v2514 = vadd.f32 %v2272, %v2513
      %v2515 = vpop.f32.mrb[0].mxu0
      %v2516 = vadd.f32 %v2272, %v2515
      %v2517 = vpop.f32.mrb[0].mxu0
      %v2518 = vadd.f32 %v2277, %v2517
      %v2519 = vpop.f32.mrb[0].mxu0
      %v2520 = vadd.f32 %v2277, %v2519
      %2521 = vmatprep.mubr.bf16.mxu0 0
      %2522 = vmatmul.mubr.bf16.gmra.mrb[0].mxu0 %v2317
      %v2523 = vpop.f32.mrb[0].mxu0
      %v2524 = vadd.f32 %v2282, %v2523
      %v2525 = vpop.f32.mrb[0].mxu0
      %v2526 = vadd.f32 %v2282, %v2525
      %v2527 = vpop.f32.mrb[0].mxu0
      %v2528 = vadd.f32 %v2287, %v2527
      %v2529 = vpop.f32.mrb[0].mxu0
      %v2530 = vadd.f32 %v2287, %v2529
      %2531 = vmatprep.mubr.bf16.mxu0 0
      %2532 = vmatmul.mubr.bf16.gmra.mrb[0].mxu0 %v2318
      %v2533 = vpop.f32.mrb[0].mxu0
      %v2534 = vadd.f32 %v2292, %v2533
      %v2535 = vpop.f32.mrb[0].mxu0
      %v2536 = vadd.f32 %v2292, %v2535
      %v2537 = vpop.f32.mrb[0].mxu0
      %v2538 = vadd.f32 %v2297, %v2537
      %v2539 = vpop.f32.mrb[0].mxu0
      %v2540 = vadd.f32 %v2297, %v2539
      %2541 = vdwg.mxu0
      %2542 = vmatprep.subr.bf16.mxu0 %v2130
      %2543 = vmatpush1.bf16.msra.mxu0 %v2129
      %2544 = vmatprep.subr.bf16.mxu0 %v2146
      %2545 = vmatpush1.bf16.msra.mxu0 %v2145
      %2546 = vmatprep.subr.bf16.mxu0 %v2162
      %2547 = vmatpush1.bf16.msra.mxu0 %v2161
      %2548 = vmatprep.subr.bf16.mxu0 %v2178
      %2549 = vmatpush1.bf16.msra.mxu0 %v2177
      %2550 = vmatprep.subr.bf16.mxu0 %v2194
      %2551 = vmatpush1.bf16.msra.mxu0 %v2193
      %2552 = vmatprep.subr.bf16.mxu0 %v2210
      %2553 = vmatpush1.bf16.msra.mxu0 %v2209
      %2554 = vmatprep.subr.bf16.mxu0 %v2226
      %2555 = vmatpush1.bf16.msra.mxu0 %v2225
      %2556 = vmatprep.subr.bf16.mxu0 %v2242
      %2557 = vmatpush1.bf16.msra.mxu0 %v2241
      %2558 = vmatprep.subr.bf16.mxu0 0
      %2559 = vmatpush1.bf16.msra.mxu0 0
      %2560 = vmatprep.subr.bf16.mxu0 0
      %2561 = vmatpush1.bf16.msra.mxu0 0
      %2562 = vmatprep.subr.bf16.mxu0 0
      %2563 = vmatpush1.bf16.msra.mxu0 0
      %2564 = vmatprep.subr.bf16.mxu0 0
      %2565 = vmatpush1.bf16.msra.mxu0 0
      %2566 = vmatprep.subr.bf16.mxu0 0
      %2567 = vmatpush1.bf16.msra.mxu0 0
      %2568 = vmatprep.subr.bf16.mxu0 0
      %2569 = vmatpush1.bf16.msra.mxu0 0
      %2570 = vmatprep.subr.bf16.mxu0 0
      %2571 = vmatpush1.bf16.msra.mxu0 0
      %2572 = vmatprep.subr.bf16.mxu0 0
      %2573 = vmatpush1.bf16.msra.mxu0 0
      %2574 = vmatprep.mubr.bf16.mxu0 0
      %2575 = vmatmul.mubr.bf16.gmra.mrb[0].mxu0 %v2315
      %v2576 = vpop.f32.mrb[0].mxu0
      %v2577 = vadd.f32 %v2262, %v2576
      %v2578 = vpop.f32.mrb[0].mxu0
      %v2579 = vadd.f32 %v2262, %v2578
      %v2580 = vpop.f32.mrb[0].mxu0
      %v2581 = vadd.f32 %v2267, %v2580
      %v2582 = vpop.f32.mrb[0].mxu0
      %v2583 = vadd.f32 %v2267, %v2582
      %2584 = vmatprep.mubr.bf16.mxu0 0
      %2585 = vmatmul.mubr.bf16.gmra.mrb[0].mxu0 %v2316
      %v2586 = vpop.f32.mrb[0].mxu0
      %v2587 = vadd.f32 %v2272, %v2586
      %v2588 = vpop.f32.mrb[0].mxu0
      %v2589 = vadd.f32 %v2272, %v2588
      %v2590 = vpop.f32.mrb[0].mxu0
      %v2591 = vadd.f32 %v2277, %v2590
      %v2592 = vpop.f32.mrb[0].mxu0
      %v2593 = vadd.f32 %v2277, %v2592
      %2594 = vmatprep.mubr.bf16.mxu0 0
      %2595 = vmatmul.mubr.bf16.gmra.mrb[0].mxu0 %v2317
      %v2596 = vpop.f32.mrb[0].mxu0
      %v2597 = vadd.f32 %v2282, %v2596
      %v2598 = vpop.f32.mrb[0].mxu0
      %v2599 = vadd.f32 %v2282, %v2598
      %v2600 = vpop.f32.mrb[0].mxu0
      %v2601 = vadd.f32 %v2287, %v2600
      %v2602 = vpop.f32.mrb[0].mxu0
      %v2603 = vadd.f32 %v2287, %v2602
      %2604 = vmatprep.mubr.bf16.mxu0 0
      %2605 = vmatmul.mubr.bf16.gmra.mrb[0].mxu0 %v2318
      %v2606 = vpop.f32.mrb[0].mxu0
      %v2607 = vadd.f32 %v2292, %v2606
      %v2608 = vpop.f32.mrb[0].mxu0
      %v2609 = vadd.f32 %v2292, %v2608
      %v2610 = vpop.f32.mrb[0].mxu0
      %v2611 = vadd.f32 %v2297, %v2610
      %v2612 = vpop.f32.mrb[0].mxu0
      %v2613 = vadd.f32 %v2297, %v2612
      %2614 = vdwg.mxu0
      %2615 = vmatprep.subr.bf16.mxu0 %v2132
      %2616 = vmatpush1.bf16.msra.mxu0 %v2131
      %2617 = vmatprep.subr.bf16.mxu0 %v2148
      %2618 = vmatpush1.bf16.msra.mxu0 %v2147
      %2619 = vmatprep.subr.bf16.mxu0 %v2164
      %2620 = vmatpush1.bf16.msra.mxu0 %v2163
      %2621 = vmatprep.subr.bf16.mxu0 %v2180
      %2622 = vmatpush1.bf16.msra.mxu0 %v2179
      %2623 = vmatprep.subr.bf16.mxu0 %v2196
      %2624 = vmatpush1.bf16.msra.mxu0 %v2195
      %2625 = vmatprep.subr.bf16.mxu0 %v2212
      %2626 = vmatpush1.bf16.msra.mxu0 %v2211
      %2627 = vmatprep.subr.bf16.mxu0 %v2228
      %2628 = vmatpush1.bf16.msra.mxu0 %v2227
      %2629 = vmatprep.subr.bf16.mxu0 %v2244
      %2630 = vmatpush1.bf16.msra.mxu0 %v2243
      %2631 = vmatprep.subr.bf16.mxu0 0
      %2632 = vmatpush1.bf16.msra.mxu0 0
      %2633 = vmatprep.subr.bf16.mxu0 0
      %2634 = vmatpush1.bf16.msra.mxu0 0
      %2635 = vmatprep.subr.bf16.mxu0 0
      %2636 = vmatpush1.bf16.msra.mxu0 0
      %2637 = vmatprep.subr.bf16.mxu0 0
      %2638 = vmatpush1.bf16.msra.mxu0 0
      %2639 = vmatprep.subr.bf16.mxu0 0
      %2640 = vmatpush1.bf16.msra.mxu0 0
      %2641 = vmatprep.subr.bf16.mxu0 0
      %2642 = vmatpush1.bf16.msra.mxu0 0
      %2643 = vmatprep.subr.bf16.mxu0 0
      %2644 = vmatpush1.bf16.msra.mxu0 0
      %2645 = vmatprep.subr.bf16.mxu0 0
      %2646 = vmatpush1.bf16.msra.mxu0 0
      %2647 = vmatprep.mubr.bf16.mxu0 0
      %2648 = vmatmul.mubr.bf16.gmra.mrb[0].mxu0 %v2315
      %v2649 = vpop.f32.mrb[0].mxu0
      %v2650 = vadd.f32 %v2262, %v2649
      %v2651 = vpop.f32.mrb[0].mxu0
      %v2652 = vadd.f32 %v2262, %v2651
      %v2653 = vpop.f32.mrb[0].mxu0
      %v2654 = vadd.f32 %v2267, %v2653
      %v2655 = vpop.f32.mrb[0].mxu0
      %v2656 = vadd.f32 %v2267, %v2655
      %2657 = vmatprep.mubr.bf16.mxu0 0
      %2658 = vmatmul.mubr.bf16.gmra.mrb[0].mxu0 %v2316
      %v2659 = vpop.f32.mrb[0].mxu0
      %v2660 = vadd.f32 %v2272, %v2659
      %v2661 = vpop.f32.mrb[0].mxu0
      %v2662 = vadd.f32 %v2272, %v2661
      %v2663 = vpop.f32.mrb[0].mxu0
      %v2664 = vadd.f32 %v2277, %v2663
      %v2665 = vpop.f32.mrb[0].mxu0
      %v2666 = vadd.f32 %v2277, %v2665
      %2667 = vmatprep.mubr.bf16.mxu0 0
      %2668 = vmatmul.mubr.bf16.gmra.mrb[0].mxu0 %v2317
      %v2669 = vpop.f32.mrb[0].mxu0
      %v2670 = vadd.f32 %v2282, %v2669
      %v2671 = vpop.f32.mrb[0].mxu0
      %v2672 = vadd.f32 %v2282, %v2671
      %v2673 = vpop.f32.mrb[0].mxu0
      %v2674 = vadd.f32 %v2287, %v2673
      %v2675 = vpop.f32.mrb[0].mxu0
      %v2676 = vadd.f32 %v2287, %v2675
      %2677 = vmatprep.mubr.bf16.mxu0 0
      %2678 = vmatmul.mubr.bf16.gmra.mrb[0].mxu0 %v2318
      %v2679 = vpop.f32.mrb[0].mxu0
      %v2680 = vadd.f32 %v2292, %v2679
      %v2681 = vpop.f32.mrb[0].mxu0
      %v2682 = vadd.f32 %v2292, %v2681
      %v2683 = vpop.f32.mrb[0].mxu0
      %v2684 = vadd.f32 %v2297, %v2683
      %v2685 = vpop.f32.mrb[0].mxu0
      %v2686 = vadd.f32 %v2297, %v2685
      %2687 = vdwg.mxu0
      %2688 = vmatprep.subr.bf16.mxu0 %v2134
      %2689 = vmatpush1.bf16.msra.mxu0 %v2133
      %2690 = vmatprep.subr.bf16.mxu0 %v2150
      %2691 = vmatpush1.bf16.msra.mxu0 %v2149
      %2692 = vmatprep.subr.bf16.mxu0 %v2166
      %2693 = vmatpush1.bf16.msra.mxu0 %v2165
      %2694 = vmatprep.subr.bf16.mxu0 %v2182
      %2695 = vmatpush1.bf16.msra.mxu0 %v2181
      %2696 = vmatprep.subr.bf16.mxu0 %v2198
      %2697 = vmatpush1.bf16.msra.mxu0 %v2197
      %2698 = vmatprep.subr.bf16.mxu0 %v2214
      %2699 = vmatpush1.bf16.msra.mxu0 %v2213
      %2700 = vmatprep.subr.bf16.mxu0 %v2230
      %2701 = vmatpush1.bf16.msra.mxu0 %v2229
      %2702 = vmatprep.subr.bf16.mxu0 %v2246
      %2703 = vmatpush1.bf16.msra.mxu0 %v2245
      %2704 = vmatprep.subr.bf16.mxu0 0
      %2705 = vmatpush1.bf16.msra.mxu0 0
      %2706 = vmatprep.subr.bf16.mxu0 0
      %2707 = vmatpush1.bf16.msra.mxu0 0
      %2708 = vmatprep.subr.bf16.mxu0 0
      %2709 = vmatpush1.bf16.msra.mxu0 0
      %2710 = vmatprep.subr.bf16.mxu0 0
      %2711 = vmatpush1.bf16.msra.mxu0 0
      %2712 = vmatprep.subr.bf16.mxu0 0
      %2713 = vmatpush1.bf16.msra.mxu0 0
      %2714 = vmatprep.subr.bf16.mxu0 0
      %2715 = vmatpush1.bf16.msra.mxu0 0
      %2716 = vmatprep.subr.bf16.mxu0 0
      %2717 = vmatpush1.bf16.msra.mxu0 0
      %2718 = vmatprep.subr.bf16.mxu0 0
      %2719 = vmatpush1.bf16.msra.mxu0 0
      %2720 = vmatprep.mubr.bf16.mxu0 0
      %2721 = vmatmul.mubr.bf16.gmra.mrb[0].mxu0 %v2315
      %v2722 = vpop.f32.mrb[0].mxu0
      %v2723 = vadd.f32 %v2262, %v2722
      %v2724 = vpop.f32.mrb[0].mxu0
      %v2725 = vadd.f32 %v2262, %v2724
      %v2726 = vpop.f32.mrb[0].mxu0
      %v2727 = vadd.f32 %v2267, %v2726
      %v2728 = vpop.f32.mrb[0].mxu0
      %v2729 = vadd.f32 %v2267, %v2728
      %2730 = vmatprep.mubr.bf16.mxu0 0
      %2731 = vmatmul.mubr.bf16.gmra.mrb[0].mxu0 %v2316
      %v2732 = vpop.f32.mrb[0].mxu0
      %v2733 = vadd.f32 %v2272, %v2732
      %v2734 = vpop.f32.mrb[0].mxu0
      %v2735 = vadd.f32 %v2272, %v2734
      %v2736 = vpop.f32.mrb[0].mxu0
      %v2737 = vadd.f32 %v2277, %v2736
      %v2738 = vpop.f32.mrb[0].mxu0
      %v2739 = vadd.f32 %v2277, %v2738
      %2740 = vmatprep.mubr.bf16.mxu0 0
      %2741 = vmatmul.mubr.bf16.gmra.mrb[0].mxu0 %v2317
      %v2742 = vpop.f32.mrb[0].mxu0
      %v2743 = vadd.f32 %v2282, %v2742
      %v2744 = vpop.f32.mrb[0].mxu0
      %v2745 = vadd.f32 %v2282, %v2744
      %v2746 = vpop.f32.mrb[0].mxu0
      %v2747 = vadd.f32 %v2287, %v2746
      %v2748 = vpop.f32.mrb[0].mxu0
      %v2749 = vadd.f32 %v2287, %v2748
      %2750 = vmatprep.mubr.bf16.mxu0 0
      %2751 = vmatmul.mubr.bf16.gmra.mrb[0].mxu0 %v2318
      %v2752 = vpop.f32.mrb[0].mxu0
      %v2753 = vadd.f32 %v2292, %v2752
      %v2754 = vpop.f32.mrb[0].mxu0
      %v2755 = vadd.f32 %v2292, %v2754
      %v2756 = vpop.f32.mrb[0].mxu0
      %v2757 = vadd.f32 %v2297, %v2756
      %v2758 = vpop.f32.mrb[0].mxu0
      %v2759 = vadd.f32 %v2297, %v2758
      %2760 = vdwg.mxu0
      %2761 = vmatprep.subr.bf16.mxu0 %v2136
      %2762 = vmatpush1.bf16.msra.mxu0 %v2135
      %2763 = vmatprep.subr.bf16.mxu0 %v2152
      %2764 = vmatpush1.bf16.msra.mxu0 %v2151
      %2765 = vmatprep.subr.bf16.mxu0 %v2168
      %2766 = vmatpush1.bf16.msra.mxu0 %v2167
      %2767 = vmatprep.subr.bf16.mxu0 %v2184
      %2768 = vmatpush1.bf16.msra.mxu0 %v2183
      %2769 = vmatprep.subr.bf16.mxu0 %v2200
      %2770 = vmatpush1.bf16.msra.mxu0 %v2199
      %2771 = vmatprep.subr.bf16.mxu0 %v2216
      %2772 = vmatpush1.bf16.msra.mxu0 %v2215
      %2773 = vmatprep.subr.bf16.mxu0 %v2232
      %2774 = vmatpush1.bf16.msra.mxu0 %v2231
      %2775 = vmatprep.subr.bf16.mxu0 %v2248
      %2776 = vmatpush1.bf16.msra.mxu0 %v2247
      %2777 = vmatprep.subr.bf16.mxu0 0
      %2778 = vmatpush1.bf16.msra.mxu0 0
      %2779 = vmatprep.subr.bf16.mxu0 0
      %2780 = vmatpush1.bf16.msra.mxu0 0
      %2781 = vmatprep.subr.bf16.mxu0 0
      %2782 = vmatpush1.bf16.msra.mxu0 0
      %2783 = vmatprep.subr.bf16.mxu0 0
      %2784 = vmatpush1.bf16.msra.mxu0 0
      %2785 = vmatprep.subr.bf16.mxu0 0
      %2786 = vmatpush1.bf16.msra.mxu0 0
      %2787 = vmatprep.subr.bf16.mxu0 0
      %2788 = vmatpush1.bf16.msra.mxu0 0
      %2789 = vmatprep.subr.bf16.mxu0 0
      %2790 = vmatpush1.bf16.msra.mxu0 0
      %2791 = vmatprep.subr.bf16.mxu0 0
      %2792 = vmatpush1.bf16.msra.mxu0 0
      %2793 = vmatprep.mubr.bf16.mxu0 0
      %2794 = vmatmul.mubr.bf16.gmra.mrb[0].mxu0 %v2315
      %v2795 = vpop.f32.mrb[0].mxu0
      %v2796 = vadd.f32 %v2262, %v2795
      %v2797 = vpop.f32.mrb[0].mxu0
      %v2798 = vadd.f32 %v2262, %v2797
      %v2799 = vpop.f32.mrb[0].mxu0
      %v2800 = vadd.f32 %v2267, %v2799
      %v2801 = vpop.f32.mrb[0].mxu0
      %v2802 = vadd.f32 %v2267, %v2801
      %2803 = vmatprep.mubr.bf16.mxu0 0
      %2804 = vmatmul.mubr.bf16.gmra.mrb[0].mxu0 %v2316
      %v2805 = vpop.f32.mrb[0].mxu0
      %v2806 = vadd.f32 %v2272, %v2805
      %v2807 = vpop.f32.mrb[0].mxu0
      %v2808 = vadd.f32 %v2272, %v2807
      %v2809 = vpop.f32.mrb[0].mxu0
      %v2810 = vadd.f32 %v2277, %v2809
      %v2811 = vpop.f32.mrb[0].mxu0
      %v2812 = vadd.f32 %v2277, %v2811
      %2813 = vmatprep.mubr.bf16.mxu0 0
      %2814 = vmatmul.mubr.bf16.gmra.mrb[0].mxu0 %v2317
      %v2815 = vpop.f32.mrb[0].mxu0
      %v2816 = vadd.f32 %v2282, %v2815
      %v2817 = vpop.f32.mrb[0].mxu0
      %v2818 = vadd.f32 %v2282, %v2817
      %v2819 = vpop.f32.mrb[0].mxu0
      %v2820 = vadd.f32 %v2287, %v2819
      %v2821 = vpop.f32.mrb[0].mxu0
      %v2822 = vadd.f32 %v2287, %v2821
      %2823 = vmatprep.mubr.bf16.mxu0 0
      %2824 = vmatmul.mubr.bf16.gmra.mrb[0].mxu0 %v2318
      %v2825 = vpop.f32.mrb[0].mxu0
      %v2826 = vadd.f32 %v2292, %v2825
      %v2827 = vpop.f32.mrb[0].mxu0
      %v2828 = vadd.f32 %v2292, %v2827
      %v2829 = vpop.f32.mrb[0].mxu0
      %v2830 = vadd.f32 %v2297, %v2829
      %v2831 = vpop.f32.mrb[0].mxu0
      %v2832 = vadd.f32 %v2297, %v2831
      %2833 = vdwg.mxu0
      %2834 = vmatprep.subr.bf16.mxu0 %v2138
      %2835 = vmatpush1.bf16.msra.mxu0 %v2137
      %2836 = vmatprep.subr.bf16.mxu0 %v2154
      %2837 = vmatpush1.bf16.msra.mxu0 %v2153
      %2838 = vmatprep.subr.bf16.mxu0 %v2170
      %2839 = vmatpush1.bf16.msra.mxu0 %v2169
      %2840 = vmatprep.subr.bf16.mxu0 %v2186
      %2841 = vmatpush1.bf16.msra.mxu0 %v2185
      %2842 = vmatprep.subr.bf16.mxu0 %v2202
      %2843 = vmatpush1.bf16.msra.mxu0 %v2201
      %2844 = vmatprep.subr.bf16.mxu0 %v2218
      %2845 = vmatpush1.bf16.msra.mxu0 %v2217
      %2846 = vmatprep.subr.bf16.mxu0 %v2234
      %2847 = vmatpush1.bf16.msra.mxu0 %v2233
      %2848 = vmatprep.subr.bf16.mxu0 %v2250
      %2849 = vmatpush1.bf16.msra.mxu0 %v2249
      %2850 = vmatprep.subr.bf16.mxu0 0
      %2851 = vmatpush1.bf16.msra.mxu0 0
      %2852 = vmatprep.subr.bf16.mxu0 0
      %2853 = vmatpush1.bf16.msra.mxu0 0
      %2854 = vmatprep.subr.bf16.mxu0 0
      %2855 = vmatpush1.bf16.msra.mxu0 0
      %2856 = vmatprep.subr.bf16.mxu0 0
      %2857 = vmatpush1.bf16.msra.mxu0 0
      %2858 = vmatprep.subr.bf16.mxu0 0
      %2859 = vmatpush1.bf16.msra.mxu0 0
      %2860 = vmatprep.subr.bf16.mxu0 0
      %2861 = vmatpush1.bf16.msra.mxu0 0
      %2862 = vmatprep.subr.bf16.mxu0 0
      %2863 = vmatpush1.bf16.msra.mxu0 0
      %2864 = vmatprep.subr.bf16.mxu0 0
      %2865 = vmatpush1.bf16.msra.mxu0 0
      %2866 = vmatprep.mubr.bf16.mxu0 0
      %2867 = vmatmul.mubr.bf16.gmra.mrb[0].mxu0 %v2315
      %v2868 = vpop.f32.mrb[0].mxu0
      %v2869 = vadd.f32 %v2262, %v2868
      %v2870 = vpop.f32.mrb[0].mxu0
      %v2871 = vadd.f32 %v2262, %v2870
      %v2872 = vpop.f32.mrb[0].mxu0
      %v2873 = vadd.f32 %v2267, %v2872
      %v2874 = vpop.f32.mrb[0].mxu0
      %v2875 = vadd.f32 %v2267, %v2874
      %2876 = vmatprep.mubr.bf16.mxu0 0
      %2877 = vmatmul.mubr.bf16.gmra.mrb[0].mxu0 %v2316
      %v2878 = vpop.f32.mrb[0].mxu0
      %v2879 = vadd.f32 %v2272, %v2878
      %v2880 = vpop.f32.mrb[0].mxu0
      %v2881 = vadd.f32 %v2272, %v2880
      %v2882 = vpop.f32.mrb[0].mxu0
      %v2883 = vadd.f32 %v2277, %v2882
      %v2884 = vpop.f32.mrb[0].mxu0
      %v2885 = vadd.f32 %v2277, %v2884
      %2886 = vmatprep.mubr.bf16.mxu0 0
      %2887 = vmatmul.mubr.bf16.gmra.mrb[0].mxu0 %v2317
      %v2888 = vpop.f32.mrb[0].mxu0
      %v2889 = vadd.f32 %v2282, %v2888
      %v2890 = vpop.f32.mrb[0].mxu0
      %v2891 = vadd.f32 %v2282, %v2890
      %v2892 = vpop.f32.mrb[0].mxu0
      %v2893 = vadd.f32 %v2287, %v2892
      %v2894 = vpop.f32.mrb[0].mxu0
      %v2895 = vadd.f32 %v2287, %v2894
      %2896 = vmatprep.mubr.bf16.mxu0 0
      %2897 = vmatmul.mubr.bf16.gmra.mrb[0].mxu0 %v2318
      %v2898 = vpop.f32.mrb[0].mxu0
      %v2899 = vadd.f32 %v2292, %v2898
      %v2900 = vpop.f32.mrb[0].mxu0
      %v2901 = vadd.f32 %v2292, %v2900
      %v2902 = vpop.f32.mrb[0].mxu0
      %v2903 = vadd.f32 %v2297, %v2902
      %v2904 = vpop.f32.mrb[0].mxu0
      %v2905 = vadd.f32 %v2297, %v2904
      %2906 = vdwg.mxu0
      %v2907 = vmax.f32 %v2358, 0.0
      %v2908 = vmax.f32 %v2360, 0.0
      %v2909 = vmax.f32 %v2431, 0.0
      %v2910 = vmax.f32 %v2433, 0.0
      %v2911 = vmax.f32 %v2504, 0.0
      %v2912 = vmax.f32 %v2506, 0.0
      %v2913 = vmax.f32 %v2577, 0.0
      %v2914 = vmax.f32 %v2579, 0.0
      %v2915 = vmax.f32 %v2650, 0.0
      %v2916 = vmax.f32 %v2652, 0.0
      %v2917 = vmax.f32 %v2723, 0.0
      %v2918 = vmax.f32 %v2725, 0.0
      %v2919 = vmax.f32 %v2796, 0.0
      %v2920 = vmax.f32 %v2798, 0.0
      %v2921 = vmax.f32 %v2869, 0.0
      %v2922 = vmax.f32 %v2871, 0.0
      %v2923 = vmax.f32 %v2362, 0.0
      %v2924 = vmax.f32 %v2364, 0.0
      %v2925 = vmax.f32 %v2435, 0.0
      %v2926 = vmax.f32 %v2437, 0.0
      %v2927 = vmax.f32 %v2508, 0.0
      %v2928 = vmax.f32 %v2510, 0.0
      %v2929 = vmax.f32 %v2581, 0.0
      %v2930 = vmax.f32 %v2583, 0.0
      %v2931 = vmax.f32 %v2654, 0.0
      %v2932 = vmax.f32 %v2656, 0.0
      %v2933 = vmax.f32 %v2727, 0.0
      %v2934 = vmax.f32 %v2729, 0.0
      %v2935 = vmax.f32 %v2800, 0.0
      %v2936 = vmax.f32 %v2802, 0.0
      %v2937 = vmax.f32 %v2873, 0.0
      %v2938 = vmax.f32 %v2875, 0.0
      %v2939 = vmax.f32 %v2368, 0.0
      %v2940 = vmax.f32 %v2370, 0.0
      %v2941 = vmax.f32 %v2441, 0.0
      %v2942 = vmax.f32 %v2443, 0.0
      %v2943 = vmax.f32 %v2514, 0.0
      %v2944 = vmax.f32 %v2516, 0.0
      %v2945 = vmax.f32 %v2587, 0.0
      %v2946 = vmax.f32 %v2589, 0.0
      %v2947 = vmax.f32 %v2660, 0.0
      %v2948 = vmax.f32 %v2662, 0.0
      %v2949 = vmax.f32 %v2733, 0.0
      %v2950 = vmax.f32 %v2735, 0.0
      %v2951 = vmax.f32 %v2806, 0.0
      %v2952 = vmax.f32 %v2808, 0.0
      %v2953 = vmax.f32 %v2879, 0.0
      %v2954 = vmax.f32 %v2881, 0.0
      %v2955 = vmax.f32 %v2372, 0.0
      %v2956 = vmax.f32 %v2374, 0.0
      %v2957 = vmax.f32 %v2445, 0.0
      %v2958 = vmax.f32 %v2447, 0.0
      %v2959 = vmax.f32 %v2518, 0.0
      %v2960 = vmax.f32 %v2520, 0.0
      %v2961 = vmax.f32 %v2591, 0.0
      %v2962 = vmax.f32 %v2593, 0.0
      %v2963 = vmax.f32 %v2664, 0.0
      %v2964 = vmax.f32 %v2666, 0.0
      %v2965 = vmax.f32 %v2737, 0.0
      %v2966 = vmax.f32 %v2739, 0.0
      %v2967 = vmax.f32 %v2810, 0.0
      %v2968 = vmax.f32 %v2812, 0.0
      %v2969 = vmax.f32 %v2883, 0.0
      %v2970 = vmax.f32 %v2885, 0.0
      %v2971 = vmax.f32 %v2378, 0.0
      %v2972 = vmax.f32 %v2380, 0.0
      %v2973 = vmax.f32 %v2451, 0.0
      %v2974 = vmax.f32 %v2453, 0.0
      %v2975 = vmax.f32 %v2524, 0.0
      %v2976 = vmax.f32 %v2526, 0.0
      %v2977 = vmax.f32 %v2597, 0.0
      %v2978 = vmax.f32 %v2599, 0.0
      %v2979 = vmax.f32 %v2670, 0.0
      %v2980 = vmax.f32 %v2672, 0.0
      %v2981 = vmax.f32 %v2743, 0.0
      %v2982 = vmax.f32 %v2745, 0.0
      %v2983 = vmax.f32 %v2816, 0.0
      %v2984 = vmax.f32 %v2818, 0.0
      %v2985 = vmax.f32 %v2889, 0.0
      %v2986 = vmax.f32 %v2891, 0.0
      %v2987 = vmax.f32 %v2382, 0.0
      %v2988 = vmax.f32 %v2384, 0.0
      %v2989 = vmax.f32 %v2455, 0.0
      %v2990 = vmax.f32 %v2457, 0.0
      %v2991 = vmax.f32 %v2528, 0.0
      %v2992 = vmax.f32 %v2530, 0.0
      %v2993 = vmax.f32 %v2601, 0.0
      %v2994 = vmax.f32 %v2603, 0.0
      %v2995 = vmax.f32 %v2674, 0.0
      %v2996 = vmax.f32 %v2676, 0.0
      %v2997 = vmax.f32 %v2747, 0.0
      %v2998 = vmax.f32 %v2749, 0.0
      %v2999 = vmax.f32 %v2820, 0.0
      %v3000 = vmax.f32 %v2822, 0.0
      %v3001 = vmax.f32 %v2893, 0.0
      %v3002 = vmax.f32 %v2895, 0.0
      %v3003 = vmax.f32 %v2388, 0.0
      %v3004 = vmax.f32 %v2390, 0.0
      %v3005 = vmax.f32 %v2461, 0.0
      %v3006 = vmax.f32 %v2463, 0.0
      %v3007 = vmax.f32 %v2534, 0.0
      %v3008 = vmax.f32 %v2536, 0.0
      %v3009 = vmax.f32 %v2607, 0.0
      %v3010 = vmax.f32 %v2609, 0.0
      %v3011 = vmax.f32 %v2680, 0.0
      %v3012 = vmax.f32 %v2682, 0.0
      %v3013 = vmax.f32 %v2753, 0.0
      %v3014 = vmax.f32 %v2755, 0.0
      %v3015 = vmax.f32 %v2826, 0.0
      %v3016 = vmax.f32 %v2828, 0.0
      %v3017 = vmax.f32 %v2899, 0.0
      %v3018 = vmax.f32 %v2901, 0.0
      %v3019 = vmax.f32 %v2392, 0.0
      %v3020 = vmax.f32 %v2394, 0.0
      %v3021 = vmax.f32 %v2465, 0.0
      %v3022 = vmax.f32 %v2467, 0.0
      %v3023 = vmax.f32 %v2538, 0.0
      %v3024 = vmax.f32 %v2540, 0.0
      %v3025 = vmax.f32 %v2611, 0.0
      %v3026 = vmax.f32 %v2613, 0.0
      %v3027 = vmax.f32 %v2684, 0.0
      %v3028 = vmax.f32 %v2686, 0.0
      %v3029 = vmax.f32 %v2757, 0.0
      %v3030 = vmax.f32 %v2759, 0.0
      %v3031 = vmax.f32 %v2830, 0.0
      %v3032 = vmax.f32 %v2832, 0.0
      %v3033 = vmax.f32 %v2903, 0.0
      %v3034 = vmax.f32 %v2905, 0.0
      %v3035 = vld [vmem:[%s5] sm:$0x1]
      %v3036 = vpack.c.bf16 %v2923, %v2907
      %v3037 = vpack.c.bf16 %v2924, %v2908
      %v3038 = vpack.c.bf16 %v2925, %v2909
      %v3039 = vpack.c.bf16 %v2926, %v2910
      %v3040 = vpack.c.bf16 %v2927, %v2911
      %v3041 = vpack.c.bf16 %v2928, %v2912
      %v3042 = vpack.c.bf16 %v2929, %v2913
      %v3043 = vpack.c.bf16 %v2930, %v2914
      %v3044 = vpack.c.bf16 %v2931, %v2915
      %v3045 = vpack.c.bf16 %v2932, %v2916
      %v3046 = vpack.c.bf16 %v2933, %v2917
      %v3047 = vpack.c.bf16 %v2934, %v2918
      %v3048 = vpack.c.bf16 %v2935, %v2919
      %v3049 = vpack.c.bf16 %v2936, %v2920
      %v3050 = vpack.c.bf16 %v2937, %v2921
      %v3051 = vpack.c.bf16 %v2938, %v2922
      %v3052 = vpack.c.bf16 %v2955, %v2939
      %v3053 = vpack.c.bf16 %v2956, %v2940
      %v3054 = vpack.c.bf16 %v2957, %v2941
      %v3055 = vpack.c.bf16 %v2958, %v2942
      %v3056 = vpack.c.bf16 %v2959, %v2943
      %v3057 = vpack.c.bf16 %v2960, %v2944
      %v3058 = vpack.c.bf16 %v2961, %v2945
      %v3059 = vpack.c.bf16 %v2962, %v2946
      %v3060 = vpack.c.bf16 %v2963, %v2947
      %v3061 = vpack.c.bf16 %v2964, %v2948
      %v3062 = vpack.c.bf16 %v2965, %v2949
      %v3063 = vpack.c.bf16 %v2966, %v2950
      %v3064 = vpack.c.bf16 %v2967, %v2951
      %v3065 = vpack.c.bf16 %v2968, %v2952
      %v3066 = vpack.c.bf16 %v2969, %v2953
      %v3067 = vpack.c.bf16 %v2970, %v2954
      %v3068 = vpack.c.bf16 %v2987, %v2971
      %v3069 = vpack.c.bf16 %v2988, %v2972
      %v3070 = vpack.c.bf16 %v2989, %v2973
      %v3071 = vpack.c.bf16 %v2990, %v2974
      %v3072 = vpack.c.bf16 %v2991, %v2975
      %v3073 = vpack.c.bf16 %v2992, %v2976
      %v3074 = vpack.c.bf16 %v2993, %v2977
      %v3075 = vpack.c.bf16 %v2994, %v2978
      %v3076 = vpack.c.bf16 %v2995, %v2979
      %v3077 = vpack.c.bf16 %v2996, %v2980
      %v3078 = vpack.c.bf16 %v2997, %v2981
      %v3079 = vpack.c.bf16 %v2998, %v2982
      %v3080 = vpack.c.bf16 %v2999, %v2983
      %v3081 = vpack.c.bf16 %v3000, %v2984
      %v3082 = vpack.c.bf16 %v3001, %v2985
      %v3083 = vpack.c.bf16 %v3002, %v2986
      %v3084 = vpack.c.bf16 %v3019, %v3003
      %v3085 = vpack.c.bf16 %v3020, %v3004
      %v3086 = vpack.c.bf16 %v3021, %v3005
      %v3087 = vpack.c.bf16 %v3022, %v3006
      %v3088 = vpack.c.bf16 %v3023, %v3007
      %v3089 = vpack.c.bf16 %v3024, %v3008
      %v3090 = vpack.c.bf16 %v3025, %v3009
      %v3091 = vpack.c.bf16 %v3026, %v3010
      %v3092 = vpack.c.bf16 %v3027, %v3011
      %v3093 = vpack.c.bf16 %v3028, %v3012
      %v3094 = vpack.c.bf16 %v3029, %v3013
      %v3095 = vpack.c.bf16 %v3030, %v3014
      %v3096 = vpack.c.bf16 %v3031, %v3015
      %v3097 = vpack.c.bf16 %v3032, %v3016
      %v3098 = vpack.c.bf16 %v3033, %v3017
      %v3099 = vpack.c.bf16 %v3034, %v3018
      %v3100 = vld [vmem:[%s6] sm:$0x3]
      %3102 = vset.pattern.permute.xlu0 0
      %3103 = vperm.xlu0 %3102, %v3100
      %v3104 = vpop.permute.xlu0 %3103
      %vm3106 = vcmask 523264
      %v3108 = vsel %vm3106, %v3035, 0
      %3110 = vmatprep.subr.bf16.mxu0 %v3037
      %3111 = vmatpush1.bf16.msra.mxu0 %v3036
      %3112 = vmatprep.subr.bf16.mxu0 %v3053
      %3113 = vmatpush1.bf16.msra.mxu0 %v3052
      %3114 = vmatprep.subr.bf16.mxu0 %v3069
      %3115 = vmatpush1.bf16.msra.mxu0 %v3068
      %3116 = vmatprep.subr.bf16.mxu0 %v3085
      %3117 = vmatpush1.bf16.msra.mxu0 %v3084
      %3118 = vmatprep.subr.bf16.mxu0 0
      %3119 = vmatpush1.bf16.msra.mxu0 0
      %3120 = vmatprep.subr.bf16.mxu0 0
      %3121 = vmatpush1.bf16.msra.mxu0 0
      %3122 = vmatprep.subr.bf16.mxu0 0
      %3123 = vmatpush1.bf16.msra.mxu0 0
      %3124 = vmatprep.subr.bf16.mxu0 0
      %3125 = vmatpush1.bf16.msra.mxu0 0
      %3126 = vmatprep.subr.bf16.mxu0 0
      %3127 = vmatpush1.bf16.msra.mxu0 0
      %3128 = vmatprep.subr.bf16.mxu0 0
      %3129 = vmatpush1.bf16.msra.mxu0 0
      %3130 = vmatprep.subr.bf16.mxu0 0
      %3131 = vmatpush1.bf16.msra.mxu0 0
      %3132 = vmatprep.subr.bf16.mxu0 0
      %3133 = vmatpush1.bf16.msra.mxu0 0
      %3134 = vmatprep.subr.bf16.mxu0 0
      %3135 = vmatpush1.bf16.msra.mxu0 0
      %3136 = vmatprep.subr.bf16.mxu0 0
      %3137 = vmatpush1.bf16.msra.mxu0 0
      %3138 = vmatprep.subr.bf16.mxu0 0
      %3139 = vmatpush1.bf16.msra.mxu0 0
      %3140 = vmatprep.subr.bf16.mxu0 0
      %3141 = vmatpush1.bf16.msra.mxu0 0
      %3142 = vmatprep.mubr.bf16.mxu0 0
      %3143 = vmatmul.mubr.bf16.gmra.mrb[0].mxu0 %v3108
      %v3144 = vpop.f32.mrb[0].mxu0
      %v3145 = vadd.f32 %v3104, %v3144
      %v3146 = vpop.f32.mrb[0].mxu0
      %v3147 = vadd.f32 %v3104, %v3146
      %v3148 = vpop.f32.mrb[0].mxu0
      %v3149 = vpop.f32.mrb[0].mxu0
      %3150 = vdwg.mxu0
      %3151 = vmatprep.subr.bf16.mxu0 %v3039
      %3152 = vmatpush1.bf16.msra.mxu0 %v3038
      %3153 = vmatprep.subr.bf16.mxu0 %v3055
      %3154 = vmatpush1.bf16.msra.mxu0 %v3054
      %3155 = vmatprep.subr.bf16.mxu0 %v3071
      %3156 = vmatpush1.bf16.msra.mxu0 %v3070
      %3157 = vmatprep.subr.bf16.mxu0 %v3087
      %3158 = vmatpush1.bf16.msra.mxu0 %v3086
      %3159 = vmatprep.subr.bf16.mxu0 0
      %3160 = vmatpush1.bf16.msra.mxu0 0
      %3161 = vmatprep.subr.bf16.mxu0 0
      %3162 = vmatpush1.bf16.msra.mxu0 0
      %3163 = vmatprep.subr.bf16.mxu0 0
      %3164 = vmatpush1.bf16.msra.mxu0 0
      %3165 = vmatprep.subr.bf16.mxu0 0
      %3166 = vmatpush1.bf16.msra.mxu0 0
      %3167 = vmatprep.subr.bf16.mxu0 0
      %3168 = vmatpush1.bf16.msra.mxu0 0
      %3169 = vmatprep.subr.bf16.mxu0 0
      %3170 = vmatpush1.bf16.msra.mxu0 0
      %3171 = vmatprep.subr.bf16.mxu0 0
      %3172 = vmatpush1.bf16.msra.mxu0 0
      %3173 = vmatprep.subr.bf16.mxu0 0
      %3174 = vmatpush1.bf16.msra.mxu0 0
      %3175 = vmatprep.subr.bf16.mxu0 0
      %3176 = vmatpush1.bf16.msra.mxu0 0
      %3177 = vmatprep.subr.bf16.mxu0 0
      %3178 = vmatpush1.bf16.msra.mxu0 0
      %3179 = vmatprep.subr.bf16.mxu0 0
      %3180 = vmatpush1.bf16.msra.mxu0 0
      %3181 = vmatprep.subr.bf16.mxu0 0
      %3182 = vmatpush1.bf16.msra.mxu0 0
      %3183 = vmatprep.mubr.bf16.mxu0 0
      %3184 = vmatmul.mubr.bf16.gmra.mrb[0].mxu0 %v3108
      %v3185 = vpop.f32.mrb[0].mxu0
      %v3186 = vadd.f32 %v3104, %v3185
      %v3187 = vpop.f32.mrb[0].mxu0
      %v3188 = vadd.f32 %v3104, %v3187
      %v3189 = vpop.f32.mrb[0].mxu0
      %v3190 = vpop.f32.mrb[0].mxu0
      %3191 = vdwg.mxu0
      %3192 = vmatprep.subr.bf16.mxu0 %v3041
      %3193 = vmatpush1.bf16.msra.mxu0 %v3040
      %3194 = vmatprep.subr.bf16.mxu0 %v3057
      %3195 = vmatpush1.bf16.msra.mxu0 %v3056
      %3196 = vmatprep.subr.bf16.mxu0 %v3073
      %3197 = vmatpush1.bf16.msra.mxu0 %v3072
      %3198 = vmatprep.subr.bf16.mxu0 %v3089
      %3199 = vmatpush1.bf16.msra.mxu0 %v3088
      %3200 = vmatprep.subr.bf16.mxu0 0
      %3201 = vmatpush1.bf16.msra.mxu0 0
      %3202 = vmatprep.subr.bf16.mxu0 0
      %3203 = vmatpush1.bf16.msra.mxu0 0
      %3204 = vmatprep.subr.bf16.mxu0 0
      %3205 = vmatpush1.bf16.msra.mxu0 0
      %3206 = vmatprep.subr.bf16.mxu0 0
      %3207 = vmatpush1.bf16.msra.mxu0 0
      %3208 = vmatprep.subr.bf16.mxu0 0
      %3209 = vmatpush1.bf16.msra.mxu0 0
      %3210 = vmatprep.subr.bf16.mxu0 0
      %3211 = vmatpush1.bf16.msra.mxu0 0
      %3212 = vmatprep.subr.bf16.mxu0 0
      %3213 = vmatpush1.bf16.msra.mxu0 0
      %3214 = vmatprep.subr.bf16.mxu0 0
      %3215 = vmatpush1.bf16.msra.mxu0 0
      %3216 = vmatprep.subr.bf16.mxu0 0
      %3217 = vmatpush1.bf16.msra.mxu0 0
      %3218 = vmatprep.subr.bf16.mxu0 0
      %3219 = vmatpush1.bf16.msra.mxu0 0
      %3220 = vmatprep.subr.bf16.mxu0 0
      %3221 = vmatpush1.bf16.msra.mxu0 0
      %3222 = vmatprep.subr.bf16.mxu0 0
      %3223 = vmatpush1.bf16.msra.mxu0 0
      %3224 = vmatprep.mubr.bf16.mxu0 0
      %3225 = vmatmul.mubr.bf16.gmra.mrb[0].mxu0 %v3108
      %v3226 = vpop.f32.mrb[0].mxu0
      %v3227 = vadd.f32 %v3104, %v3226
      %v3228 = vpop.f32.mrb[0].mxu0
      %v3229 = vadd.f32 %v3104, %v3228
      %v3230 = vpop.f32.mrb[0].mxu0
      %v3231 = vpop.f32.mrb[0].mxu0
      %3232 = vdwg.mxu0
      %3233 = vmatprep.subr.bf16.mxu0 %v3043
      %3234 = vmatpush1.bf16.msra.mxu0 %v3042
      %3235 = vmatprep.subr.bf16.mxu0 %v3059
      %3236 = vmatpush1.bf16.msra.mxu0 %v3058
      %3237 = vmatprep.subr.bf16.mxu0 %v3075
      %3238 = vmatpush1.bf16.msra.mxu0 %v3074
      %3239 = vmatprep.subr.bf16.mxu0 %v3091
      %3240 = vmatpush1.bf16.msra.mxu0 %v3090
      %3241 = vmatprep.subr.bf16.mxu0 0
      %3242 = vmatpush1.bf16.msra.mxu0 0
      %3243 = vmatprep.subr.bf16.mxu0 0
      %3244 = vmatpush1.bf16.msra.mxu0 0
      %3245 = vmatprep.subr.bf16.mxu0 0
      %3246 = vmatpush1.bf16.msra.mxu0 0
      %3247 = vmatprep.subr.bf16.mxu0 0
      %3248 = vmatpush1.bf16.msra.mxu0 0
      %3249 = vmatprep.subr.bf16.mxu0 0
      %3250 = vmatpush1.bf16.msra.mxu0 0
      %3251 = vmatprep.subr.bf16.mxu0 0
      %3252 = vmatpush1.bf16.msra.mxu0 0
      %3253 = vmatprep.subr.bf16.mxu0 0
      %3254 = vmatpush1.bf16.msra.mxu0 0
      %3255 = vmatprep.subr.bf16.mxu0 0
      %3256 = vmatpush1.bf16.msra.mxu0 0
      %3257 = vmatprep.subr.bf16.mxu0 0
      %3258 = vmatpush1.bf16.msra.mxu0 0
      %3259 = vmatprep.subr.bf16.mxu0 0
      %3260 = vmatpush1.bf16.msra.mxu0 0
      %3261 = vmatprep.subr.bf16.mxu0 0
      %3262 = vmatpush1.bf16.msra.mxu0 0
      %3263 = vmatprep.subr.bf16.mxu0 0
      %3264 = vmatpush1.bf16.msra.mxu0 0
      %3265 = vmatprep.mubr.bf16.mxu0 0
      %3266 = vmatmul.mubr.bf16.gmra.mrb[0].mxu0 %v3108
      %v3267 = vpop.f32.mrb[0].mxu0
      %v3268 = vadd.f32 %v3104, %v3267
      %v3269 = vpop.f32.mrb[0].mxu0
      %v3270 = vadd.f32 %v3104, %v3269
      %v3271 = vpop.f32.mrb[0].mxu0
      %v3272 = vpop.f32.mrb[0].mxu0
      %3273 = vdwg.mxu0
      %3274 = vmatprep.subr.bf16.mxu0 %v3045
      %3275 = vmatpush1.bf16.msra.mxu0 %v3044
      %3276 = vmatprep.subr.bf16.mxu0 %v3061
      %3277 = vmatpush1.bf16.msra.mxu0 %v3060
      %3278 = vmatprep.subr.bf16.mxu0 %v3077
      %3279 = vmatpush1.bf16.msra.mxu0 %v3076
      %3280 = vmatprep.subr.bf16.mxu0 %v3093
      %3281 = vmatpush1.bf16.msra.mxu0 %v3092
      %3282 = vmatprep.subr.bf16.mxu0 0
      %3283 = vmatpush1.bf16.msra.mxu0 0
      %3284 = vmatprep.subr.bf16.mxu0 0
      %3285 = vmatpush1.bf16.msra.mxu0 0
      %3286 = vmatprep.subr.bf16.mxu0 0
      %3287 = vmatpush1.bf16.msra.mxu0 0
      %3288 = vmatprep.subr.bf16.mxu0 0
      %3289 = vmatpush1.bf16.msra.mxu0 0
      %3290 = vmatprep.subr.bf16.mxu0 0
      %3291 = vmatpush1.bf16.msra.mxu0 0
      %3292 = vmatprep.subr.bf16.mxu0 0
      %3293 = vmatpush1.bf16.msra.mxu0 0
      %3294 = vmatprep.subr.bf16.mxu0 0
      %3295 = vmatpush1.bf16.msra.mxu0 0
      %3296 = vmatprep.subr.bf16.mxu0 0
      %3297 = vmatpush1.bf16.msra.mxu0 0
      %3298 = vmatprep.subr.bf16.mxu0 0
      %3299 = vmatpush1.bf16.msra.mxu0 0
      %3300 = vmatprep.subr.bf16.mxu0 0
      %3301 = vmatpush1.bf16.msra.mxu0 0
      %3302 = vmatprep.subr.bf16.mxu0 0
      %3303 = vmatpush1.bf16.msra.mxu0 0
      %3304 = vmatprep.subr.bf16.mxu0 0
      %3305 = vmatpush1.bf16.msra.mxu0 0
      %3306 = vmatprep.mubr.bf16.mxu0 0
      %3307 = vmatmul.mubr.bf16.gmra.mrb[0].mxu0 %v3108
      %v3308 = vpop.f32.mrb[0].mxu0
      %v3309 = vadd.f32 %v3104, %v3308
      %v3310 = vpop.f32.mrb[0].mxu0
      %v3311 = vadd.f32 %v3104, %v3310
      %v3312 = vpop.f32.mrb[0].mxu0
      %v3313 = vpop.f32.mrb[0].mxu0
      %3314 = vdwg.mxu0
      %3315 = vmatprep.subr.bf16.mxu0 %v3047
      %3316 = vmatpush1.bf16.msra.mxu0 %v3046
      %3317 = vmatprep.subr.bf16.mxu0 %v3063
      %3318 = vmatpush1.bf16.msra.mxu0 %v3062
      %3319 = vmatprep.subr.bf16.mxu0 %v3079
      %3320 = vmatpush1.bf16.msra.mxu0 %v3078
      %3321 = vmatprep.subr.bf16.mxu0 %v3095
      %3322 = vmatpush1.bf16.msra.mxu0 %v3094
      %3323 = vmatprep.subr.bf16.mxu0 0
      %3324 = vmatpush1.bf16.msra.mxu0 0
      %3325 = vmatprep.subr.bf16.mxu0 0
      %3326 = vmatpush1.bf16.msra.mxu0 0
      %3327 = vmatprep.subr.bf16.mxu0 0
      %3328 = vmatpush1.bf16.msra.mxu0 0
      %3329 = vmatprep.subr.bf16.mxu0 0
      %3330 = vmatpush1.bf16.msra.mxu0 0
      %3331 = vmatprep.subr.bf16.mxu0 0
      %3332 = vmatpush1.bf16.msra.mxu0 0
      %3333 = vmatprep.subr.bf16.mxu0 0
      %3334 = vmatpush1.bf16.msra.mxu0 0
      %3335 = vmatprep.subr.bf16.mxu0 0
      %3336 = vmatpush1.bf16.msra.mxu0 0
      %3337 = vmatprep.subr.bf16.mxu0 0
      %3338 = vmatpush1.bf16.msra.mxu0 0
      %3339 = vmatprep.subr.bf16.mxu0 0
      %3340 = vmatpush1.bf16.msra.mxu0 0
      %3341 = vmatprep.subr.bf16.mxu0 0
      %3342 = vmatpush1.bf16.msra.mxu0 0
      %3343 = vmatprep.subr.bf16.mxu0 0
      %3344 = vmatpush1.bf16.msra.mxu0 0
      %3345 = vmatprep.subr.bf16.mxu0 0
      %3346 = vmatpush1.bf16.msra.mxu0 0
      %3347 = vmatprep.mubr.bf16.mxu0 0
      %3348 = vmatmul.mubr.bf16.gmra.mrb[0].mxu0 %v3108
      %v3349 = vpop.f32.mrb[0].mxu0
      %v3350 = vadd.f32 %v3104, %v3349
      %v3351 = vpop.f32.mrb[0].mxu0
      %v3352 = vadd.f32 %v3104, %v3351
      %v3353 = vpop.f32.mrb[0].mxu0
      %v3354 = vpop.f32.mrb[0].mxu0
      %3355 = vdwg.mxu0
      %3356 = vmatprep.subr.bf16.mxu0 %v3049
      %3357 = vmatpush1.bf16.msra.mxu0 %v3048
      %3358 = vmatprep.subr.bf16.mxu0 %v3065
      %3359 = vmatpush1.bf16.msra.mxu0 %v3064
      %3360 = vmatprep.subr.bf16.mxu0 %v3081
      %3361 = vmatpush1.bf16.msra.mxu0 %v3080
      %3362 = vmatprep.subr.bf16.mxu0 %v3097
      %3363 = vmatpush1.bf16.msra.mxu0 %v3096
      %3364 = vmatprep.subr.bf16.mxu0 0
      %3365 = vmatpush1.bf16.msra.mxu0 0
      %3366 = vmatprep.subr.bf16.mxu0 0
      %3367 = vmatpush1.bf16.msra.mxu0 0
      %3368 = vmatprep.subr.bf16.mxu0 0
      %3369 = vmatpush1.bf16.msra.mxu0 0
      %3370 = vmatprep.subr.bf16.mxu0 0
      %3371 = vmatpush1.bf16.msra.mxu0 0
      %3372 = vmatprep.subr.bf16.mxu0 0
      %3373 = vmatpush1.bf16.msra.mxu0 0
      %3374 = vmatprep.subr.bf16.mxu0 0
      %3375 = vmatpush1.bf16.msra.mxu0 0
      %3376 = vmatprep.subr.bf16.mxu0 0
      %3377 = vmatpush1.bf16.msra.mxu0 0
      %3378 = vmatprep.subr.bf16.mxu0 0
      %3379 = vmatpush1.bf16.msra.mxu0 0
      %3380 = vmatprep.subr.bf16.mxu0 0
      %3381 = vmatpush1.bf16.msra.mxu0 0
      %3382 = vmatprep.subr.bf16.mxu0 0
      %3383 = vmatpush1.bf16.msra.mxu0 0
      %3384 = vmatprep.subr.bf16.mxu0 0
      %3385 = vmatpush1.bf16.msra.mxu0 0
      %3386 = vmatprep.subr.bf16.mxu0 0
      %3387 = vmatpush1.bf16.msra.mxu0 0
      %3388 = vmatprep.mubr.bf16.mxu0 0
      %3389 = vmatmul.mubr.bf16.gmra.mrb[0].mxu0 %v3108
      %v3390 = vpop.f32.mrb[0].mxu0
      %v3391 = vadd.f32 %v3104, %v3390
      %v3392 = vpop.f32.mrb[0].mxu0
      %v3393 = vadd.f32 %v3104, %v3392
      %v3394 = vpop.f32.mrb[0].mxu0
      %v3395 = vpop.f32.mrb[0].mxu0
      %3396 = vdwg.mxu0
      %3397 = vmatprep.subr.bf16.mxu0 %v3051
      %3398 = vmatpush1.bf16.msra.mxu0 %v3050
      %3399 = vmatprep.subr.bf16.mxu0 %v3067
      %3400 = vmatpush1.bf16.msra.mxu0 %v3066
      %3401 = vmatprep.subr.bf16.mxu0 %v3083
      %3402 = vmatpush1.bf16.msra.mxu0 %v3082
      %3403 = vmatprep.subr.bf16.mxu0 %v3099
      %3404 = vmatpush1.bf16.msra.mxu0 %v3098
      %3405 = vmatprep.subr.bf16.mxu0 0
      %3406 = vmatpush1.bf16.msra.mxu0 0
      %3407 = vmatprep.subr.bf16.mxu0 0
      %3408 = vmatpush1.bf16.msra.mxu0 0
      %3409 = vmatprep.subr.bf16.mxu0 0
      %3410 = vmatpush1.bf16.msra.mxu0 0
      %3411 = vmatprep.subr.bf16.mxu0 0
      %3412 = vmatpush1.bf16.msra.mxu0 0
      %3413 = vmatprep.subr.bf16.mxu0 0
      %3414 = vmatpush1.bf16.msra.mxu0 0
      %3415 = vmatprep.subr.bf16.mxu0 0
      %3416 = vmatpush1.bf16.msra.mxu0 0
      %3417 = vmatprep.subr.bf16.mxu0 0
      %3418 = vmatpush1.bf16.msra.mxu0 0
      %3419 = vmatprep.subr.bf16.mxu0 0
      %3420 = vmatpush1.bf16.msra.mxu0 0
      %3421 = vmatprep.subr.bf16.mxu0 0
      %3422 = vmatpush1.bf16.msra.mxu0 0
      %3423 = vmatprep.subr.bf16.mxu0 0
      %3424 = vmatpush1.bf16.msra.mxu0 0
      %3425 = vmatprep.subr.bf16.mxu0 0
      %3426 = vmatpush1.bf16.msra.mxu0 0
      %3427 = vmatprep.subr.bf16.mxu0 0
      %3428 = vmatpush1.bf16.msra.mxu0 0
      %3429 = vmatprep.mubr.bf16.mxu0 0
      %3430 = vmatmul.mubr.bf16.gmra.mrb[0].mxu0 %v3108
      %v3431 = vpop.f32.mrb[0].mxu0
      %v3432 = vadd.f32 %v3104, %v3431
      %v3433 = vpop.f32.mrb[0].mxu0
      %v3434 = vadd.f32 %v3104, %v3433
      %v3435 = vpop.f32.mrb[0].mxu0
      %v3436 = vpop.f32.mrb[0].mxu0
      %3437 = vdwg.mxu0
      %v3454 = vcombine.low %v3145, %v3147
      %v3455 = vcombine.low %v3186, %v3188
      %v3457 = vunpack.c.l.s4 1983009808
      %v3458 = vunpack.c.0.s8 %v3457
      %v3459 = vlaneseq
      %v3460 = vshrl.u32 %v3459, 7
      %v3461 = vsub.s32 %v3458, %v3460
      %v3462 = vrot.slane %v3454, %v3461
      %v3464 = vunpack.c.l.s4 1983009808
      %v3465 = vunpack.c.0.s8 %v3464
      %v3466 = vlaneseq
      %v3467 = vshrl.u32 %v3466, 7
      %v3468 = vsub.s32 %v3465, %v3467
      %v3469 = vrot.slane %v3455, %v3468
      %v3470 = vcombine.low %v3462, %v3469
      %v3471 = vcombine.low %v3227, %v3229
      %v3472 = vcombine.low %v3268, %v3270
      %v3474 = vunpack.c.l.s4 1983009808
      %v3475 = vunpack.c.0.s8 %v3474
      %v3476 = vlaneseq
      %v3477 = vshrl.u32 %v3476, 7
      %v3478 = vsub.s32 %v3475, %v3477
      %v3479 = vrot.slane %v3471, %v3478
      %v3481 = vunpack.c.l.s4 1983009808
      %v3482 = vunpack.c.0.s8 %v3481
      %v3483 = vlaneseq
      %v3484 = vshrl.u32 %v3483, 7
      %v3485 = vsub.s32 %v3482, %v3484
      %v3486 = vrot.slane %v3472, %v3485
      %v3487 = vcombine.low %v3479, %v3486
      %v3488 = vcombine.low %v3309, %v3311
      %v3489 = vcombine.low %v3350, %v3352
      %v3491 = vunpack.c.l.s4 1983009808
      %v3492 = vunpack.c.0.s8 %v3491
      %v3493 = vlaneseq
      %v3494 = vshrl.u32 %v3493, 7
      %v3495 = vsub.s32 %v3492, %v3494
      %v3496 = vrot.slane %v3488, %v3495
      %v3498 = vunpack.c.l.s4 1983009808
      %v3499 = vunpack.c.0.s8 %v3498
      %v3500 = vlaneseq
      %v3501 = vshrl.u32 %v3500, 7
      %v3502 = vsub.s32 %v3499, %v3501
      %v3503 = vrot.slane %v3489, %v3502
      %v3504 = vcombine.low %v3496, %v3503
      %v3505 = vcombine.low %v3391, %v3393
      %v3506 = vcombine.low %v3432, %v3434
      %v3508 = vunpack.c.l.s4 1983009808
      %v3509 = vunpack.c.0.s8 %v3508
      %v3510 = vlaneseq
      %v3511 = vshrl.u32 %v3510, 7
      %v3512 = vsub.s32 %v3509, %v3511
      %v3513 = vrot.slane %v3505, %v3512
      %v3515 = vunpack.c.l.s4 1983009808
      %v3516 = vunpack.c.0.s8 %v3515
      %v3517 = vlaneseq
      %v3518 = vshrl.u32 %v3517, 7
      %v3519 = vsub.s32 %v3516, %v3518
      %v3520 = vrot.slane %v3506, %v3519
      %v3521 = vcombine.low %v3513, %v3520
      %3526 = vst [vmem:[%s280] sm:$0xff] %v3470
      %3527 = vst [vmem:[%s280 + $0x8] sm:$0xff] %v3487
      %3528 = vst [vmem:[%s280 + $0x10] sm:$0xff] %v3504
      %3529 = vst [vmem:[%s280 + $0x18] sm:$0xff] %v3521
      %s3530 = smul.u32 16, %s18
      %p3531 = scmp.lt.s32.totalorder %s3530, 47
      %s3532 = scalar_select %p3531, %s3530, 47
      %s3533 = smul.addr %s3532, 2
      %s3534 = scalar_lea.vmem %s7, %s3533
      // Predicated region
      $region49: #{colornn_forward.1} parent=47 // pred_check
        %p3535 = pneg %p188
      $region50: #{colornn_forward.1} parent=47 // pred_check_branch
        %3537 = sbr.rel (%p3535) target = $region52
      $region51: #{colornn_forward.1} parent=47 // pred_region
        %s3538 = smul.u32 16, %s18
      $region52: #{colornn_forward.1} parent=47 // pred_fallthru
        _
    $region48: #{colornn_forward.1} parent=5 // pred_fallthru
      _
    %p3539 = scmp.le.s32.totalorder 2, %s13
    // Predicated region
    $region53: #{colornn_forward.1} parent=5 // pred_check
      %p3540 = pneg %p3539
    $region54: #{colornn_forward.1} parent=5 // pred_check_branch
      %3542 = sbr.rel (%p3540) target = $region56
    $region55: #{colornn_forward.1} parent=5 // pred_region
      %s3543 = ssub.s32 %s13, 2
      // Predicated region
      $region57: #{colornn_forward.1} parent=55 // pred_check
        %p3544 = pneg %p194
      $region58: #{colornn_forward.1} parent=55 // pred_check_branch
        %3546 = sbr.rel (%p3544) target = $region60
      $region59: #{colornn_forward.1} parent=55 // pred_region
        %s3547 = smul.u32 16, %s19
        %p3548 = scmp.lt.s32.totalorder %s3547, 47
        %s3549 = scalar_select %p3548, %s3547, 47
        %s3550 = smul.addr %s3549, 2
        %s3551 = scalar_lea.vmem %s7, %s3550
      $region60: #{colornn_forward.1} parent=55 // pred_fallthru
        _
    $region56: #{colornn_forward.1} parent=5 // pred_fallthru
      _
  $region6: #{colornn_forward.1} parent=0 // loop_footer
    %s17 = sadd.s32 1, %s13
  $region7: #{colornn_forward.1} parent=0 // loop_footer_branch
    %12 = sbr.rel target = $region3
  $region8: #{colornn_forward.1} parent=0 // loop_exit
    _

</llo_original>
